<compile_context>
chip_gen: v7x
topology: tpu7x:2x2x1
jax: 0.10.0
libtpu: 0.0.40
codegen_flags: <defaults>
</compile_context>

<pallas_src>
import math
import functools

import jax
import jax.numpy as jnp
from jax import lax
from jax.experimental import pallas as pl
from jax.experimental.pallas import tpu as pltpu

LN_EPS = 1e-5
NEG_INF = -1e30
VMEM_LIMIT_BYTES = 48 * 1024 * 1024


def _layernorm(x, gamma, beta):
    # f32 statistics
    mu = jnp.mean(x, axis=-1, keepdims=True)
    var = jnp.mean((x - mu) ** 2, axis=-1, keepdims=True)
    return (x - mu) * lax.rsqrt(var + LN_EPS) * gamma + beta


# ----------------------------- Kernel 1: LN1 + QKV -----------------------------
def ln_qkv_kernel(x_ref, g1_ref, b1_ref, wq_ref, wk_ref, wv_ref,
                  q_ref, k_ref, v_ref, *, n_heads):
    x = x_ref[0]                                            # (tr, C) f32
    xn = _layernorm(x, g1_ref[0], b1_ref[0]).astype(jnp.bfloat16)
    # Per-head weights (H, C, d_head): outputs are written head-major directly,
    # no (T,H,d)<->(H,T,d) transpose anywhere.
    for h in range(n_heads):
        q_ref[0, h] = jnp.dot(xn, wq_ref[h],
                              preferred_element_type=jnp.float32).astype(q_ref.dtype)
        k_ref[0, h] = jnp.dot(xn, wk_ref[h],
                              preferred_element_type=jnp.float32).astype(k_ref.dtype)
        v_ref[0, h] = jnp.dot(xn, wv_ref[h],
                              preferred_element_type=jnp.float32).astype(v_ref.dtype)


# ----------------------- Kernel 2: flash causal attention ----------------------
def flash_attn_kernel(q_ref, k_ref, v_ref, o_ref, m_sc, l_sc, acc_sc, *, tq, tkv):
    qi = pl.program_id(2)
    ki = pl.program_id(3)

    @pl.when(ki == 0)
    def _():
        m_sc[...] = jnp.full_like(m_sc, -jnp.inf)
        l_sc[...] = jnp.zeros_like(l_sc)
        acc_sc[...] = jnp.zeros_like(acc_sc)

    def _step(apply_mask):
        q = q_ref[0, 0]                                     # (tq, d) bf16, already scaled
        k = k_ref[0, 0]                                     # (tkv, d) bf16
        v = v_ref[0, 0]                                     # (tkv, d) bf16
        s = lax.dot_general(q, k, (((1,), (1,)), ((), ())),
                            preferred_element_type=jnp.float32)   # (tq, tkv) f32
        if apply_mask:  # only the diagonal tile builds/applies the causal mask
            row = qi * tq + lax.broadcasted_iota(jnp.int32, s.shape, 0)
            col = ki * tkv + lax.broadcasted_iota(jnp.int32, s.shape, 1)
            s = jnp.where(row >= col, s, jnp.float32(NEG_INF))
        m_prev = m_sc[...]
        m_new = jnp.maximum(m_prev, jnp.max(s, axis=-1, keepdims=True))
        alpha = jnp.exp(m_prev - m_new)
        p = jnp.exp(s - m_new)                               # unnormalized probabilities
        l_sc[...] = alpha * l_sc[...] + jnp.sum(p, axis=-1, keepdims=True)
        acc_sc[...] = alpha * acc_sc[...] + jnp.dot(
            p.astype(jnp.bfloat16), v, preferred_element_type=jnp.float32)
        m_sc[...] = m_new

    # tq == tkv: tiles with ki > qi are fully masked -> skipped entirely (no MXU work).
    @pl.when(ki < qi)        # fully visible tile, no mask math
    def _():
        _step(apply_mask=False)

    @pl.when(ki == qi)       # diagonal tile, apply causal mask
    def _():
        _step(apply_mask=True)

    @pl.when(ki == pl.num_programs(3) - 1)
    def _():
        # Deferred normalization: one multiply over (tq, d_head); reciprocal on the EUP.
        o_ref[0, 0] = (acc_sc[...] *
                       pl.reciprocal(l_sc[...], approx=True)).astype(o_ref.dtype)


# ------------------- Kernel 3: attn proj + residual + LN2 + MLP ----------------
def proj_mlp_kernel(x_ref, y_ref, wp_ref, bp_ref, g2_ref, b2_ref,
                    wfc_ref, bfc_ref, wmlp_ref, bmlp_ref, o_ref, *, n_heads):
    x = x_ref[0]                                            # (tr, C) f32 residual stream

    # Attention output projection: per-head accumulate keeps the head-major layout
    # (no concat/transpose); Wproj pre-laid out as (H, d_head, C).
    attn = jnp.dot(y_ref[0, 0], wp_ref[0], preferred_element_type=jnp.float32)
    for h in range(1, n_heads):
        attn = attn + jnp.dot(y_ref[0, h], wp_ref[h],
                              preferred_element_type=jnp.float32)
    x1 = x + attn + bp_ref[0]                               # residual in f32

    xn2 = _layernorm(x1, g2_ref[0], b2_ref[0]).astype(jnp.bfloat16)
    hmid = jnp.dot(xn2, wfc_ref[...],
                   preferred_element_type=jnp.float32) + bfc_ref[0]   # (tr, 4C) f32
    # exact (erf-based) GELU, matching torch.nn.GELU() default, in f32
    hmid = 0.5 * hmid * (1.0 + lax.erf(hmid * jnp.float32(1.0 / math.sqrt(2.0))))
    mlp = jnp.dot(hmid.astype(jnp.bfloat16), wmlp_ref[...],
                  preferred_element_type=jnp.float32) + bmlp_ref[0]
    o_ref[0] = x1 + mlp


# --------------------------------- wrapper -------------------------------------
def decoder_layer_pallas(x, params, *, d_model, n_heads, t_tile=256,
                         single_buffer_weights=True):
    B, T, C = x.shape
    assert C == d_model and d_model % n_heads == 0
    d_head = d_model // n_heads
    bf16 = jnp.bfloat16

    tr = min(t_tile, T)           # row tile for K1 / K3
    tq = tkv = min(t_tile, T)     # flash q/kv tiles (equal -> diagonal tile is ki == qi)
    assert T % tr == 0 and T % tq == 0

    # ---- weight pre-layout (done once by XLA, outside the kernels) ----
    wq_t, wk_t, wv_t = jnp.split(params["wqkv_t"], 3, axis=1)    # (C, C) each

    def to_heads_in(w):           # (C, C) -> (H, C, d_head)
        return jnp.transpose(w.reshape(C, n_heads, d_head), (1, 0, 2))

    # fold 1/sqrt(d_head) into Wq, fused into the bf16 cast
    wq_h = to_heads_in(wq_t * jnp.float32(1.0 / math.sqrt(d_head))).astype(bf16)
    wk_h = to_heads_in(wk_t).astype(bf16)
    wv_h = to_heads_in(wv_t).astype(bf16)
    wp_h = params["wattn_proj_t"].reshape(n_heads, d_head, C).astype(bf16)
    wfc = params["wfc_t"].astype(bf16)
    wmlp = params["wmlp_proj_t"].astype(bf16)

    def wspec(shape):
        # Constant (weight/bias) input: same block every grid step.
        zeros = (0,) * len(shape)
        if single_buffer_weights:
            # second pipeline buffer is pure waste for constant inputs
            return pl.BlockSpec(shape, lambda *_: zeros, pipeline_mode=pl.Buffered(1))
        return pl.BlockSpec(shape, lambda *_: zeros)

    x_row = pl.BlockSpec((1, tr, C), lambda b, r: (b, r, 0))
    head_major_row = pl.BlockSpec((1, n_heads, tr, d_head), lambda b, r: (b, 0, r, 0))

    # ------------------------------ K1: LN1 + QKV ------------------------------
    qkv_fn = pl.pallas_call(
        functools.partial(ln_qkv_kernel, n_heads=n_heads),
        grid=(B, T // tr),
        in_specs=[x_row,
                  wspec((1, C)), wspec((1, C)),
                  wspec((n_heads, C, d_head)),
                  wspec((n_heads, C, d_head)),
                  wspec((n_heads, C, d_head))],
        out_specs=(head_major_row, head_major_row, head_major_row),
        out_shape=(jax.ShapeDtypeStruct((B, n_heads, T, d_head), bf16),) * 3,
        compiler_params=pltpu.CompilerParams(
            dimension_semantics=("parallel", "parallel"),
            vmem_limit_bytes=VMEM_LIMIT_BYTES),
    )
    q, k, v = qkv_fn(x, params["ln1_g"], params["ln1_b"], wq_h, wk_h, wv_h)

    # -------------------------- K2: flash attention ----------------------------
    qo_spec = pl.BlockSpec((1, 1, tq, d_head), lambda b, h, qi, ki: (b, h, qi, 0))
    kv_spec = pl.BlockSpec((1, 1, tkv, d_head), lambda b, h, qi, ki: (b, h, ki, 0))

    attn_fn = pl.pallas_call(
        functools.partial(flash_attn_kernel, tq=tq, tkv=tkv),
        grid=(B, n_heads, T // tq, T // tkv),
        in_specs=[qo_spec, kv_spec, kv_spec],
        out_specs=qo_spec,
        out_shape=jax.ShapeDtypeStruct((B, n_heads, T, d_head), bf16),
        scratch_shapes=[pltpu.VMEM((tq, 1), jnp.float32),       # running max m
                        pltpu.VMEM((tq, 1), jnp.float32),       # running sum l
                        pltpu.VMEM((tq, d_head), jnp.float32)], # unnormalized acc
        compiler_params=pltpu.CompilerParams(
            dimension_semantics=("parallel", "parallel", "parallel", "arbitrary"),
            vmem_limit_bytes=VMEM_LIMIT_BYTES),
    )
    y = attn_fn(q, k, v)

    # ------------------- K3: proj + residual + LN2 + MLP + residual ------------
    out_fn = pl.pallas_call(
        functools.partial(proj_mlp_kernel, n_heads=n_heads),
        grid=(B, T // tr),
        in_specs=[x_row,
                  head_major_row,
                  wspec((n_heads, d_head, C)), wspec((1, C)),
                  wspec((1, C)), wspec((1, C)),
                  wspec((C, 4 * C)), wspec((1, 4 * C)),
                  wspec((4 * C, C)), wspec((1, C))],
        out_specs=x_row,
        out_shape=jax.ShapeDtypeStruct((B, T, C), jnp.float32),
        compiler_params=pltpu.CompilerParams(
            dimension_semantics=("parallel", "parallel"),
            vmem_limit_bytes=VMEM_LIMIT_BYTES),
    )
    return out_fn(x, y, wp_h, params["battn_proj"],
                  params["ln2_g"], params["ln2_b"],
                  wfc, params["bfc"], wmlp, params["bmlp_proj"])


# ----------------- pure-JAX f32 reference (for correctness check) -----------------
def decoder_layer_ref(x, params, *, d_model, n_heads):
    d_head = d_model // n_heads
    B, T, C = x.shape

    def ln(x, g, b):
        mu = jnp.mean(x, axis=-1, keepdims=True)
        var = jnp.mean((x - mu) ** 2, axis=-1, keepdims=True)
        return (x - mu) / jnp.sqrt(var + LN_EPS) * g + b

    xn = ln(x, params["ln1_g"][0], params["ln1_b"][0])
    qkv = xn @ params["wqkv_t"]
    q, k, v = jnp.split(qkv, 3, axis=-1)
    q = q.reshape(B, T, n_heads, d_head).transpose(0, 2, 1, 3)
    k = k.reshape(B, T, n_heads, d_head).transpose(0, 2, 1, 3)
    v = v.reshape(B, T, n_heads, d_head).transpose(0, 2, 1, 3)
    s = jnp.einsum("bhtd,bhsd->bhts", q, k) / math.sqrt(d_head)
    mask = jnp.tril(jnp.ones((T, T), dtype=bool))
    s = jnp.where(mask[None, None], s, -jnp.inf)
    p = jax.nn.softmax(s, axis=-1)
    y = jnp.einsum("bhts,bhsd->bhtd", p, v)
    y = y.transpose(0, 2, 1, 3).reshape(B, T, C)
    x = x + y @ params["wattn_proj_t"] + params["battn_proj"][0]

    xn = ln(x, params["ln2_g"][0], params["ln2_b"][0])
    h = xn @ params["wfc_t"] + params["bfc"][0]
    h = 0.5 * h * (1.0 + lax.erf(h / math.sqrt(2.0)))
    x = x + h @ params["wmlp_proj_t"] + params["bmlp_proj"][0]
    return x


def init_params(key, d_model):
    ks = jax.random.split(key, 8)
    std = 0.02
    return {
        "ln1_g": jnp.ones((1, d_model), jnp.float32),
        "ln1_b": jnp.zeros((1, d_model), jnp.float32),
        "ln2_g": jnp.ones((1, d_model), jnp.float32),
        "ln2_b": jnp.zeros((1, d_model), jnp.float32),
        # stored directly as (in, out) = transpose of PyTorch's (out, in)
        "wqkv_t": std * jax.random.normal(ks[0], (d_model, 3 * d_model), jnp.float32),
        "wattn_proj_t": std * jax.random.normal(ks[1], (d_model, d_model), jnp.float32),
        "battn_proj": std * jax.random.normal(ks[2], (1, d_model), jnp.float32),
        "wfc_t": std * jax.random.normal(ks[3], (d_model, 4 * d_model), jnp.float32),
        "bfc": std * jax.random.normal(ks[4], (1, 4 * d_model), jnp.float32),
        "wmlp_proj_t": std * jax.random.normal(ks[5], (4 * d_model, d_model), jnp.float32),
        "bmlp_proj": std * jax.random.normal(ks[6], (1, d_model), jnp.float32),
    }


if __name__ == "__main__":
    B, T, d_model, n_heads = 2, 8, 32, 4   # n_ctx == T == 8 (small smoke-test shapes)

    key = jax.random.PRNGKey(0)
    kx, kp = jax.random.split(key)
    x = jax.random.normal(kx, (B, T, d_model), jnp.float32)
    params = init_params(kp, d_model)

    fwd = functools.partial(decoder_layer_pallas, d_model=d_model, n_heads=n_heads)
    try:
        out = jax.block_until_ready(fwd(x, params))
    except Exception:
        # pl.Buffered(1) single-buffering of constant weights is a newer API knob;
        # fall back to default double-buffered weight specs if unavailable.
        out = jax.block_until_ready(fwd(x, params, single_buffer_weights=False))

    ref = decoder_layer_ref(x, params, d_model=d_model, n_heads=n_heads)
    assert out.shape == (B, T, d_model)
    err = jnp.max(jnp.abs(out - ref))
    # bf16 matmuls / bf16 intermediates + approx reciprocal -> loosened tolerance
    assert jnp.allclose(out, ref, atol=2e-2, rtol=2e-2), f"max abs err {err}"

    print("KERNEL_OK")
</pallas_src>

<mosaic_0001>
module attributes {stable_mosaic.version = 11 : i64} {
  func.func @ln_qkv_kernel(%arg0: i32, %arg1: i32, %arg2: memref<1x8x32xf32, #tpu.memory_space<vmem>>, %arg3: memref<1x32xf32, #tpu.memory_space<vmem>>, %arg4: memref<1x32xf32, #tpu.memory_space<vmem>>, %arg5: memref<4x32x8xbf16, #tpu.memory_space<vmem>>, %arg6: memref<4x32x8xbf16, #tpu.memory_space<vmem>>, %arg7: memref<4x32x8xbf16, #tpu.memory_space<vmem>>, %arg8: memref<1x4x8x8xbf16, #tpu.memory_space<vmem>>, %arg9: memref<1x4x8x8xbf16, #tpu.memory_space<vmem>>, %arg10: memref<1x4x8x8xbf16, #tpu.memory_space<vmem>>) attributes {dimension_semantics = [#tpu.dimension_semantics<parallel>, #tpu.dimension_semantics<parallel>], iteration_bounds = array<i64: 2, 1>, scalar_prefetch = 0 : i64, scratch_operands = 0 : i64, tpu.core_type = #tpu.core_type<tc>, window_params = [{transform_indices = @transform_0, window_bounds = array<i64: 1, 8, 32>}, {pipeline_mode = #tpu.pipeline_mode<synchronous>, transform_indices = @transform_1, window_bounds = array<i64: 1, 32>}, {pipeline_mode = #tpu.pipeline_mode<synchronous>, transform_indices = @transform_2, window_bounds = array<i64: 1, 32>}, {pipeline_mode = #tpu.pipeline_mode<synchronous>, transform_indices = @transform_3, window_bounds = array<i64: 4, 32, 8>}, {pipeline_mode = #tpu.pipeline_mode<synchronous>, transform_indices = @transform_4, window_bounds = array<i64: 4, 32, 8>}, {pipeline_mode = #tpu.pipeline_mode<synchronous>, transform_indices = @transform_5, window_bounds = array<i64: 4, 32, 8>}, {transform_indices = @transform_6, window_bounds = array<i64: 1, 4, 8, 8>}, {transform_indices = @transform_7, window_bounds = array<i64: 1, 4, 8, 8>}, {transform_indices = @transform_8, window_bounds = array<i64: 1, 4, 8, 8>}]} {
    %c0 = arith.constant 0 : index
    %c0_0 = arith.constant 0 : index
    %c0_1 = arith.constant 0 : index
    %0 = vector.load %arg2[%c0, %c0_0, %c0_1] : memref<1x8x32xf32, #tpu.memory_space<vmem>>, vector<1x8x32xf32>
    %1 = vector.shape_cast %0 : vector<1x8x32xf32> to vector<8x32xf32>
    %c0_2 = arith.constant 0 : index
    %c0_3 = arith.constant 0 : index
    %2 = vector.load %arg3[%c0_2, %c0_3] : memref<1x32xf32, #tpu.memory_space<vmem>>, vector<1x32xf32>
    %3 = vector.shape_cast %2 : vector<1x32xf32> to vector<32xf32>
    %c0_4 = arith.constant 0 : index
    %c0_5 = arith.constant 0 : index
    %4 = vector.load %arg4[%c0_4, %c0_5] : memref<1x32xf32, #tpu.memory_space<vmem>>, vector<1x32xf32>
    %5 = vector.shape_cast %4 : vector<1x32xf32> to vector<32xf32>
    %cst = arith.constant dense<0.000000e+00> : vector<8xf32>
    %6 = vector.multi_reduction <add>, %1, %cst [1] : vector<8x32xf32> to vector<8xf32>
    %7 = vector.shape_cast %6 : vector<8xf32> to vector<8x1xf32>
    %cst_6 = arith.constant 3.200000e+01 : f32
    %8 = vector.broadcast %cst_6 : f32 to vector<8x1xf32>
    %9 = arith.divf %7, %8 : vector<8x1xf32>
    %10 = vector.broadcast %9 : vector<8x1xf32> to vector<8x32xf32>
    %11 = arith.subf %1, %10 : vector<8x32xf32>
    %12 = arith.mulf %11, %11 : vector<8x32xf32>
    %cst_7 = arith.constant dense<0.000000e+00> : vector<8xf32>
    %13 = vector.multi_reduction <add>, %12, %cst_7 [1] : vector<8x32xf32> to vector<8xf32>
    %14 = vector.shape_cast %13 : vector<8xf32> to vector<8x1xf32>
    %cst_8 = arith.constant 3.200000e+01 : f32
    %15 = vector.broadcast %cst_8 : f32 to vector<8x1xf32>
    %16 = arith.divf %14, %15 : vector<8x1xf32>
    %17 = vector.broadcast %9 : vector<8x1xf32> to vector<8x32xf32>
    %18 = arith.subf %1, %17 : vector<8x32xf32>
    %cst_9 = arith.constant 9.99999974E-6 : f32
    %19 = vector.broadcast %cst_9 : f32 to vector<8x1xf32>
    %20 = arith.addf %16, %19 : vector<8x1xf32>
    %21 = math.rsqrt %20 : vector<8x1xf32>
    %22 = vector.broadcast %21 : vector<8x1xf32> to vector<8x32xf32>
    %23 = arith.mulf %18, %22 : vector<8x32xf32>
    %24 = vector.shape_cast %3 : vector<32xf32> to vector<1x32xf32>
    %25 = vector.broadcast %24 : vector<1x32xf32> to vector<8x32xf32>
    %26 = arith.mulf %23, %25 : vector<8x32xf32>
    %27 = vector.shape_cast %5 : vector<32xf32> to vector<1x32xf32>
    %28 = vector.broadcast %27 : vector<1x32xf32> to vector<8x32xf32>
    %29 = arith.addf %26, %28 : vector<8x32xf32>
    %30 = arith.truncf %29 : vector<8x32xf32> to vector<8x32xbf16>
    %c0_10 = arith.constant 0 : index
    %c0_11 = arith.constant 0 : index
    %c0_12 = arith.constant 0 : index
    %31 = vector.load %arg5[%c0_10, %c0_11, %c0_12] : memref<4x32x8xbf16, #tpu.memory_space<vmem>>, vector<1x32x8xbf16>
    %32 = vector.shape_cast %31 : vector<1x32x8xbf16> to vector<32x8xbf16>
    %cst_13 = arith.constant dense<0.000000e+00> : vector<8x8xf32>
    %33 = tpu.matmul %30, %32, %cst_13 {dimension_numbers = #tpu.dot_dimension_numbers<[1], [0], [0], [1], [0, 0, 1, 1], [], []>} : vector<8x32xbf16>, vector<32x8xbf16>, vector<8x8xf32> -> vector<8x8xf32>
    %34 = arith.truncf %33 : vector<8x8xf32> to vector<8x8xbf16>
    %c0_14 = arith.constant 0 : index
    %c0_15 = arith.constant 0 : index
    %c0_16 = arith.constant 0 : index
    %c0_17 = arith.constant 0 : index
    %35 = vector.load %arg8[%c0_14, %c0_15, %c0_16, %c0_17] : memref<1x4x8x8xbf16, #tpu.memory_space<vmem>>, vector<1x1x8x8xbf16>
    %36 = vector.shape_cast %35 : vector<1x1x8x8xbf16> to vector<8x8xbf16>
    %37 = vector.shape_cast %34 : vector<8x8xbf16> to vector<1x1x8x8xbf16>
    tpu.vector_store %arg8[%c0_14, %c0_15, %c0_16, %c0_17], %37 {strides = array<i32>} : memref<1x4x8x8xbf16, #tpu.memory_space<vmem>>, vector<1x1x8x8xbf16>,
    %c0_18 = arith.constant 0 : index
    %c0_19 = arith.constant 0 : index
    %c0_20 = arith.constant 0 : index
    %38 = vector.load %arg6[%c0_18, %c0_19, %c0_20] : memref<4x32x8xbf16, #tpu.memory_space<vmem>>, vector<1x32x8xbf16>
    %39 = vector.shape_cast %38 : vector<1x32x8xbf16> to vector<32x8xbf16>
    %cst_21 = arith.constant dense<0.000000e+00> : vector<8x8xf32>
    %40 = tpu.matmul %30, %39, %cst_21 {dimension_numbers = #tpu.dot_dimension_numbers<[1], [0], [0], [1], [0, 0, 1, 1], [], []>} : vector<8x32xbf16>, vector<32x8xbf16>, vector<8x8xf32> -> vector<8x8xf32>
    %41 = arith.truncf %40 : vector<8x8xf32> to vector<8x8xbf16>
    %c0_22 = arith.constant 0 : index
    %c0_23 = arith.constant 0 : index
    %c0_24 = arith.constant 0 : index
    %c0_25 = arith.constant 0 : index
    %42 = vector.load %arg9[%c0_22, %c0_23, %c0_24, %c0_25] : memref<1x4x8x8xbf16, #tpu.memory_space<vmem>>, vector<1x1x8x8xbf16>
    %43 = vector.shape_cast %42 : vector<1x1x8x8xbf16> to vector<8x8xbf16>
    %44 = vector.shape_cast %41 : vector<8x8xbf16> to vector<1x1x8x8xbf16>
    tpu.vector_store %arg9[%c0_22, %c0_23, %c0_24, %c0_25], %44 {strides = array<i32>} : memref<1x4x8x8xbf16, #tpu.memory_space<vmem>>, vector<1x1x8x8xbf16>,
    %c0_26 = arith.constant 0 : index
    %c0_27 = arith.constant 0 : index
    %c0_28 = arith.constant 0 : index
    %45 = vector.load %arg7[%c0_26, %c0_27, %c0_28] : memref<4x32x8xbf16, #tpu.memory_space<vmem>>, vector<1x32x8xbf16>
    %46 = vector.shape_cast %45 : vector<1x32x8xbf16> to vector<32x8xbf16>
    %cst_29 = arith.constant dense<0.000000e+00> : vector<8x8xf32>
    %47 = tpu.matmul %30, %46, %cst_29 {dimension_numbers = #tpu.dot_dimension_numbers<[1], [0], [0], [1], [0, 0, 1, 1], [], []>} : vector<8x32xbf16>, vector<32x8xbf16>, vector<8x8xf32> -> vector<8x8xf32>
    %48 = arith.truncf %47 : vector<8x8xf32> to vector<8x8xbf16>
    %c0_30 = arith.constant 0 : index
    %c0_31 = arith.constant 0 : index
    %c0_32 = arith.constant 0 : index
    %c0_33 = arith.constant 0 : index
    %49 = vector.load %arg10[%c0_30, %c0_31, %c0_32, %c0_33] : memref<1x4x8x8xbf16, #tpu.memory_space<vmem>>, vector<1x1x8x8xbf16>
    %50 = vector.shape_cast %49 : vector<1x1x8x8xbf16> to vector<8x8xbf16>
    %51 = vector.shape_cast %48 : vector<8x8xbf16> to vector<1x1x8x8xbf16>
    tpu.vector_store %arg10[%c0_30, %c0_31, %c0_32, %c0_33], %51 {strides = array<i32>} : memref<1x4x8x8xbf16, #tpu.memory_space<vmem>>, vector<1x1x8x8xbf16>,
    %c1 = arith.constant 1 : index
    %c0_34 = arith.constant 0 : index
    %c0_35 = arith.constant 0 : index
    %52 = vector.load %arg5[%c1, %c0_34, %c0_35] : memref<4x32x8xbf16, #tpu.memory_space<vmem>>, vector<1x32x8xbf16>
    %53 = vector.shape_cast %52 : vector<1x32x8xbf16> to vector<32x8xbf16>
    %cst_36 = arith.constant dense<0.000000e+00> : vector<8x8xf32>
    %54 = tpu.matmul %30, %53, %cst_36 {dimension_numbers = #tpu.dot_dimension_numbers<[1], [0], [0], [1], [0, 0, 1, 1], [], []>} : vector<8x32xbf16>, vector<32x8xbf16>, vector<8x8xf32> -> vector<8x8xf32>
    %55 = arith.truncf %54 : vector<8x8xf32> to vector<8x8xbf16>
    %c0_37 = arith.constant 0 : index
    %c1_38 = arith.constant 1 : index
    %c0_39 = arith.constant 0 : index
    %c0_40 = arith.constant 0 : index
    %56 = vector.load %arg8[%c0_37, %c1_38, %c0_39, %c0_40] : memref<1x4x8x8xbf16, #tpu.memory_space<vmem>>, vector<1x1x8x8xbf16>
    %57 = vector.shape_cast %56 : vector<1x1x8x8xbf16> to vector<8x8xbf16>
    %58 = vector.shape_cast %55 : vector<8x8xbf16> to vector<1x1x8x8xbf16>
    tpu.vector_store %arg8[%c0_37, %c1_38, %c0_39, %c0_40], %58 {strides = array<i32>} : memref<1x4x8x8xbf16, #tpu.memory_space<vmem>>, vector<1x1x8x8xbf16>,
    %c1_41 = arith.constant 1 : index
    %c0_42 = arith.constant 0 : index
    %c0_43 = arith.constant 0 : index
    %59 = vector.load %arg6[%c1_41, %c0_42, %c0_43] : memref<4x32x8xbf16, #tpu.memory_space<vmem>>, vector<1x32x8xbf16>
    %60 = vector.shape_cast %59 : vector<1x32x8xbf16> to vector<32x8xbf16>
    %cst_44 = arith.constant dense<0.000000e+00> : vector<8x8xf32>
    %61 = tpu.matmul %30, %60, %cst_44 {dimension_numbers = #tpu.dot_dimension_numbers<[1], [0], [0], [1], [0, 0, 1, 1], [], []>} : vector<8x32xbf16>, vector<32x8xbf16>, vector<8x8xf32> -> vector<8x8xf32>
    %62 = arith.truncf %61 : vector<8x8xf32> to vector<8x8xbf16>
    %c0_45 = arith.constant 0 : index
    %c1_46 = arith.constant 1 : index
    %c0_47 = arith.constant 0 : index
    %c0_48 = arith.constant 0 : index
    %63 = vector.load %arg9[%c0_45, %c1_46, %c0_47, %c0_48] : memref<1x4x8x8xbf16, #tpu.memory_space<vmem>>, vector<1x1x8x8xbf16>
    %64 = vector.shape_cast %63 : vector<1x1x8x8xbf16> to vector<8x8xbf16>
    %65 = vector.shape_cast %62 : vector<8x8xbf16> to vector<1x1x8x8xbf16>
    tpu.vector_store %arg9[%c0_45, %c1_46, %c0_47, %c0_48], %65 {strides = array<i32>} : memref<1x4x8x8xbf16, #tpu.memory_space<vmem>>, vector<1x1x8x8xbf16>,
    %c1_49 = arith.constant 1 : index
    %c0_50 = arith.constant 0 : index
    %c0_51 = arith.constant 0 : index
    %66 = vector.load %arg7[%c1_49, %c0_50, %c0_51] : memref<4x32x8xbf16, #tpu.memory_space<vmem>>, vector<1x32x8xbf16>
    %67 = vector.shape_cast %66 : vector<1x32x8xbf16> to vector<32x8xbf16>
    %cst_52 = arith.constant dense<0.000000e+00> : vector<8x8xf32>
    %68 = tpu.matmul %30, %67, %cst_52 {dimension_numbers = #tpu.dot_dimension_numbers<[1], [0], [0], [1], [0, 0, 1, 1], [], []>} : vector<8x32xbf16>, vector<32x8xbf16>, vector<8x8xf32> -> vector<8x8xf32>
    %69 = arith.truncf %68 : vector<8x8xf32> to vector<8x8xbf16>
    %c0_53 = arith.constant 0 : index
    %c1_54 = arith.constant 1 : index
    %c0_55 = arith.constant 0 : index
    %c0_56 = arith.constant 0 : index
    %70 = vector.load %arg10[%c0_53, %c1_54, %c0_55, %c0_56] : memref<1x4x8x8xbf16, #tpu.memory_space<vmem>>, vector<1x1x8x8xbf16>
    %71 = vector.shape_cast %70 : vector<1x1x8x8xbf16> to vector<8x8xbf16>
    %72 = vector.shape_cast %69 : vector<8x8xbf16> to vector<1x1x8x8xbf16>
    tpu.vector_store %arg10[%c0_53, %c1_54, %c0_55, %c0_56], %72 {strides = array<i32>} : memref<1x4x8x8xbf16, #tpu.memory_space<vmem>>, vector<1x1x8x8xbf16>,
    %c2 = arith.constant 2 : index
    %c0_57 = arith.constant 0 : index
    %c0_58 = arith.constant 0 : index
    %73 = vector.load %arg5[%c2, %c0_57, %c0_58] : memref<4x32x8xbf16, #tpu.memory_space<vmem>>, vector<1x32x8xbf16>
    %74 = vector.shape_cast %73 : vector<1x32x8xbf16> to vector<32x8xbf16>
    %cst_59 = arith.constant dense<0.000000e+00> : vector<8x8xf32>
    %75 = tpu.matmul %30, %74, %cst_59 {dimension_numbers = #tpu.dot_dimension_numbers<[1], [0], [0], [1], [0, 0, 1, 1], [], []>} : vector<8x32xbf16>, vector<32x8xbf16>, vector<8x8xf32> -> vector<8x8xf32>
    %76 = arith.truncf %75 : vector<8x8xf32> to vector<8x8xbf16>
    %c0_60 = arith.constant 0 : index
    %c2_61 = arith.constant 2 : index
    %c0_62 = arith.constant 0 : index
    %c0_63 = arith.constant 0 : index
    %77 = vector.load %arg8[%c0_60, %c2_61, %c0_62, %c0_63] : memref<1x4x8x8xbf16, #tpu.memory_space<vmem>>, vector<1x1x8x8xbf16>
    %78 = vector.shape_cast %77 : vector<1x1x8x8xbf16> to vector<8x8xbf16>
    %79 = vector.shape_cast %76 : vector<8x8xbf16> to vector<1x1x8x8xbf16>
    tpu.vector_store %arg8[%c0_60, %c2_61, %c0_62, %c0_63], %79 {strides = array<i32>} : memref<1x4x8x8xbf16, #tpu.memory_space<vmem>>, vector<1x1x8x8xbf16>,
    %c2_64 = arith.constant 2 : index
    %c0_65 = arith.constant 0 : index
    %c0_66 = arith.constant 0 : index
    %80 = vector.load %arg6[%c2_64, %c0_65, %c0_66] : memref<4x32x8xbf16, #tpu.memory_space<vmem>>, vector<1x32x8xbf16>
    %81 = vector.shape_cast %80 : vector<1x32x8xbf16> to vector<32x8xbf16>
    %cst_67 = arith.constant dense<0.000000e+00> : vector<8x8xf32>
    %82 = tpu.matmul %30, %81, %cst_67 {dimension_numbers = #tpu.dot_dimension_numbers<[1], [0], [0], [1], [0, 0, 1, 1], [], []>} : vector<8x32xbf16>, vector<32x8xbf16>, vector<8x8xf32> -> vector<8x8xf32>
    %83 = arith.truncf %82 : vector<8x8xf32> to vector<8x8xbf16>
    %c0_68 = arith.constant 0 : index
    %c2_69 = arith.constant 2 : index
    %c0_70 = arith.constant 0 : index
    %c0_71 = arith.constant 0 : index
    %84 = vector.load %arg9[%c0_68, %c2_69, %c0_70, %c0_71] : memref<1x4x8x8xbf16, #tpu.memory_space<vmem>>, vector<1x1x8x8xbf16>
    %85 = vector.shape_cast %84 : vector<1x1x8x8xbf16> to vector<8x8xbf16>
    %86 = vector.shape_cast %83 : vector<8x8xbf16> to vector<1x1x8x8xbf16>
    tpu.vector_store %arg9[%c0_68, %c2_69, %c0_70, %c0_71], %86 {strides = array<i32>} : memref<1x4x8x8xbf16, #tpu.memory_space<vmem>>, vector<1x1x8x8xbf16>,
    %c2_72 = arith.constant 2 : index
    %c0_73 = arith.constant 0 : index
    %c0_74 = arith.constant 0 : index
    %87 = vector.load %arg7[%c2_72, %c0_73, %c0_74] : memref<4x32x8xbf16, #tpu.memory_space<vmem>>, vector<1x32x8xbf16>
    %88 = vector.shape_cast %87 : vector<1x32x8xbf16> to vector<32x8xbf16>
    %cst_75 = arith.constant dense<0.000000e+00> : vector<8x8xf32>
    %89 = tpu.matmul %30, %88, %cst_75 {dimension_numbers = #tpu.dot_dimension_numbers<[1], [0], [0], [1], [0, 0, 1, 1], [], []>} : vector<8x32xbf16>, vector<32x8xbf16>, vector<8x8xf32> -> vector<8x8xf32>
    %90 = arith.truncf %89 : vector<8x8xf32> to vector<8x8xbf16>
    %c0_76 = arith.constant 0 : index
    %c2_77 = arith.constant 2 : index
    %c0_78 = arith.constant 0 : index
    %c0_79 = arith.constant 0 : index
    %91 = vector.load %arg10[%c0_76, %c2_77, %c0_78, %c0_79] : memref<1x4x8x8xbf16, #tpu.memory_space<vmem>>, vector<1x1x8x8xbf16>
    %92 = vector.shape_cast %91 : vector<1x1x8x8xbf16> to vector<8x8xbf16>
    %93 = vector.shape_cast %90 : vector<8x8xbf16> to vector<1x1x8x8xbf16>
    tpu.vector_store %arg10[%c0_76, %c2_77, %c0_78, %c0_79], %93 {strides = array<i32>} : memref<1x4x8x8xbf16, #tpu.memory_space<vmem>>, vector<1x1x8x8xbf16>,
    %c3 = arith.constant 3 : index
    %c0_80 = arith.constant 0 : index
    %c0_81 = arith.constant 0 : index
    %94 = vector.load %arg5[%c3, %c0_80, %c0_81] : memref<4x32x8xbf16, #tpu.memory_space<vmem>>, vector<1x32x8xbf16>
    %95 = vector.shape_cast %94 : vector<1x32x8xbf16> to vector<32x8xbf16>
    %cst_82 = arith.constant dense<0.000000e+00> : vector<8x8xf32>
    %96 = tpu.matmul %30, %95, %cst_82 {dimension_numbers = #tpu.dot_dimension_numbers<[1], [0], [0], [1], [0, 0, 1, 1], [], []>} : vector<8x32xbf16>, vector<32x8xbf16>, vector<8x8xf32> -> vector<8x8xf32>
    %97 = arith.truncf %96 : vector<8x8xf32> to vector<8x8xbf16>
    %c0_83 = arith.constant 0 : index
    %c3_84 = arith.constant 3 : index
    %c0_85 = arith.constant 0 : index
    %c0_86 = arith.constant 0 : index
    %98 = vector.load %arg8[%c0_83, %c3_84, %c0_85, %c0_86] : memref<1x4x8x8xbf16, #tpu.memory_space<vmem>>, vector<1x1x8x8xbf16>
    %99 = vector.shape_cast %98 : vector<1x1x8x8xbf16> to vector<8x8xbf16>
    %100 = vector.shape_cast %97 : vector<8x8xbf16> to vector<1x1x8x8xbf16>
    tpu.vector_store %arg8[%c0_83, %c3_84, %c0_85, %c0_86], %100 {strides = array<i32>} : memref<1x4x8x8xbf16, #tpu.memory_space<vmem>>, vector<1x1x8x8xbf16>,
    %c3_87 = arith.constant 3 : index
    %c0_88 = arith.constant 0 : index
    %c0_89 = arith.constant 0 : index
    %101 = vector.load %arg6[%c3_87, %c0_88, %c0_89] : memref<4x32x8xbf16, #tpu.memory_space<vmem>>, vector<1x32x8xbf16>
    %102 = vector.shape_cast %101 : vector<1x32x8xbf16> to vector<32x8xbf16>
    %cst_90 = arith.constant dense<0.000000e+00> : vector<8x8xf32>
    %103 = tpu.matmul %30, %102, %cst_90 {dimension_numbers = #tpu.dot_dimension_numbers<[1], [0], [0], [1], [0, 0, 1, 1], [], []>} : vector<8x32xbf16>, vector<32x8xbf16>, vector<8x8xf32> -> vector<8x8xf32>
    %104 = arith.truncf %103 : vector<8x8xf32> to vector<8x8xbf16>
    %c0_91 = arith.constant 0 : index
    %c3_92 = arith.constant 3 : index
    %c0_93 = arith.constant 0 : index
    %c0_94 = arith.constant 0 : index
    %105 = vector.load %arg9[%c0_91, %c3_92, %c0_93, %c0_94] : memref<1x4x8x8xbf16, #tpu.memory_space<vmem>>, vector<1x1x8x8xbf16>
    %106 = vector.shape_cast %105 : vector<1x1x8x8xbf16> to vector<8x8xbf16>
    %107 = vector.shape_cast %104 : vector<8x8xbf16> to vector<1x1x8x8xbf16>
    tpu.vector_store %arg9[%c0_91, %c3_92, %c0_93, %c0_94], %107 {strides = array<i32>} : memref<1x4x8x8xbf16, #tpu.memory_space<vmem>>, vector<1x1x8x8xbf16>,
    %c3_95 = arith.constant 3 : index
    %c0_96 = arith.constant 0 : index
    %c0_97 = arith.constant 0 : index
    %108 = vector.load %arg7[%c3_95, %c0_96, %c0_97] : memref<4x32x8xbf16, #tpu.memory_space<vmem>>, vector<1x32x8xbf16>
    %109 = vector.shape_cast %108 : vector<1x32x8xbf16> to vector<32x8xbf16>
    %cst_98 = arith.constant dense<0.000000e+00> : vector<8x8xf32>
    %110 = tpu.matmul %30, %109, %cst_98 {dimension_numbers = #tpu.dot_dimension_numbers<[1], [0], [0], [1], [0, 0, 1, 1], [], []>} : vector<8x32xbf16>, vector<32x8xbf16>, vector<8x8xf32> -> vector<8x8xf32>
    %111 = arith.truncf %110 : vector<8x8xf32> to vector<8x8xbf16>
    %c0_99 = arith.constant 0 : index
    %c3_100 = arith.constant 3 : index
    %c0_101 = arith.constant 0 : index
    %c0_102 = arith.constant 0 : index
    %112 = vector.load %arg10[%c0_99, %c3_100, %c0_101, %c0_102] : memref<1x4x8x8xbf16, #tpu.memory_space<vmem>>, vector<1x1x8x8xbf16>
    %113 = vector.shape_cast %112 : vector<1x1x8x8xbf16> to vector<8x8xbf16>
    %114 = vector.shape_cast %111 : vector<8x8xbf16> to vector<1x1x8x8xbf16>
    tpu.vector_store %arg10[%c0_99, %c3_100, %c0_101, %c0_102], %114 {strides = array<i32>} : memref<1x4x8x8xbf16, #tpu.memory_space<vmem>>, vector<1x1x8x8xbf16>,
    return
  }
  func.func @transform_0(%arg0: i32, %arg1: i32) -> (i32, i32, i32) {
    %c0_i32 = arith.constant 0 : i32
    %c0_i32_0 = arith.constant 0 : i32
    return %arg0, %arg1, %c0_i32 : i32, i32, i32
  }
  func.func @transform_1(%arg0: i32, %arg1: i32) -> (i32, i32) {
    %c0_i32 = arith.constant 0 : i32
    %c0_i32_0 = arith.constant 0 : i32
    %c0_i32_1 = arith.constant 0 : i32
    return %c0_i32, %c0_i32_0 : i32, i32
  }
  func.func @transform_2(%arg0: i32, %arg1: i32) -> (i32, i32) {
    %c0_i32 = arith.constant 0 : i32
    %c0_i32_0 = arith.constant 0 : i32
    %c0_i32_1 = arith.constant 0 : i32
    return %c0_i32, %c0_i32_0 : i32, i32
  }
  func.func @transform_3(%arg0: i32, %arg1: i32) -> (i32, i32, i32) {
    %c0_i32 = arith.constant 0 : i32
    %c0_i32_0 = arith.constant 0 : i32
    %c0_i32_1 = arith.constant 0 : i32
    %c0_i32_2 = arith.constant 0 : i32
    return %c0_i32, %c0_i32_0, %c0_i32_1 : i32, i32, i32
  }
  func.func @transform_4(%arg0: i32, %arg1: i32) -> (i32, i32, i32) {
    %c0_i32 = arith.constant 0 : i32
    %c0_i32_0 = arith.constant 0 : i32
    %c0_i32_1 = arith.constant 0 : i32
    %c0_i32_2 = arith.constant 0 : i32
    return %c0_i32, %c0_i32_0, %c0_i32_1 : i32, i32, i32
  }
  func.func @transform_5(%arg0: i32, %arg1: i32) -> (i32, i32, i32) {
    %c0_i32 = arith.constant 0 : i32
    %c0_i32_0 = arith.constant 0 : i32
    %c0_i32_1 = arith.constant 0 : i32
    %c0_i32_2 = arith.constant 0 : i32
    return %c0_i32, %c0_i32_0, %c0_i32_1 : i32, i32, i32
  }
  func.func @transform_6(%arg0: i32, %arg1: i32) -> (i32, i32, i32, i32) {
    %c0_i32 = arith.constant 0 : i32
    %c0_i32_0 = arith.constant 0 : i32
    %c0_i32_1 = arith.constant 0 : i32
    return %arg0, %c0_i32, %arg1, %c0_i32_0 : i32, i32, i32, i32
  }
  func.func @transform_7(%arg0: i32, %arg1: i32) -> (i32, i32, i32, i32) {
    %c0_i32 = arith.constant 0 : i32
    %c0_i32_0 = arith.constant 0 : i32
    %c0_i32_1 = arith.constant 0 : i32
    return %arg0, %c0_i32, %arg1, %c0_i32_0 : i32, i32, i32, i32
  }
  func.func @transform_8(%arg0: i32, %arg1: i32) -> (i32, i32, i32, i32) {
    %c0_i32 = arith.constant 0 : i32
    %c0_i32_0 = arith.constant 0 : i32
    %c0_i32_1 = arith.constant 0 : i32
    return %arg0, %c0_i32, %arg1, %c0_i32_0 : i32, i32, i32, i32
  }
}

module attributes {stable_mosaic.version = 11 : i64} {
  func.func @ln_qkv_kernel(%arg0: i32, %arg1: i32, %arg2: memref<1x8x32xf32, #tpu.memory_space<vmem>>, %arg3: memref<1x32xf32, #tpu.memory_space<vmem>>, %arg4: memref<1x32xf32, #tpu.memory_space<vmem>>, %arg5: memref<4x32x8xbf16, #tpu.memory_space<vmem>>, %arg6: memref<4x32x8xbf16, #tpu.memory_space<vmem>>, %arg7: memref<4x32x8xbf16, #tpu.memory_space<vmem>>, %arg8: memref<1x4x8x8xbf16, #tpu.memory_space<vmem>>, %arg9: memref<1x4x8x8xbf16, #tpu.memory_space<vmem>>, %arg10: memref<1x4x8x8xbf16, #tpu.memory_space<vmem>>) attributes {dimension_semantics = [#tpu.dimension_semantics<parallel>, #tpu.dimension_semantics<parallel>], iteration_bounds = array<i64: 2, 1>, scalar_prefetch = 0 : i64, scratch_operands = 0 : i64, tpu.core_type = #tpu.core_type<tc>, window_params = [{transform_indices = @transform_0, window_bounds = array<i64: 1, 8, 32>}, {pipeline_mode = #tpu.pipeline_mode<synchronous>, transform_indices = @transform_1, window_bounds = array<i64: 1, 32>}, {pipeline_mode = #tpu.pipeline_mode<synchronous>, transform_indices = @transform_2, window_bounds = array<i64: 1, 32>}, {pipeline_mode = #tpu.pipeline_mode<synchronous>, transform_indices = @transform_3, window_bounds = array<i64: 4, 32, 8>}, {pipeline_mode = #tpu.pipeline_mode<synchronous>, transform_indices = @transform_4, window_bounds = array<i64: 4, 32, 8>}, {pipeline_mode = #tpu.pipeline_mode<synchronous>, transform_indices = @transform_5, window_bounds = array<i64: 4, 32, 8>}, {transform_indices = @transform_6, window_bounds = array<i64: 1, 4, 8, 8>}, {transform_indices = @transform_7, window_bounds = array<i64: 1, 4, 8, 8>}, {transform_indices = @transform_8, window_bounds = array<i64: 1, 4, 8, 8>}]} {
    %c0 = arith.constant 0 : index
    %c0_0 = arith.constant 0 : index
    %c0_1 = arith.constant 0 : index
    %0 = vector.load %arg2[%c0, %c0_0, %c0_1] : memref<1x8x32xf32, #tpu.memory_space<vmem>>, vector<1x8x32xf32>
    %1 = vector.shape_cast %0 : vector<1x8x32xf32> to vector<8x32xf32>
    %c0_2 = arith.constant 0 : index
    %c0_3 = arith.constant 0 : index
    %2 = vector.load %arg3[%c0_2, %c0_3] : memref<1x32xf32, #tpu.memory_space<vmem>>, vector<1x32xf32>
    %3 = vector.shape_cast %2 : vector<1x32xf32> to vector<32xf32>
    %c0_4 = arith.constant 0 : index
    %c0_5 = arith.constant 0 : index
    %4 = vector.load %arg4[%c0_4, %c0_5] : memref<1x32xf32, #tpu.memory_space<vmem>>, vector<1x32xf32>
    %5 = vector.shape_cast %4 : vector<1x32xf32> to vector<32xf32>
    %cst = arith.constant dense<0.000000e+00> : vector<8xf32>
    %6 = vector.multi_reduction <add>, %1, %cst [1] : vector<8x32xf32> to vector<8xf32>
    %7 = vector.shape_cast %6 : vector<8xf32> to vector<8x1xf32>
    %cst_6 = arith.constant 3.200000e+01 : f32
    %8 = vector.broadcast %cst_6 : f32 to vector<8x1xf32>
    %9 = arith.divf %7, %8 : vector<8x1xf32>
    %10 = vector.broadcast %9 : vector<8x1xf32> to vector<8x32xf32>
    %11 = arith.subf %1, %10 : vector<8x32xf32>
    %12 = arith.mulf %11, %11 : vector<8x32xf32>
    %cst_7 = arith.constant dense<0.000000e+00> : vector<8xf32>
    %13 = vector.multi_reduction <add>, %12, %cst_7 [1] : vector<8x32xf32> to vector<8xf32>
    %14 = vector.shape_cast %13 : vector<8xf32> to vector<8x1xf32>
    %cst_8 = arith.constant 3.200000e+01 : f32
    %15 = vector.broadcast %cst_8 : f32 to vector<8x1xf32>
    %16 = arith.divf %14, %15 : vector<8x1xf32>
    %17 = vector.broadcast %9 : vector<8x1xf32> to vector<8x32xf32>
    %18 = arith.subf %1, %17 : vector<8x32xf32>
    %cst_9 = arith.constant 9.99999974E-6 : f32
    %19 = vector.broadcast %cst_9 : f32 to vector<8x1xf32>
    %20 = arith.addf %16, %19 : vector<8x1xf32>
    %21 = math.rsqrt %20 : vector<8x1xf32>
    %22 = vector.broadcast %21 : vector<8x1xf32> to vector<8x32xf32>
    %23 = arith.mulf %18, %22 : vector<8x32xf32>
    %24 = vector.shape_cast %3 : vector<32xf32> to vector<1x32xf32>
    %25 = vector.broadcast %24 : vector<1x32xf32> to vector<8x32xf32>
    %26 = arith.mulf %23, %25 : vector<8x32xf32>
    %27 = vector.shape_cast %5 : vector<32xf32> to vector<1x32xf32>
    %28 = vector.broadcast %27 : vector<1x32xf32> to vector<8x32xf32>
    %29 = arith.addf %26, %28 : vector<8x32xf32>
    %30 = arith.truncf %29 : vector<8x32xf32> to vector<8x32xbf16>
    %c0_10 = arith.constant 0 : index
    %c0_11 = arith.constant 0 : index
    %c0_12 = arith.constant 0 : index
    %31 = vector.load %arg5[%c0_10, %c0_11, %c0_12] : memref<4x32x8xbf16, #tpu.memory_space<vmem>>, vector<1x32x8xbf16>
    %32 = vector.shape_cast %31 : vector<1x32x8xbf16> to vector<32x8xbf16>
    %cst_13 = arith.constant dense<0.000000e+00> : vector<8x8xf32>
    %33 = tpu.matmul %30, %32, %cst_13 {dimension_numbers = #tpu.dot_dimension_numbers<[1], [0], [0], [1], [0, 0, 1, 1], [], []>} : vector<8x32xbf16>, vector<32x8xbf16>, vector<8x8xf32> -> vector<8x8xf32>
    %34 = arith.truncf %33 : vector<8x8xf32> to vector<8x8xbf16>
    %c0_14 = arith.constant 0 : index
    %c0_15 = arith.constant 0 : index
    %c0_16 = arith.constant 0 : index
    %c0_17 = arith.constant 0 : index
    %35 = vector.load %arg8[%c0_14, %c0_15, %c0_16, %c0_17] : memref<1x4x8x8xbf16, #tpu.memory_space<vmem>>, vector<1x1x8x8xbf16>
    %36 = vector.shape_cast %35 : vector<1x1x8x8xbf16> to vector<8x8xbf16>
    %37 = vector.shape_cast %34 : vector<8x8xbf16> to vector<1x1x8x8xbf16>
    tpu.vector_store %arg8[%c0_14, %c0_15, %c0_16, %c0_17], %37 {strides = array<i32>} : memref<1x4x8x8xbf16, #tpu.memory_space<vmem>>, vector<1x1x8x8xbf16>,
    %c0_18 = arith.constant 0 : index
    %c0_19 = arith.constant 0 : index
    %c0_20 = arith.constant 0 : index
    %38 = vector.load %arg6[%c0_18, %c0_19, %c0_20] : memref<4x32x8xbf16, #tpu.memory_space<vmem>>, vector<1x32x8xbf16>
    %39 = vector.shape_cast %38 : vector<1x32x8xbf16> to vector<32x8xbf16>
    %cst_21 = arith.constant dense<0.000000e+00> : vector<8x8xf32>
    %40 = tpu.matmul %30, %39, %cst_21 {dimension_numbers = #tpu.dot_dimension_numbers<[1], [0], [0], [1], [0, 0, 1, 1], [], []>} : vector<8x32xbf16>, vector<32x8xbf16>, vector<8x8xf32> -> vector<8x8xf32>
    %41 = arith.truncf %40 : vector<8x8xf32> to vector<8x8xbf16>
    %c0_22 = arith.constant 0 : index
    %c0_23 = arith.constant 0 : index
    %c0_24 = arith.constant 0 : index
    %c0_25 = arith.constant 0 : index
    %42 = vector.load %arg9[%c0_22, %c0_23, %c0_24, %c0_25] : memref<1x4x8x8xbf16, #tpu.memory_space<vmem>>, vector<1x1x8x8xbf16>
    %43 = vector.shape_cast %42 : vector<1x1x8x8xbf16> to vector<8x8xbf16>
    %44 = vector.shape_cast %41 : vector<8x8xbf16> to vector<1x1x8x8xbf16>
    tpu.vector_store %arg9[%c0_22, %c0_23, %c0_24, %c0_25], %44 {strides = array<i32>} : memref<1x4x8x8xbf16, #tpu.memory_space<vmem>>, vector<1x1x8x8xbf16>,
    %c0_26 = arith.constant 0 : index
    %c0_27 = arith.constant 0 : index
    %c0_28 = arith.constant 0 : index
    %45 = vector.load %arg7[%c0_26, %c0_27, %c0_28] : memref<4x32x8xbf16, #tpu.memory_space<vmem>>, vector<1x32x8xbf16>
    %46 = vector.shape_cast %45 : vector<1x32x8xbf16> to vector<32x8xbf16>
    %cst_29 = arith.constant dense<0.000000e+00> : vector<8x8xf32>
    %47 = tpu.matmul %30, %46, %cst_29 {dimension_numbers = #tpu.dot_dimension_numbers<[1], [0], [0], [1], [0, 0, 1, 1], [], []>} : vector<8x32xbf16>, vector<32x8xbf16>, vector<8x8xf32> -> vector<8x8xf32>
    %48 = arith.truncf %47 : vector<8x8xf32> to vector<8x8xbf16>
    %c0_30 = arith.constant 0 : index
    %c0_31 = arith.constant 0 : index
    %c0_32 = arith.constant 0 : index
    %c0_33 = arith.constant 0 : index
    %49 = vector.load %arg10[%c0_30, %c0_31, %c0_32, %c0_33] : memref<1x4x8x8xbf16, #tpu.memory_space<vmem>>, vector<1x1x8x8xbf16>
    %50 = vector.shape_cast %49 : vector<1x1x8x8xbf16> to vector<8x8xbf16>
    %51 = vector.shape_cast %48 : vector<8x8xbf16> to vector<1x1x8x8xbf16>
    tpu.vector_store %arg10[%c0_30, %c0_31, %c0_32, %c0_33], %51 {strides = array<i32>} : memref<1x4x8x8xbf16, #tpu.memory_space<vmem>>, vector<1x1x8x8xbf16>,
    %c1 = arith.constant 1 : index
    %c0_34 = arith.constant 0 : index
    %c0_35 = arith.constant 0 : index
    %52 = vector.load %arg5[%c1, %c0_34, %c0_35] : memref<4x32x8xbf16, #tpu.memory_space<vmem>>, vector<1x32x8xbf16>
    %53 = vector.shape_cast %52 : vector<1x32x8xbf16> to vector<32x8xbf16>
    %cst_36 = arith.constant dense<0.000000e+00> : vector<8x8xf32>
    %54 = tpu.matmul %30, %53, %cst_36 {dimension_numbers = #tpu.dot_dimension_numbers<[1], [0], [0], [1], [0, 0, 1, 1], [], []>} : vector<8x32xbf16>, vector<32x8xbf16>, vector<8x8xf32> -> vector<8x8xf32>
    %55 = arith.truncf %54 : vector<8x8xf32> to vector<8x8xbf16>
    %c0_37 = arith.constant 0 : index
    %c1_38 = arith.constant 1 : index
    %c0_39 = arith.constant 0 : index
    %c0_40 = arith.constant 0 : index
    %56 = vector.load %arg8[%c0_37, %c1_38, %c0_39, %c0_40] : memref<1x4x8x8xbf16, #tpu.memory_space<vmem>>, vector<1x1x8x8xbf16>
    %57 = vector.shape_cast %56 : vector<1x1x8x8xbf16> to vector<8x8xbf16>
    %58 = vector.shape_cast %55 : vector<8x8xbf16> to vector<1x1x8x8xbf16>
    tpu.vector_store %arg8[%c0_37, %c1_38, %c0_39, %c0_40], %58 {strides = array<i32>} : memref<1x4x8x8xbf16, #tpu.memory_space<vmem>>, vector<1x1x8x8xbf16>,
    %c1_41 = arith.constant 1 : index
    %c0_42 = arith.constant 0 : index
    %c0_43 = arith.constant 0 : index
    %59 = vector.load %arg6[%c1_41, %c0_42, %c0_43] : memref<4x32x8xbf16, #tpu.memory_space<vmem>>, vector<1x32x8xbf16>
    %60 = vector.shape_cast %59 : vector<1x32x8xbf16> to vector<32x8xbf16>
    %cst_44 = arith.constant dense<0.000000e+00> : vector<8x8xf32>
    %61 = tpu.matmul %30, %60, %cst_44 {dimension_numbers = #tpu.dot_dimension_numbers<[1], [0], [0], [1], [0, 0, 1, 1], [], []>} : vector<8x32xbf16>, vector<32x8xbf16>, vector<8x8xf32> -> vector<8x8xf32>
    %62 = arith.truncf %61 : vector<8x8xf32> to vector<8x8xbf16>
    %c0_45 = arith.constant 0 : index
    %c1_46 = arith.constant 1 : index
    %c0_47 = arith.constant 0 : index
    %c0_48 = arith.constant 0 : index
    %63 = vector.load %arg9[%c0_45, %c1_46, %c0_47, %c0_48] : memref<1x4x8x8xbf16, #tpu.memory_space<vmem>>, vector<1x1x8x8xbf16>
    %64 = vector.shape_cast %63 : vector<1x1x8x8xbf16> to vector<8x8xbf16>
    %65 = vector.shape_cast %62 : vector<8x8xbf16> to vector<1x1x8x8xbf16>
    tpu.vector_store %arg9[%c0_45, %c1_46, %c0_47, %c0_48], %65 {strides = array<i32>} : memref<1x4x8x8xbf16, #tpu.memory_space<vmem>>, vector<1x1x8x8xbf16>,
    %c1_49 = arith.constant 1 : index
    %c0_50 = arith.constant 0 : index
    %c0_51 = arith.constant 0 : index
    %66 = vector.load %arg7[%c1_49, %c0_50, %c0_51] : memref<4x32x8xbf16, #tpu.memory_space<vmem>>, vector<1x32x8xbf16>
    %67 = vector.shape_cast %66 : vector<1x32x8xbf16> to vector<32x8xbf16>
    %cst_52 = arith.constant dense<0.000000e+00> : vector<8x8xf32>
    %68 = tpu.matmul %30, %67, %cst_52 {dimension_numbers = #tpu.dot_dimension_numbers<[1], [0], [0], [1], [0, 0, 1, 1], [], []>} : vector<8x32xbf16>, vector<32x8xbf16>, vector<8x8xf32> -> vector<8x8xf32>
    %69 = arith.truncf %68 : vector<8x8xf32> to vector<8x8xbf16>
    %c0_53 = arith.constant 0 : index
    %c1_54 = arith.constant 1 : index
    %c0_55 = arith.constant 0 : index
    %c0_56 = arith.constant 0 : index
    %70 = vector.load %arg10[%c0_53, %c1_54, %c0_55, %c0_56] : memref<1x4x8x8xbf16, #tpu.memory_space<vmem>>, vector<1x1x8x8xbf16>
    %71 = vector.shape_cast %70 : vector<1x1x8x8xbf16> to vector<8x8xbf16>
    %72 = vector.shape_cast %69 : vector<8x8xbf16> to vector<1x1x8x8xbf16>
    tpu.vector_store %arg10[%c0_53, %c1_54, %c0_55, %c0_56], %72 {strides = array<i32>} : memref<1x4x8x8xbf16, #tpu.memory_space<vmem>>, vector<1x1x8x8xbf16>,
    %c2 = arith.constant 2 : index
    %c0_57 = arith.constant 0 : index
    %c0_58 = arith.constant 0 : index
    %73 = vector.load %arg5[%c2, %c0_57, %c0_58] : memref<4x32x8xbf16, #tpu.memory_space<vmem>>, vector<1x32x8xbf16>
    %74 = vector.shape_cast %73 : vector<1x32x8xbf16> to vector<32x8xbf16>
    %cst_59 = arith.constant dense<0.000000e+00> : vector<8x8xf32>
    %75 = tpu.matmul %30, %74, %cst_59 {dimension_numbers = #tpu.dot_dimension_numbers<[1], [0], [0], [1], [0, 0, 1, 1], [], []>} : vector<8x32xbf16>, vector<32x8xbf16>, vector<8x8xf32> -> vector<8x8xf32>
    %76 = arith.truncf %75 : vector<8x8xf32> to vector<8x8xbf16>
    %c0_60 = arith.constant 0 : index
    %c2_61 = arith.constant 2 : index
    %c0_62 = arith.constant 0 : index
    %c0_63 = arith.constant 0 : index
    %77 = vector.load %arg8[%c0_60, %c2_61, %c0_62, %c0_63] : memref<1x4x8x8xbf16, #tpu.memory_space<vmem>>, vector<1x1x8x8xbf16>
    %78 = vector.shape_cast %77 : vector<1x1x8x8xbf16> to vector<8x8xbf16>
    %79 = vector.shape_cast %76 : vector<8x8xbf16> to vector<1x1x8x8xbf16>
    tpu.vector_store %arg8[%c0_60, %c2_61, %c0_62, %c0_63], %79 {strides = array<i32>} : memref<1x4x8x8xbf16, #tpu.memory_space<vmem>>, vector<1x1x8x8xbf16>,
    %c2_64 = arith.constant 2 : index
    %c0_65 = arith.constant 0 : index
    %c0_66 = arith.constant 0 : index
    %80 = vector.load %arg6[%c2_64, %c0_65, %c0_66] : memref<4x32x8xbf16, #tpu.memory_space<vmem>>, vector<1x32x8xbf16>
    %81 = vector.shape_cast %80 : vector<1x32x8xbf16> to vector<32x8xbf16>
    %cst_67 = arith.constant dense<0.000000e+00> : vector<8x8xf32>
    %82 = tpu.matmul %30, %81, %cst_67 {dimension_numbers = #tpu.dot_dimension_numbers<[1], [0], [0], [1], [0, 0, 1, 1], [], []>} : vector<8x32xbf16>, vector<32x8xbf16>, vector<8x8xf32> -> vector<8x8xf32>
    %83 = arith.truncf %82 : vector<8x8xf32> to vector<8x8xbf16>
    %c0_68 = arith.constant 0 : index
    %c2_69 = arith.constant 2 : index
    %c0_70 = arith.constant 0 : index
    %c0_71 = arith.constant 0 : index
    %84 = vector.load %arg9[%c0_68, %c2_69, %c0_70, %c0_71] : memref<1x4x8x8xbf16, #tpu.memory_space<vmem>>, vector<1x1x8x8xbf16>
    %85 = vector.shape_cast %84 : vector<1x1x8x8xbf16> to vector<8x8xbf16>
    %86 = vector.shape_cast %83 : vector<8x8xbf16> to vector<1x1x8x8xbf16>
    tpu.vector_store %arg9[%c0_68, %c2_69, %c0_70, %c0_71], %86 {strides = array<i32>} : memref<1x4x8x8xbf16, #tpu.memory_space<vmem>>, vector<1x1x8x8xbf16>,
    %c2_72 = arith.constant 2 : index
    %c0_73 = arith.constant 0 : index
    %c0_74 = arith.constant 0 : index
    %87 = vector.load %arg7[%c2_72, %c0_73, %c0_74] : memref<4x32x8xbf16, #tpu.memory_space<vmem>>, vector<1x32x8xbf16>
    %88 = vector.shape_cast %87 : vector<1x32x8xbf16> to vector<32x8xbf16>
    %cst_75 = arith.constant dense<0.000000e+00> : vector<8x8xf32>
    %89 = tpu.matmul %30, %88, %cst_75 {dimension_numbers = #tpu.dot_dimension_numbers<[1], [0], [0], [1], [0, 0, 1, 1], [], []>} : vector<8x32xbf16>, vector<32x8xbf16>, vector<8x8xf32> -> vector<8x8xf32>
    %90 = arith.truncf %89 : vector<8x8xf32> to vector<8x8xbf16>
    %c0_76 = arith.constant 0 : index
    %c2_77 = arith.constant 2 : index
    %c0_78 = arith.constant 0 : index
    %c0_79 = arith.constant 0 : index
    %91 = vector.load %arg10[%c0_76, %c2_77, %c0_78, %c0_79] : memref<1x4x8x8xbf16, #tpu.memory_space<vmem>>, vector<1x1x8x8xbf16>
    %92 = vector.shape_cast %91 : vector<1x1x8x8xbf16> to vector<8x8xbf16>
    %93 = vector.shape_cast %90 : vector<8x8xbf16> to vector<1x1x8x8xbf16>
    tpu.vector_store %arg10[%c0_76, %c2_77, %c0_78, %c0_79], %93 {strides = array<i32>} : memref<1x4x8x8xbf16, #tpu.memory_space<vmem>>, vector<1x1x8x8xbf16>,
    %c3 = arith.constant 3 : index
    %c0_80 = arith.constant 0 : index
    %c0_81 = arith.constant 0 : index
    %94 = vector.load %arg5[%c3, %c0_80, %c0_81] : memref<4x32x8xbf16, #tpu.memory_space<vmem>>, vector<1x32x8xbf16>
    %95 = vector.shape_cast %94 : vector<1x32x8xbf16> to vector<32x8xbf16>
    %cst_82 = arith.constant dense<0.000000e+00> : vector<8x8xf32>
    %96 = tpu.matmul %30, %95, %cst_82 {dimension_numbers = #tpu.dot_dimension_numbers<[1], [0], [0], [1], [0, 0, 1, 1], [], []>} : vector<8x32xbf16>, vector<32x8xbf16>, vector<8x8xf32> -> vector<8x8xf32>
    %97 = arith.truncf %96 : vector<8x8xf32> to vector<8x8xbf16>
    %c0_83 = arith.constant 0 : index
    %c3_84 = arith.constant 3 : index
    %c0_85 = arith.constant 0 : index
    %c0_86 = arith.constant 0 : index
    %98 = vector.load %arg8[%c0_83, %c3_84, %c0_85, %c0_86] : memref<1x4x8x8xbf16, #tpu.memory_space<vmem>>, vector<1x1x8x8xbf16>
    %99 = vector.shape_cast %98 : vector<1x1x8x8xbf16> to vector<8x8xbf16>
    %100 = vector.shape_cast %97 : vector<8x8xbf16> to vector<1x1x8x8xbf16>
    tpu.vector_store %arg8[%c0_83, %c3_84, %c0_85, %c0_86], %100 {strides = array<i32>} : memref<1x4x8x8xbf16, #tpu.memory_space<vmem>>, vector<1x1x8x8xbf16>,
    %c3_87 = arith.constant 3 : index
    %c0_88 = arith.constant 0 : index
    %c0_89 = arith.constant 0 : index
    %101 = vector.load %arg6[%c3_87, %c0_88, %c0_89] : memref<4x32x8xbf16, #tpu.memory_space<vmem>>, vector<1x32x8xbf16>
    %102 = vector.shape_cast %101 : vector<1x32x8xbf16> to vector<32x8xbf16>
    %cst_90 = arith.constant dense<0.000000e+00> : vector<8x8xf32>
    %103 = tpu.matmul %30, %102, %cst_90 {dimension_numbers = #tpu.dot_dimension_numbers<[1], [0], [0], [1], [0, 0, 1, 1], [], []>} : vector<8x32xbf16>, vector<32x8xbf16>, vector<8x8xf32> -> vector<8x8xf32>
    %104 = arith.truncf %103 : vector<8x8xf32> to vector<8x8xbf16>
    %c0_91 = arith.constant 0 : index
    %c3_92 = arith.constant 3 : index
    %c0_93 = arith.constant 0 : index
    %c0_94 = arith.constant 0 : index
    %105 = vector.load %arg9[%c0_91, %c3_92, %c0_93, %c0_94] : memref<1x4x8x8xbf16, #tpu.memory_space<vmem>>, vector<1x1x8x8xbf16>
    %106 = vector.shape_cast %105 : vector<1x1x8x8xbf16> to vector<8x8xbf16>
    %107 = vector.shape_cast %104 : vector<8x8xbf16> to vector<1x1x8x8xbf16>
    tpu.vector_store %arg9[%c0_91, %c3_92, %c0_93, %c0_94], %107 {strides = array<i32>} : memref<1x4x8x8xbf16, #tpu.memory_space<vmem>>, vector<1x1x8x8xbf16>,
    %c3_95 = arith.constant 3 : index
    %c0_96 = arith.constant 0 : index
    %c0_97 = arith.constant 0 : index
    %108 = vector.load %arg7[%c3_95, %c0_96, %c0_97] : memref<4x32x8xbf16, #tpu.memory_space<vmem>>, vector<1x32x8xbf16>
    %109 = vector.shape_cast %108 : vector<1x32x8xbf16> to vector<32x8xbf16>
    %cst_98 = arith.constant dense<0.000000e+00> : vector<8x8xf32>
    %110 = tpu.matmul %30, %109, %cst_98 {dimension_numbers = #tpu.dot_dimension_numbers<[1], [0], [0], [1], [0, 0, 1, 1], [], []>} : vector<8x32xbf16>, vector<32x8xbf16>, vector<8x8xf32> -> vector<8x8xf32>
    %111 = arith.truncf %110 : vector<8x8xf32> to vector<8x8xbf16>
    %c0_99 = arith.constant 0 : index
    %c3_100 = arith.constant 3 : index
    %c0_101 = arith.constant 0 : index
    %c0_102 = arith.constant 0 : index
    %112 = vector.load %arg10[%c0_99, %c3_100, %c0_101, %c0_102] : memref<1x4x8x8xbf16, #tpu.memory_space<vmem>>, vector<1x1x8x8xbf16>
    %113 = vector.shape_cast %112 : vector<1x1x8x8xbf16> to vector<8x8xbf16>
    %114 = vector.shape_cast %111 : vector<8x8xbf16> to vector<1x1x8x8xbf16>
    tpu.vector_store %arg10[%c0_99, %c3_100, %c0_101, %c0_102], %114 {strides = array<i32>} : memref<1x4x8x8xbf16, #tpu.memory_space<vmem>>, vector<1x1x8x8xbf16>,
    return
  }
  func.func @transform_0(%arg0: i32, %arg1: i32) -> (i32, i32, i32) {
    %c0_i32 = arith.constant 0 : i32
    %c0_i32_0 = arith.constant 0 : i32
    return %arg0, %arg1, %c0_i32 : i32, i32, i32
  }
  func.func @transform_1(%arg0: i32, %arg1: i32) -> (i32, i32) {
    %c0_i32 = arith.constant 0 : i32
    %c0_i32_0 = arith.constant 0 : i32
    %c0_i32_1 = arith.constant 0 : i32
    return %c0_i32, %c0_i32_0 : i32, i32
  }
  func.func @transform_2(%arg0: i32, %arg1: i32) -> (i32, i32) {
    %c0_i32 = arith.constant 0 : i32
    %c0_i32_0 = arith.constant 0 : i32
    %c0_i32_1 = arith.constant 0 : i32
    return %c0_i32, %c0_i32_0 : i32, i32
  }
  func.func @transform_3(%arg0: i32, %arg1: i32) -> (i32, i32, i32) {
    %c0_i32 = arith.constant 0 : i32
    %c0_i32_0 = arith.constant 0 : i32
    %c0_i32_1 = arith.constant 0 : i32
    %c0_i32_2 = arith.constant 0 : i32
    return %c0_i32, %c0_i32_0, %c0_i32_1 : i32, i32, i32
  }
  func.func @transform_4(%arg0: i32, %arg1: i32) -> (i32, i32, i32) {
    %c0_i32 = arith.constant 0 : i32
    %c0_i32_0 = arith.constant 0 : i32
    %c0_i32_1 = arith.constant 0 : i32
    %c0_i32_2 = arith.constant 0 : i32
    return %c0_i32, %c0_i32_0, %c0_i32_1 : i32, i32, i32
  }
  func.func @transform_5(%arg0: i32, %arg1: i32) -> (i32, i32, i32) {
    %c0_i32 = arith.constant 0 : i32
    %c0_i32_0 = arith.constant 0 : i32
    %c0_i32_1 = arith.constant 0 : i32
    %c0_i32_2 = arith.constant 0 : i32
    return %c0_i32, %c0_i32_0, %c0_i32_1 : i32, i32, i32
  }
  func.func @transform_6(%arg0: i32, %arg1: i32) -> (i32, i32, i32, i32) {
    %c0_i32 = arith.constant 0 : i32
    %c0_i32_0 = arith.constant 0 : i32
    %c0_i32_1 = arith.constant 0 : i32
    return %arg0, %c0_i32, %arg1, %c0_i32_0 : i32, i32, i32, i32
  }
  func.func @transform_7(%arg0: i32, %arg1: i32) -> (i32, i32, i32, i32) {
    %c0_i32 = arith.constant 0 : i32
    %c0_i32_0 = arith.constant 0 : i32
    %c0_i32_1 = arith.constant 0 : i32
    return %arg0, %c0_i32, %arg1, %c0_i32_0 : i32, i32, i32, i32
  }
  func.func @transform_8(%arg0: i32, %arg1: i32) -> (i32, i32, i32, i32) {
    %c0_i32 = arith.constant 0 : i32
    %c0_i32_0 = arith.constant 0 : i32
    %c0_i32_1 = arith.constant 0 : i32
    return %arg0, %c0_i32, %arg1, %c0_i32_0 : i32, i32, i32, i32
  }
}

</mosaic_0001>

<llo_original>
// kernel: tpu_custom_call.1
$region0: #{tpu_custom_call.1}
  #allocation0 [shape = 'u32[]', space=smem, size = 0x4, offset = 0x4, fixed_abs, tag = 'smem constant byte address 0x4 - core index']
  #allocation1 [shape = 'u32[144,128]{1,0:T(1,128)}', space=vmem, size = 0x12000, scoped, tag = 'internal scratch']
  %s0 = inlined_call_operand.vmem [shape: f32[2,8,32], index: 0, kind: input, shape index: {}]
  %s1 = inlined_call_operand.vmem [shape: f32[1,32], index: 1, kind: input, shape index: {}]
  %s2 = inlined_call_operand.vmem [shape: f32[1,32], index: 2, kind: input, shape index: {}]
  %s3 = inlined_call_operand.vmem [shape: bf16[4,32,8], index: 3, kind: input, shape index: {}]
  %s4 = inlined_call_operand.vmem [shape: bf16[4,32,8], index: 4, kind: input, shape index: {}]
  %s5 = inlined_call_operand.vmem [shape: bf16[4,32,8], index: 5, kind: input, shape index: {}]
  %s6 = inlined_call_operand.hbm [shape: bf16[2,4,8,8], index: 6, kind: output, shape index: {0}]
  %s7 = inlined_call_operand.hbm [shape: bf16[2,4,8,8], index: 7, kind: output, shape index: {1}]
  %s8 = inlined_call_operand.hbm [shape: bf16[2,4,8,8], index: 8, kind: output, shape index: {2}]
  %9 = xla_tuple %s6, %s7, %s8
  %s10 = sld [smem:[#allocation0]]
  $region73: #{tpu_custom_call.1} parent=0
    _
  %s12 = ssub.s32 1, %s10
  %s13 = scalar_select 0, %s12, %s10
  $region1: #{tpu_custom_call.1} parent=0
    #allocation2 [shape = 'u8[16384]{0}', space=vmem, size = 0x4000, scoped, tag = 'output window, operand 0']
    #allocation3 [shape = 's32[2]{0}', space=sflag, size = 0x8, scoped, tag = 'scoped memory for tpu_custom_call.1']
    #allocation4 [shape = 'u8[16384]{0}', space=vmem, size = 0x4000, scoped, tag = 'output window, operand 1']
    #allocation5 [shape = 's32[2]{0}', space=sflag, size = 0x8, scoped, tag = 'scoped memory for tpu_custom_call.1']
    #allocation6 [shape = 'u8[16384]{0}', space=vmem, size = 0x4000, scoped, tag = 'output window, operand 2']
    %14 = vsyncpa [#allocation3], 0
    %s15 = scalar_lea.sflag [#allocation3], 1
    %16 = vsyncpa %s15, 0
    %17 = vsyncpa [#allocation5], 0
    %s18 = scalar_lea.sflag [#allocation5], 1
    %19 = vsyncpa %s18, 0
    loop: start=0, step=1, limit=4
    $region2: #{tpu_custom_call.1} parent=1 // loop_pre_header
      _
    $region3: #{tpu_custom_call.1} parent=1 // loop_header
      %s21 = sphi 0, %s25
      %p22 = scmp.ge.s32.totalorder %s21, 4
      %s28 = sphi 0, %s40
      %s29 = sphi 0, %s36
      %s30 = sphi 0, %s28
      %s31 = sphi 0, %s29
      %s32 = sphi 0, %s30
      %s33 = sphi 0, %s31
      %s45 = sphi 0, %s47
      %s48 = sphi 0, %s45
      %s49 = sphi 0, %s48
      %s65 = sphi 0, %s49
      %s69 = sphi 0, %s69
      %s71 = sphi 0, %s69
      %s72 = sphi 0, %s71
      %s86 = sphi 0, %s72
      %s90 = sphi 0, %s90
      %s92 = sphi 0, %s90
      %s93 = sphi 0, %s92
      %s107 = sphi 0, %s93
      %s111 = sphi 0, %s111
      %s113 = sphi 0, %s111
      %s114 = sphi 0, %s113
      %s128 = sphi 0, %s114
      %s132 = sphi 0, %s132
      %s134 = sphi 0, %s132
      %s135 = sphi 0, %s134
      %s149 = sphi 0, %s135
      %s153 = sphi 0, %s153
      %s155 = sphi 0, %s153
      %s156 = sphi 0, %s155
      %s170 = sphi 0, %s156
      %s178 = sphi 0, %s180
      %s181 = sphi 0, %s178
      %s182 = sphi 0, %s181
      %s198 = sphi 0, %s182
      %s206 = sphi 0, %s208
      %s209 = sphi 0, %s206
      %s210 = sphi 0, %s209
      %s226 = sphi 0, %s210
      %s234 = sphi 0, %s236
      %s237 = sphi 0, %s234
      %s238 = sphi 0, %s237
      %s254 = sphi 0, %s238
    $region4: #{tpu_custom_call.1} parent=1 // loop_header_branch
      %24 = sbr.rel (%p22) target = $region8
    $region5: #{tpu_custom_call.1} parent=1 // loop_body
      %s26 = ssub.s32 %s21, 1
      %s27 = ssub.s32 %s21, 2
      %s34 = sadd.s32 1, %s29
      %p35 = scmp.ge.s32.totalorder %s34, 1
      %s36 = scalar_select %p35, 0, %s34
      %s37 = sadd.s32 1, %s28
      %s38 = scalar_select %p35, %s37, %s28
      %p39 = scmp.ge.s32.totalorder %s38, 2
      %s40 = scalar_select %p39, 0, %s38
      %s41 = ssub.s32 %s28, %s40
      %s42 = ssub.s32 %s29, %s36
      %s43 = sor.u32 %s41, %s42
      %p44 = scmp.eq.s32.totalorder %s43, 0
      %s46 = sadd.s32 %s45, 1
      %s47 = scalar_select %p44, %s45, %s46
      %p50 = pneg %p44
      %p51 = scmp.eq.s32.totalorder %s21, 1
      %p52 = por %p50, %p51
      %p53 = scmp.ne.s32.totalorder %s45, %s48
      %p54 = scmp.eq.s32.totalorder %s21, 0
      %p55 = por %p53, %p54
      %p56 = scmp.ne.s32.totalorder %s45, %s48
      %p57 = scmp.eq.s32.totalorder %s26, 1
      %p58 = por %p56, %p57
      %p59 = scmp.ne.s32.totalorder %s48, %s49
      %p60 = scmp.eq.s32.totalorder %s26, 0
      %p61 = por %p59, %p60
      %p62 = scmp.ne.s32.totalorder %s48, %s49
      %p63 = scmp.eq.s32.totalorder %s27, 1
      %p64 = por %p62, %p63
      %p66 = scmp.ne.s32.totalorder %s49, %s65
      %p67 = scmp.eq.s32.totalorder %s27, 0
      %p68 = por %p66, %p67
      %s70 = sadd.s32 %s69, 1
      %p73 = scmp.eq.s32.totalorder %s21, 1
      %p74 = scmp.ne.s32.totalorder %s69, %s71
      %p75 = scmp.eq.s32.totalorder %s21, 0
      %p76 = por %p74, %p75
      %p77 = scmp.ne.s32.totalorder %s69, %s71
      %p78 = scmp.eq.s32.totalorder %s26, 1
      %p79 = por %p77, %p78
      %p80 = scmp.ne.s32.totalorder %s71, %s72
      %p81 = scmp.eq.s32.totalorder %s26, 0
      %p82 = por %p80, %p81
      %p83 = scmp.ne.s32.totalorder %s71, %s72
      %p84 = scmp.eq.s32.totalorder %s27, 1
      %p85 = por %p83, %p84
      %p87 = scmp.ne.s32.totalorder %s72, %s86
      %p88 = scmp.eq.s32.totalorder %s27, 0
      %p89 = por %p87, %p88
      %s91 = sadd.s32 %s90, 1
      %p94 = scmp.eq.s32.totalorder %s21, 1
      %p95 = scmp.ne.s32.totalorder %s90, %s92
      %p96 = scmp.eq.s32.totalorder %s21, 0
      %p97 = por %p95, %p96
      %p98 = scmp.ne.s32.totalorder %s90, %s92
      %p99 = scmp.eq.s32.totalorder %s26, 1
      %p100 = por %p98, %p99
      %p101 = scmp.ne.s32.totalorder %s92, %s93
      %p102 = scmp.eq.s32.totalorder %s26, 0
      %p103 = por %p101, %p102
      %p104 = scmp.ne.s32.totalorder %s92, %s93
      %p105 = scmp.eq.s32.totalorder %s27, 1
      %p106 = por %p104, %p105
      %p108 = scmp.ne.s32.totalorder %s93, %s107
      %p109 = scmp.eq.s32.totalorder %s27, 0
      %p110 = por %p108, %p109
      %s112 = sadd.s32 %s111, 1
      %p115 = scmp.eq.s32.totalorder %s21, 1
      %p116 = scmp.ne.s32.totalorder %s111, %s113
      %p117 = scmp.eq.s32.totalorder %s21, 0
      %p118 = por %p116, %p117
      %p119 = scmp.ne.s32.totalorder %s111, %s113
      %p120 = scmp.eq.s32.totalorder %s26, 1
      %p121 = por %p119, %p120
      %p122 = scmp.ne.s32.totalorder %s113, %s114
      %p123 = scmp.eq.s32.totalorder %s26, 0
      %p124 = por %p122, %p123
      %p125 = scmp.ne.s32.totalorder %s113, %s114
      %p126 = scmp.eq.s32.totalorder %s27, 1
      %p127 = por %p125, %p126
      %p129 = scmp.ne.s32.totalorder %s114, %s128
      %p130 = scmp.eq.s32.totalorder %s27, 0
      %p131 = por %p129, %p130
      %s133 = sadd.s32 %s132, 1
      %p136 = scmp.eq.s32.totalorder %s21, 1
      %p137 = scmp.ne.s32.totalorder %s132, %s134
      %p138 = scmp.eq.s32.totalorder %s21, 0
      %p139 = por %p137, %p138
      %p140 = scmp.ne.s32.totalorder %s132, %s134
      %p141 = scmp.eq.s32.totalorder %s26, 1
      %p142 = por %p140, %p141
      %p143 = scmp.ne.s32.totalorder %s134, %s135
      %p144 = scmp.eq.s32.totalorder %s26, 0
      %p145 = por %p143, %p144
      %p146 = scmp.ne.s32.totalorder %s134, %s135
      %p147 = scmp.eq.s32.totalorder %s27, 1
      %p148 = por %p146, %p147
      %p150 = scmp.ne.s32.totalorder %s135, %s149
      %p151 = scmp.eq.s32.totalorder %s27, 0
      %p152 = por %p150, %p151
      %s154 = sadd.s32 %s153, 1
      %p157 = scmp.eq.s32.totalorder %s21, 1
      %p158 = scmp.ne.s32.totalorder %s153, %s155
      %p159 = scmp.eq.s32.totalorder %s21, 0
      %p160 = por %p158, %p159
      %p161 = scmp.ne.s32.totalorder %s153, %s155
      %p162 = scmp.eq.s32.totalorder %s26, 1
      %p163 = por %p161, %p162
      %p164 = scmp.ne.s32.totalorder %s155, %s156
      %p165 = scmp.eq.s32.totalorder %s26, 0
      %p166 = por %p164, %p165
      %p167 = scmp.ne.s32.totalorder %s155, %s156
      %p168 = scmp.eq.s32.totalorder %s27, 1
      %p169 = por %p167, %p168
      %p171 = scmp.ne.s32.totalorder %s156, %s170
      %p172 = scmp.eq.s32.totalorder %s27, 0
      %p173 = por %p171, %p172
      %s174 = ssub.s32 %s28, %s40
      %s175 = ssub.s32 %s29, %s36
      %s176 = sor.u32 %s174, %s175
      %p177 = scmp.eq.s32.totalorder %s176, 0
      %s179 = sadd.s32 %s178, 1
      %s180 = scalar_select %p177, %s178, %s179
      %p183 = pneg %p177
      %p184 = scmp.eq.s32.totalorder %s21, 1
      %p185 = por %p183, %p184
      %p186 = scmp.ne.s32.totalorder %s178, %s181
      %p187 = scmp.eq.s32.totalorder %s21, 0
      %p188 = por %p186, %p187
      %p189 = scmp.ne.s32.totalorder %s178, %s181
      %p190 = scmp.eq.s32.totalorder %s26, 1
      %p191 = por %p189, %p190
      %p192 = scmp.ne.s32.totalorder %s181, %s182
      %p193 = scmp.eq.s32.totalorder %s26, 0
      %p194 = por %p192, %p193
      %p195 = scmp.ne.s32.totalorder %s181, %s182
      %p196 = scmp.eq.s32.totalorder %s27, 1
      %p197 = por %p195, %p196
      %p199 = scmp.ne.s32.totalorder %s182, %s198
      %p200 = scmp.eq.s32.totalorder %s27, 0
      %p201 = por %p199, %p200
      %s202 = ssub.s32 %s28, %s40
      %s203 = ssub.s32 %s29, %s36
      %s204 = sor.u32 %s202, %s203
      %p205 = scmp.eq.s32.totalorder %s204, 0
      %s207 = sadd.s32 %s206, 1
      %s208 = scalar_select %p205, %s206, %s207
      %p211 = pneg %p205
      %p212 = scmp.eq.s32.totalorder %s21, 1
      %p213 = por %p211, %p212
      %p214 = scmp.ne.s32.totalorder %s206, %s209
      %p215 = scmp.eq.s32.totalorder %s21, 0
      %p216 = por %p214, %p215
      %p217 = scmp.ne.s32.totalorder %s206, %s209
      %p218 = scmp.eq.s32.totalorder %s26, 1
      %p219 = por %p217, %p218
      %p220 = scmp.ne.s32.totalorder %s209, %s210
      %p221 = scmp.eq.s32.totalorder %s26, 0
      %p222 = por %p220, %p221
      %p223 = scmp.ne.s32.totalorder %s209, %s210
      %p224 = scmp.eq.s32.totalorder %s27, 1
      %p225 = por %p223, %p224
      %p227 = scmp.ne.s32.totalorder %s210, %s226
      %p228 = scmp.eq.s32.totalorder %s27, 0
      %p229 = por %p227, %p228
      %s230 = ssub.s32 %s28, %s40
      %s231 = ssub.s32 %s29, %s36
      %s232 = sor.u32 %s230, %s231
      %p233 = scmp.eq.s32.totalorder %s232, 0
      %s235 = sadd.s32 %s234, 1
      %s236 = scalar_select %p233, %s234, %s235
      %p239 = pneg %p233
      %p240 = scmp.eq.s32.totalorder %s21, 1
      %p241 = por %p239, %p240
      %p242 = scmp.ne.s32.totalorder %s234, %s237
      %p243 = scmp.eq.s32.totalorder %s21, 0
      %p244 = por %p242, %p243
      %p245 = scmp.ne.s32.totalorder %s234, %s237
      %p246 = scmp.eq.s32.totalorder %s26, 1
      %p247 = por %p245, %p246
      %p248 = scmp.ne.s32.totalorder %s237, %s238
      %p249 = scmp.eq.s32.totalorder %s26, 0
      %p250 = por %p248, %p249
      %p251 = scmp.ne.s32.totalorder %s237, %s238
      %p252 = scmp.eq.s32.totalorder %s27, 1
      %p253 = por %p251, %p252
      %p255 = scmp.ne.s32.totalorder %s238, %s254
      %p256 = scmp.eq.s32.totalorder %s27, 0
      %p257 = por %p255, %p256
      %p258 = scmp.le.s32.totalorder 1, %s21
      %p259 = scmp.lt.s32.totalorder %s21, 3
      %p260 = pnand %p258, %p259
      %p261 = pneg %p260
      // Predicated region
      $region9: #{tpu_custom_call.1} parent=5 // pred_check
        _
      $region10: #{tpu_custom_call.1} parent=5 // pred_check_branch
        %263 = sbr.rel (%p260) target = $region12
      $region11: #{tpu_custom_call.1} parent=5 // pred_region
        %s264 = ssub.s32 %s21, 1
        // Predicated region
        $region13: #{tpu_custom_call.1} parent=11 // pred_check
          %p265 = pneg %p82
        $region14: #{tpu_custom_call.1} parent=11 // pred_check_branch
          %267 = sbr.rel (%p265) target = $region16
        $region15: #{tpu_custom_call.1} parent=11 // pred_region
          _
        $region16: #{tpu_custom_call.1} parent=11 // pred_fallthru
          _
        // Predicated region
        $region17: #{tpu_custom_call.1} parent=11 // pred_check
          %p268 = pneg %p103
        $region18: #{tpu_custom_call.1} parent=11 // pred_check_branch
          %270 = sbr.rel (%p268) target = $region20
        $region19: #{tpu_custom_call.1} parent=11 // pred_region
          _
        $region20: #{tpu_custom_call.1} parent=11 // pred_fallthru
          _
        // Predicated region
        $region21: #{tpu_custom_call.1} parent=11 // pred_check
          %p271 = pneg %p124
        $region22: #{tpu_custom_call.1} parent=11 // pred_check_branch
          %273 = sbr.rel (%p271) target = $region24
        $region23: #{tpu_custom_call.1} parent=11 // pred_region
          _
        $region24: #{tpu_custom_call.1} parent=11 // pred_fallthru
          _
        // Predicated region
        $region25: #{tpu_custom_call.1} parent=11 // pred_check
          %p274 = pneg %p145
        $region26: #{tpu_custom_call.1} parent=11 // pred_check_branch
          %276 = sbr.rel (%p274) target = $region28
        $region27: #{tpu_custom_call.1} parent=11 // pred_region
          _
        $region28: #{tpu_custom_call.1} parent=11 // pred_fallthru
          _
        // Predicated region
        $region29: #{tpu_custom_call.1} parent=11 // pred_check
          %p277 = pneg %p166
        $region30: #{tpu_custom_call.1} parent=11 // pred_check_branch
          %279 = sbr.rel (%p277) target = $region32
        $region31: #{tpu_custom_call.1} parent=11 // pred_region
          _
        $region32: #{tpu_custom_call.1} parent=11 // pred_fallthru
          _
      $region12: #{tpu_custom_call.1} parent=5 // pred_fallthru
        _
      %p280 = scmp.lt.s32.totalorder %s21, 2
      // Predicated region
      $region33: #{tpu_custom_call.1} parent=5 // pred_check
        %p281 = pneg %p280
      $region34: #{tpu_custom_call.1} parent=5 // pred_check_branch
        %283 = sbr.rel (%p281) target = $region36
      $region35: #{tpu_custom_call.1} parent=5 // pred_region
        // Predicated region
        $region37: #{tpu_custom_call.1} parent=35 // pred_check
          %p284 = pneg %p55
        $region38: #{tpu_custom_call.1} parent=35 // pred_check_branch
          %286 = sbr.rel (%p284) target = $region40
        $region39: #{tpu_custom_call.1} parent=35 // pred_region
          %p287 = scmp.lt.s32.totalorder %s28, 1
          %s288 = scalar_select %p287, %s28, 1
          %p289 = scmp.lt.s32.totalorder %s29, 0
          %s290 = scalar_select %p289, %s29, 0
          %s291 = sadd.s32 %s290, %s288
          %s292 = smul.addr %s291, 8
          %s293 = scalar_lea.vmem %s0, %s292
        $region40: #{tpu_custom_call.1} parent=35 // pred_fallthru
          _
      $region36: #{tpu_custom_call.1} parent=5 // pred_fallthru
        _
      %p294 = scmp.le.s32.totalorder 1, %s21
      %p295 = scmp.lt.s32.totalorder %s21, 3
      %p296 = pnand %p294, %p295
      %p297 = pneg %p296
      // Predicated region
      $region41: #{tpu_custom_call.1} parent=5 // pred_check
        _
      $region42: #{tpu_custom_call.1} parent=5 // pred_check_branch
        %299 = sbr.rel (%p296) target = $region44
      $region43: #{tpu_custom_call.1} parent=5 // pred_region
        %s300 = ssub.s32 %s21, 1
        %p301 = scmp.lt.s32.totalorder %s30, 1
        %s302 = scalar_select %p301, %s30, 1
        %p303 = scmp.lt.s32.totalorder %s31, 0
        %s304 = scalar_select %p303, %s31, 0
        %s305 = sadd.s32 %s304, %s302
        %s306 = smul.addr %s305, 8
        %s307 = scalar_lea.vmem %s0, %s306
        %p308 = pneg %p61
        %p309 = pneg %p58
        %p310 = pneg %p82
        %p311 = pneg %p79
        %p312 = pneg %p103
        %p313 = pneg %p100
        %p314 = pneg %p124
        %p315 = pneg %p121
        %p316 = pneg %p145
        %p317 = pneg %p142
        %p318 = pneg %p166
        %p319 = pneg %p163
        %p320 = pneg %p194
        %p321 = pneg %p191
        %s322 = sand.u32 %s181, 1
        %s323 = scalar_lea.sflag [#allocation3], %s322
        %s324 = sand.u32 %s181, 1
        %s325 = smul.addr %s324, 16
        %s326 = scalar_lea.vmem [#allocation2], %s325
        %p327 = pneg %p222
        %p328 = pneg %p219
        %s329 = sand.u32 %s26, 1
        %s330 = scalar_lea.sflag [#allocation5], %s329
        %s331 = sand.u32 %s209, 1
        %s332 = smul.addr %s331, 16
        %s333 = scalar_lea.vmem [#allocation4], %s332
        %p334 = pneg %p250
        %p335 = pneg %p247
        %s336 = sand.u32 %s26, 1
        %s337 = scalar_lea.sflag [#allocation5], %s336
        %s338 = sand.u32 %s237, 1
        %s339 = smul.addr %s338, 16
        %s340 = scalar_lea.vmem [#allocation6], %s339
        %p341 = scmp.lt.s32.totalorder %s30, 1
        %s342 = scalar_select %p341, %s30, 1
        %p343 = scmp.lt.s32.totalorder %s31, 0
        %s344 = scalar_select %p343, %s31, 0
        %s345 = sadd.s32 %s344, %s342
        %s346 = smul.addr %s345, 8
        %s347 = scalar_lea.vmem %s0, %s346
        %v349 = vld [vmem:[%s347] sm:$0xff]
        %v350 = vld [vmem:[%s1] sm:$0x1]
        %v351 = vld [vmem:[%s2] sm:$0x1]
        %vm352 = vcmask 261120
        %v353 = vsel %vm352, %v349, 0.0
        %354 = vadd.xlane.f32.xlu0 %v353
        %v355 = vpop.xlane.xlu0 %354
        %v356 = vrcp.pop 32.0
        %v357 = vmul.f32 %v355, %v356
        %v358 = vsub.f32 %v349, %v357
        %v359 = vmul.f32 %v358, %v358
        %v360 = vsel %vm352, %v359, 0.0
        %361 = vadd.xlane.f32.xlu0 %v360
        %v362 = vpop.xlane.xlu0 %361
        %v363 = vmul.f32 %v362, %v356
        %v364 = vadd.f32 %v363, 1e-05
        %v365 = vrsqrt.pop %v364
        %v366 = vmul.f32 %v358, %v365
        %v368 = vlaneseq
        %v369 = vshrl.u32 %v368, 7
        %v370 = vsub.s32 0, %v369
        %v371 = vrot.slane %v350, %v370
        %v373 = vmul.f32 %v366, %v371
        %v375 = vlaneseq
        %v376 = vshrl.u32 %v375, 7
        %v377 = vsub.s32 0, %v376
        %v378 = vrot.slane %v351, %v377
        %v380 = vadd.f32 %v373, %v378
        %v381 = vpack.c.bf16 %v380, %v380
        %v382 = vld [vmem:[%s3] sm:$0xf]
        %v383 = vld [vmem:[%s3 + $0x4] sm:$0xf]
        %v384 = vld [vmem:[%s3 + $0x8] sm:$0xf]
        %v385 = vld [vmem:[%s3 + $0xc] sm:$0xf]
        %v390 = vunpack.c.l.b16 %v382
        %v391 = vunpack.c.l.b16 %v383
        %v392 = vunpack.c.l.b16 %v384
        %v393 = vunpack.c.l.b16 %v385
        %v394 = vpack.c.b16 %v391, %v390
        %v395 = vpack.c.b16 %v393, %v392
        %v399 = vsel %vm352, %v381, 0
        %401 = vmatprep.subr.bf16.mxu0 0
        %402 = vmatpush1.bf16.msra.mxu0 %v394
        %403 = vmatprep.subr.bf16.mxu0 0
        %404 = vmatpush1.bf16.msra.mxu0 %v395
        %405 = vmatprep.subr.bf16.mxu0 0
        %406 = vmatpush1.bf16.msra.mxu0 0
        %407 = vmatprep.subr.bf16.mxu0 0
        %408 = vmatpush1.bf16.msra.mxu0 0
        %409 = vmatprep.subr.bf16.mxu0 0
        %410 = vmatpush1.bf16.msra.mxu0 0
        %411 = vmatprep.subr.bf16.mxu0 0
        %412 = vmatpush1.bf16.msra.mxu0 0
        %413 = vmatprep.subr.bf16.mxu0 0
        %414 = vmatpush1.bf16.msra.mxu0 0
        %415 = vmatprep.subr.bf16.mxu0 0
        %416 = vmatpush1.bf16.msra.mxu0 0
        %417 = vmatprep.subr.bf16.mxu0 0
        %418 = vmatpush1.bf16.msra.mxu0 0
        %419 = vmatprep.subr.bf16.mxu0 0
        %420 = vmatpush1.bf16.msra.mxu0 0
        %421 = vmatprep.subr.bf16.mxu0 0
        %422 = vmatpush1.bf16.msra.mxu0 0
        %423 = vmatprep.subr.bf16.mxu0 0
        %424 = vmatpush1.bf16.msra.mxu0 0
        %425 = vmatprep.subr.bf16.mxu0 0
        %426 = vmatpush1.bf16.msra.mxu0 0
        %427 = vmatprep.subr.bf16.mxu0 0
        %428 = vmatpush1.bf16.msra.mxu0 0
        %429 = vmatprep.subr.bf16.mxu0 0
        %430 = vmatpush1.bf16.msra.mxu0 0
        %431 = vmatprep.subr.bf16.mxu0 0
        %432 = vmatpush1.bf16.msra.mxu0 0
        %433 = vmatprep.mubr.bf16.mxu0 0
        %434 = vmatmul.mubr.bf16.gmra.mrb[0].mxu0 %v399
        %v435 = vpop.f32.mrb[0].mxu0
        %v436 = vadd.f32 0.0, %v435
        %v437 = vpop.f32.mrb[0].mxu0
        %v438 = vpop.f32.mrb[0].mxu0
        %v439 = vpop.f32.mrb[0].mxu0
        %440 = vdwg.mxu0
        %v441 = vpack.c.bf16 %v436, %v436
        %vm442 = vcmask 60416
        %443 = vst.msk [vmem:[%s326] sm:$0xf] %vm442, %v441
        %v444 = vld [vmem:[%s4] sm:$0xf]
        %v445 = vld [vmem:[%s4 + $0x4] sm:$0xf]
        %v446 = vld [vmem:[%s4 + $0x8] sm:$0xf]
        %v447 = vld [vmem:[%s4 + $0xc] sm:$0xf]
        %v452 = vunpack.c.l.b16 %v444
        %v453 = vunpack.c.l.b16 %v445
        %v454 = vunpack.c.l.b16 %v446
        %v455 = vunpack.c.l.b16 %v447
        %v456 = vpack.c.b16 %v453, %v452
        %v457 = vpack.c.b16 %v455, %v454
        %460 = vmatprep.subr.bf16.mxu0 0
        %461 = vmatpush1.bf16.msra.mxu0 %v456
        %462 = vmatprep.subr.bf16.mxu0 0
        %463 = vmatpush1.bf16.msra.mxu0 %v457
        %464 = vmatprep.subr.bf16.mxu0 0
        %465 = vmatpush1.bf16.msra.mxu0 0
        %466 = vmatprep.subr.bf16.mxu0 0
        %467 = vmatpush1.bf16.msra.mxu0 0
        %468 = vmatprep.subr.bf16.mxu0 0
        %469 = vmatpush1.bf16.msra.mxu0 0
        %470 = vmatprep.subr.bf16.mxu0 0
        %471 = vmatpush1.bf16.msra.mxu0 0
        %472 = vmatprep.subr.bf16.mxu0 0
        %473 = vmatpush1.bf16.msra.mxu0 0
        %474 = vmatprep.subr.bf16.mxu0 0
        %475 = vmatpush1.bf16.msra.mxu0 0
        %476 = vmatprep.subr.bf16.mxu0 0
        %477 = vmatpush1.bf16.msra.mxu0 0
        %478 = vmatprep.subr.bf16.mxu0 0
        %479 = vmatpush1.bf16.msra.mxu0 0
        %480 = vmatprep.subr.bf16.mxu0 0
        %481 = vmatpush1.bf16.msra.mxu0 0
        %482 = vmatprep.subr.bf16.mxu0 0
        %483 = vmatpush1.bf16.msra.mxu0 0
        %484 = vmatprep.subr.bf16.mxu0 0
        %485 = vmatpush1.bf16.msra.mxu0 0
        %486 = vmatprep.subr.bf16.mxu0 0
        %487 = vmatpush1.bf16.msra.mxu0 0
        %488 = vmatprep.subr.bf16.mxu0 0
        %489 = vmatpush1.bf16.msra.mxu0 0
        %490 = vmatprep.subr.bf16.mxu0 0
        %491 = vmatpush1.bf16.msra.mxu0 0
        %492 = vmatprep.mubr.bf16.mxu0 0
        %493 = vmatmul.mubr.bf16.gmra.mrb[0].mxu0 %v399
        %v494 = vpop.f32.mrb[0].mxu0
        %v495 = vadd.f32 0.0, %v494
        %v496 = vpop.f32.mrb[0].mxu0
        %v497 = vpop.f32.mrb[0].mxu0
        %v498 = vpop.f32.mrb[0].mxu0
        %499 = vdwg.mxu0
        %v500 = vpack.c.bf16 %v495, %v495
        %501 = vst.msk [vmem:[%s333] sm:$0xf] %vm442, %v500
        %v502 = vld [vmem:[%s5] sm:$0xf]
        %v503 = vld [vmem:[%s5 + $0x4] sm:$0xf]
        %v504 = vld [vmem:[%s5 + $0x8] sm:$0xf]
        %v505 = vld [vmem:[%s5 + $0xc] sm:$0xf]
        %v510 = vunpack.c.l.b16 %v502
        %v511 = vunpack.c.l.b16 %v503
        %v512 = vunpack.c.l.b16 %v504
        %v513 = vunpack.c.l.b16 %v505
        %v514 = vpack.c.b16 %v511, %v510
        %v515 = vpack.c.b16 %v513, %v512
        %518 = vmatprep.subr.bf16.mxu0 0
        %519 = vmatpush1.bf16.msra.mxu0 %v514
        %520 = vmatprep.subr.bf16.mxu0 0
        %521 = vmatpush1.bf16.msra.mxu0 %v515
        %522 = vmatprep.subr.bf16.mxu0 0
        %523 = vmatpush1.bf16.msra.mxu0 0
        %524 = vmatprep.subr.bf16.mxu0 0
        %525 = vmatpush1.bf16.msra.mxu0 0
        %526 = vmatprep.subr.bf16.mxu0 0
        %527 = vmatpush1.bf16.msra.mxu0 0
        %528 = vmatprep.subr.bf16.mxu0 0
        %529 = vmatpush1.bf16.msra.mxu0 0
        %530 = vmatprep.subr.bf16.mxu0 0
        %531 = vmatpush1.bf16.msra.mxu0 0
        %532 = vmatprep.subr.bf16.mxu0 0
        %533 = vmatpush1.bf16.msra.mxu0 0
        %534 = vmatprep.subr.bf16.mxu0 0
        %535 = vmatpush1.bf16.msra.mxu0 0
        %536 = vmatprep.subr.bf16.mxu0 0
        %537 = vmatpush1.bf16.msra.mxu0 0
        %538 = vmatprep.subr.bf16.mxu0 0
        %539 = vmatpush1.bf16.msra.mxu0 0
        %540 = vmatprep.subr.bf16.mxu0 0
        %541 = vmatpush1.bf16.msra.mxu0 0
        %542 = vmatprep.subr.bf16.mxu0 0
        %543 = vmatpush1.bf16.msra.mxu0 0
        %544 = vmatprep.subr.bf16.mxu0 0
        %545 = vmatpush1.bf16.msra.mxu0 0
        %546 = vmatprep.subr.bf16.mxu0 0
        %547 = vmatpush1.bf16.msra.mxu0 0
        %548 = vmatprep.subr.bf16.mxu0 0
        %549 = vmatpush1.bf16.msra.mxu0 0
        %550 = vmatprep.mubr.bf16.mxu0 0
        %551 = vmatmul.mubr.bf16.gmra.mrb[0].mxu0 %v399
        %v552 = vpop.f32.mrb[0].mxu0
        %v553 = vadd.f32 0.0, %v552
        %v554 = vpop.f32.mrb[0].mxu0
        %v555 = vpop.f32.mrb[0].mxu0
        %v556 = vpop.f32.mrb[0].mxu0
        %557 = vdwg.mxu0
        %v558 = vpack.c.bf16 %v553, %v553
        %559 = vst.msk [vmem:[%s340] sm:$0xf] %vm442, %v558
        %s560 = scalar_lea.vmem %s3, 16
        %v561 = vld [vmem:[%s560] sm:$0xf]
        %v562 = vld [vmem:[%s560 + $0x4] sm:$0xf]
        %v563 = vld [vmem:[%s560 + $0x8] sm:$0xf]
        %v564 = vld [vmem:[%s560 + $0xc] sm:$0xf]
        %v569 = vunpack.c.l.b16 %v561
        %v570 = vunpack.c.l.b16 %v562
        %v571 = vunpack.c.l.b16 %v563
        %v572 = vunpack.c.l.b16 %v564
        %v573 = vpack.c.b16 %v570, %v569
        %v574 = vpack.c.b16 %v572, %v571
        %577 = vmatprep.subr.bf16.mxu0 0
        %578 = vmatpush1.bf16.msra.mxu0 %v573
        %579 = vmatprep.subr.bf16.mxu0 0
        %580 = vmatpush1.bf16.msra.mxu0 %v574
        %581 = vmatprep.subr.bf16.mxu0 0
        %582 = vmatpush1.bf16.msra.mxu0 0
        %583 = vmatprep.subr.bf16.mxu0 0
        %584 = vmatpush1.bf16.msra.mxu0 0
        %585 = vmatprep.subr.bf16.mxu0 0
        %586 = vmatpush1.bf16.msra.mxu0 0
        %587 = vmatprep.subr.bf16.mxu0 0
        %588 = vmatpush1.bf16.msra.mxu0 0
        %589 = vmatprep.subr.bf16.mxu0 0
        %590 = vmatpush1.bf16.msra.mxu0 0
        %591 = vmatprep.subr.bf16.mxu0 0
        %592 = vmatpush1.bf16.msra.mxu0 0
        %593 = vmatprep.subr.bf16.mxu0 0
        %594 = vmatpush1.bf16.msra.mxu0 0
        %595 = vmatprep.subr.bf16.mxu0 0
        %596 = vmatpush1.bf16.msra.mxu0 0
        %597 = vmatprep.subr.bf16.mxu0 0
        %598 = vmatpush1.bf16.msra.mxu0 0
        %599 = vmatprep.subr.bf16.mxu0 0
        %600 = vmatpush1.bf16.msra.mxu0 0
        %601 = vmatprep.subr.bf16.mxu0 0
        %602 = vmatpush1.bf16.msra.mxu0 0
        %603 = vmatprep.subr.bf16.mxu0 0
        %604 = vmatpush1.bf16.msra.mxu0 0
        %605 = vmatprep.subr.bf16.mxu0 0
        %606 = vmatpush1.bf16.msra.mxu0 0
        %607 = vmatprep.subr.bf16.mxu0 0
        %608 = vmatpush1.bf16.msra.mxu0 0
        %609 = vmatprep.mubr.bf16.mxu0 0
        %610 = vmatmul.mubr.bf16.gmra.mrb[0].mxu0 %v399
        %v611 = vpop.f32.mrb[0].mxu0
        %v612 = vadd.f32 0.0, %v611
        %v613 = vpop.f32.mrb[0].mxu0
        %v614 = vpop.f32.mrb[0].mxu0
        %v615 = vpop.f32.mrb[0].mxu0
        %616 = vdwg.mxu0
        %v617 = vpack.c.bf16 %v612, %v612
        %s618 = scalar_lea.vmem %s326, 4 [#allocation2]
        %619 = vst.msk [vmem:[%s618] sm:$0xf] %vm442, %v617
        %s620 = scalar_lea.vmem %s4, 16
        %v621 = vld [vmem:[%s620] sm:$0xf]
        %v622 = vld [vmem:[%s620 + $0x4] sm:$0xf]
        %v623 = vld [vmem:[%s620 + $0x8] sm:$0xf]
        %v624 = vld [vmem:[%s620 + $0xc] sm:$0xf]
        %v629 = vunpack.c.l.b16 %v621
        %v630 = vunpack.c.l.b16 %v622
        %v631 = vunpack.c.l.b16 %v623
        %v632 = vunpack.c.l.b16 %v624
        %v633 = vpack.c.b16 %v630, %v629
        %v634 = vpack.c.b16 %v632, %v631
        %637 = vmatprep.subr.bf16.mxu0 0
        %638 = vmatpush1.bf16.msra.mxu0 %v633
        %639 = vmatprep.subr.bf16.mxu0 0
        %640 = vmatpush1.bf16.msra.mxu0 %v634
        %641 = vmatprep.subr.bf16.mxu0 0
        %642 = vmatpush1.bf16.msra.mxu0 0
        %643 = vmatprep.subr.bf16.mxu0 0
        %644 = vmatpush1.bf16.msra.mxu0 0
        %645 = vmatprep.subr.bf16.mxu0 0
        %646 = vmatpush1.bf16.msra.mxu0 0
        %647 = vmatprep.subr.bf16.mxu0 0
        %648 = vmatpush1.bf16.msra.mxu0 0
        %649 = vmatprep.subr.bf16.mxu0 0
        %650 = vmatpush1.bf16.msra.mxu0 0
        %651 = vmatprep.subr.bf16.mxu0 0
        %652 = vmatpush1.bf16.msra.mxu0 0
        %653 = vmatprep.subr.bf16.mxu0 0
        %654 = vmatpush1.bf16.msra.mxu0 0
        %655 = vmatprep.subr.bf16.mxu0 0
        %656 = vmatpush1.bf16.msra.mxu0 0
        %657 = vmatprep.subr.bf16.mxu0 0
        %658 = vmatpush1.bf16.msra.mxu0 0
        %659 = vmatprep.subr.bf16.mxu0 0
        %660 = vmatpush1.bf16.msra.mxu0 0
        %661 = vmatprep.subr.bf16.mxu0 0
        %662 = vmatpush1.bf16.msra.mxu0 0
        %663 = vmatprep.subr.bf16.mxu0 0
        %664 = vmatpush1.bf16.msra.mxu0 0
        %665 = vmatprep.subr.bf16.mxu0 0
        %666 = vmatpush1.bf16.msra.mxu0 0
        %667 = vmatprep.subr.bf16.mxu0 0
        %668 = vmatpush1.bf16.msra.mxu0 0
        %669 = vmatprep.mubr.bf16.mxu0 0
        %670 = vmatmul.mubr.bf16.gmra.mrb[0].mxu0 %v399
        %v671 = vpop.f32.mrb[0].mxu0
        %v672 = vadd.f32 0.0, %v671
        %v673 = vpop.f32.mrb[0].mxu0
        %v674 = vpop.f32.mrb[0].mxu0
        %v675 = vpop.f32.mrb[0].mxu0
        %676 = vdwg.mxu0
        %v677 = vpack.c.bf16 %v672, %v672
        %s678 = scalar_lea.vmem %s333, 4 [#allocation4]
        %679 = vst.msk [vmem:[%s678] sm:$0xf] %vm442, %v677
        %s680 = scalar_lea.vmem %s5, 16
        %v681 = vld [vmem:[%s680] sm:$0xf]
        %v682 = vld [vmem:[%s680 + $0x4] sm:$0xf]
        %v683 = vld [vmem:[%s680 + $0x8] sm:$0xf]
        %v684 = vld [vmem:[%s680 + $0xc] sm:$0xf]
        %v689 = vunpack.c.l.b16 %v681
        %v690 = vunpack.c.l.b16 %v682
        %v691 = vunpack.c.l.b16 %v683
        %v692 = vunpack.c.l.b16 %v684
        %v693 = vpack.c.b16 %v690, %v689
        %v694 = vpack.c.b16 %v692, %v691
        %697 = vmatprep.subr.bf16.mxu0 0
        %698 = vmatpush1.bf16.msra.mxu0 %v693
        %699 = vmatprep.subr.bf16.mxu0 0
        %700 = vmatpush1.bf16.msra.mxu0 %v694
        %701 = vmatprep.subr.bf16.mxu0 0
        %702 = vmatpush1.bf16.msra.mxu0 0
        %703 = vmatprep.subr.bf16.mxu0 0
        %704 = vmatpush1.bf16.msra.mxu0 0
        %705 = vmatprep.subr.bf16.mxu0 0
        %706 = vmatpush1.bf16.msra.mxu0 0
        %707 = vmatprep.subr.bf16.mxu0 0
        %708 = vmatpush1.bf16.msra.mxu0 0
        %709 = vmatprep.subr.bf16.mxu0 0
        %710 = vmatpush1.bf16.msra.mxu0 0
        %711 = vmatprep.subr.bf16.mxu0 0
        %712 = vmatpush1.bf16.msra.mxu0 0
        %713 = vmatprep.subr.bf16.mxu0 0
        %714 = vmatpush1.bf16.msra.mxu0 0
        %715 = vmatprep.subr.bf16.mxu0 0
        %716 = vmatpush1.bf16.msra.mxu0 0
        %717 = vmatprep.subr.bf16.mxu0 0
        %718 = vmatpush1.bf16.msra.mxu0 0
        %719 = vmatprep.subr.bf16.mxu0 0
        %720 = vmatpush1.bf16.msra.mxu0 0
        %721 = vmatprep.subr.bf16.mxu0 0
        %722 = vmatpush1.bf16.msra.mxu0 0
        %723 = vmatprep.subr.bf16.mxu0 0
        %724 = vmatpush1.bf16.msra.mxu0 0
        %725 = vmatprep.subr.bf16.mxu0 0
        %726 = vmatpush1.bf16.msra.mxu0 0
        %727 = vmatprep.subr.bf16.mxu0 0
        %728 = vmatpush1.bf16.msra.mxu0 0
        %729 = vmatprep.mubr.bf16.mxu0 0
        %730 = vmatmul.mubr.bf16.gmra.mrb[0].mxu0 %v399
        %v731 = vpop.f32.mrb[0].mxu0
        %v732 = vadd.f32 0.0, %v731
        %v733 = vpop.f32.mrb[0].mxu0
        %v734 = vpop.f32.mrb[0].mxu0
        %v735 = vpop.f32.mrb[0].mxu0
        %736 = vdwg.mxu0
        %v737 = vpack.c.bf16 %v732, %v732
        %s738 = scalar_lea.vmem %s340, 4 [#allocation6]
        %739 = vst.msk [vmem:[%s738] sm:$0xf] %vm442, %v737
        %s740 = scalar_lea.vmem %s3, 32
        %v741 = vld [vmem:[%s740] sm:$0xf]
        %v742 = vld [vmem:[%s740 + $0x4] sm:$0xf]
        %v743 = vld [vmem:[%s740 + $0x8] sm:$0xf]
        %v744 = vld [vmem:[%s740 + $0xc] sm:$0xf]
        %v749 = vunpack.c.l.b16 %v741
        %v750 = vunpack.c.l.b16 %v742
        %v751 = vunpack.c.l.b16 %v743
        %v752 = vunpack.c.l.b16 %v744
        %v753 = vpack.c.b16 %v750, %v749
        %v754 = vpack.c.b16 %v752, %v751
        %757 = vmatprep.subr.bf16.mxu0 0
        %758 = vmatpush1.bf16.msra.mxu0 %v753
        %759 = vmatprep.subr.bf16.mxu0 0
        %760 = vmatpush1.bf16.msra.mxu0 %v754
        %761 = vmatprep.subr.bf16.mxu0 0
        %762 = vmatpush1.bf16.msra.mxu0 0
        %763 = vmatprep.subr.bf16.mxu0 0
        %764 = vmatpush1.bf16.msra.mxu0 0
        %765 = vmatprep.subr.bf16.mxu0 0
        %766 = vmatpush1.bf16.msra.mxu0 0
        %767 = vmatprep.subr.bf16.mxu0 0
        %768 = vmatpush1.bf16.msra.mxu0 0
        %769 = vmatprep.subr.bf16.mxu0 0
        %770 = vmatpush1.bf16.msra.mxu0 0
        %771 = vmatprep.subr.bf16.mxu0 0
        %772 = vmatpush1.bf16.msra.mxu0 0
        %773 = vmatprep.subr.bf16.mxu0 0
        %774 = vmatpush1.bf16.msra.mxu0 0
        %775 = vmatprep.subr.bf16.mxu0 0
        %776 = vmatpush1.bf16.msra.mxu0 0
        %777 = vmatprep.subr.bf16.mxu0 0
        %778 = vmatpush1.bf16.msra.mxu0 0
        %779 = vmatprep.subr.bf16.mxu0 0
        %780 = vmatpush1.bf16.msra.mxu0 0
        %781 = vmatprep.subr.bf16.mxu0 0
        %782 = vmatpush1.bf16.msra.mxu0 0
        %783 = vmatprep.subr.bf16.mxu0 0
        %784 = vmatpush1.bf16.msra.mxu0 0
        %785 = vmatprep.subr.bf16.mxu0 0
        %786 = vmatpush1.bf16.msra.mxu0 0
        %787 = vmatprep.subr.bf16.mxu0 0
        %788 = vmatpush1.bf16.msra.mxu0 0
        %789 = vmatprep.mubr.bf16.mxu0 0
        %790 = vmatmul.mubr.bf16.gmra.mrb[0].mxu0 %v399
        %v791 = vpop.f32.mrb[0].mxu0
        %v792 = vadd.f32 0.0, %v791
        %v793 = vpop.f32.mrb[0].mxu0
        %v794 = vpop.f32.mrb[0].mxu0
        %v795 = vpop.f32.mrb[0].mxu0
        %796 = vdwg.mxu0
        %v797 = vpack.c.bf16 %v792, %v792
        %s798 = scalar_lea.vmem %s326, 8 [#allocation2]
        %799 = vst.msk [vmem:[%s798] sm:$0xf] %vm442, %v797
        %s800 = scalar_lea.vmem %s4, 32
        %v801 = vld [vmem:[%s800] sm:$0xf]
        %v802 = vld [vmem:[%s800 + $0x4] sm:$0xf]
        %v803 = vld [vmem:[%s800 + $0x8] sm:$0xf]
        %v804 = vld [vmem:[%s800 + $0xc] sm:$0xf]
        %v809 = vunpack.c.l.b16 %v801
        %v810 = vunpack.c.l.b16 %v802
        %v811 = vunpack.c.l.b16 %v803
        %v812 = vunpack.c.l.b16 %v804
        %v813 = vpack.c.b16 %v810, %v809
        %v814 = vpack.c.b16 %v812, %v811
        %817 = vmatprep.subr.bf16.mxu0 0
        %818 = vmatpush1.bf16.msra.mxu0 %v813
        %819 = vmatprep.subr.bf16.mxu0 0
        %820 = vmatpush1.bf16.msra.mxu0 %v814
        %821 = vmatprep.subr.bf16.mxu0 0
        %822 = vmatpush1.bf16.msra.mxu0 0
        %823 = vmatprep.subr.bf16.mxu0 0
        %824 = vmatpush1.bf16.msra.mxu0 0
        %825 = vmatprep.subr.bf16.mxu0 0
        %826 = vmatpush1.bf16.msra.mxu0 0
        %827 = vmatprep.subr.bf16.mxu0 0
        %828 = vmatpush1.bf16.msra.mxu0 0
        %829 = vmatprep.subr.bf16.mxu0 0
        %830 = vmatpush1.bf16.msra.mxu0 0
        %831 = vmatprep.subr.bf16.mxu0 0
        %832 = vmatpush1.bf16.msra.mxu0 0
        %833 = vmatprep.subr.bf16.mxu0 0
        %834 = vmatpush1.bf16.msra.mxu0 0
        %835 = vmatprep.subr.bf16.mxu0 0
        %836 = vmatpush1.bf16.msra.mxu0 0
        %837 = vmatprep.subr.bf16.mxu0 0
        %838 = vmatpush1.bf16.msra.mxu0 0
        %839 = vmatprep.subr.bf16.mxu0 0
        %840 = vmatpush1.bf16.msra.mxu0 0
        %841 = vmatprep.subr.bf16.mxu0 0
        %842 = vmatpush1.bf16.msra.mxu0 0
        %843 = vmatprep.subr.bf16.mxu0 0
        %844 = vmatpush1.bf16.msra.mxu0 0
        %845 = vmatprep.subr.bf16.mxu0 0
        %846 = vmatpush1.bf16.msra.mxu0 0
        %847 = vmatprep.subr.bf16.mxu0 0
        %848 = vmatpush1.bf16.msra.mxu0 0
        %849 = vmatprep.mubr.bf16.mxu0 0
        %850 = vmatmul.mubr.bf16.gmra.mrb[0].mxu0 %v399
        %v851 = vpop.f32.mrb[0].mxu0
        %v852 = vadd.f32 0.0, %v851
        %v853 = vpop.f32.mrb[0].mxu0
        %v854 = vpop.f32.mrb[0].mxu0
        %v855 = vpop.f32.mrb[0].mxu0
        %856 = vdwg.mxu0
        %v857 = vpack.c.bf16 %v852, %v852
        %s858 = scalar_lea.vmem %s333, 8 [#allocation4]
        %859 = vst.msk [vmem:[%s858] sm:$0xf] %vm442, %v857
        %s860 = scalar_lea.vmem %s5, 32
        %v861 = vld [vmem:[%s860] sm:$0xf]
        %v862 = vld [vmem:[%s860 + $0x4] sm:$0xf]
        %v863 = vld [vmem:[%s860 + $0x8] sm:$0xf]
        %v864 = vld [vmem:[%s860 + $0xc] sm:$0xf]
        %v869 = vunpack.c.l.b16 %v861
        %v870 = vunpack.c.l.b16 %v862
        %v871 = vunpack.c.l.b16 %v863
        %v872 = vunpack.c.l.b16 %v864
        %v873 = vpack.c.b16 %v870, %v869
        %v874 = vpack.c.b16 %v872, %v871
        %877 = vmatprep.subr.bf16.mxu0 0
        %878 = vmatpush1.bf16.msra.mxu0 %v873
        %879 = vmatprep.subr.bf16.mxu0 0
        %880 = vmatpush1.bf16.msra.mxu0 %v874
        %881 = vmatprep.subr.bf16.mxu0 0
        %882 = vmatpush1.bf16.msra.mxu0 0
        %883 = vmatprep.subr.bf16.mxu0 0
        %884 = vmatpush1.bf16.msra.mxu0 0
        %885 = vmatprep.subr.bf16.mxu0 0
        %886 = vmatpush1.bf16.msra.mxu0 0
        %887 = vmatprep.subr.bf16.mxu0 0
        %888 = vmatpush1.bf16.msra.mxu0 0
        %889 = vmatprep.subr.bf16.mxu0 0
        %890 = vmatpush1.bf16.msra.mxu0 0
        %891 = vmatprep.subr.bf16.mxu0 0
        %892 = vmatpush1.bf16.msra.mxu0 0
        %893 = vmatprep.subr.bf16.mxu0 0
        %894 = vmatpush1.bf16.msra.mxu0 0
        %895 = vmatprep.subr.bf16.mxu0 0
        %896 = vmatpush1.bf16.msra.mxu0 0
        %897 = vmatprep.subr.bf16.mxu0 0
        %898 = vmatpush1.bf16.msra.mxu0 0
        %899 = vmatprep.subr.bf16.mxu0 0
        %900 = vmatpush1.bf16.msra.mxu0 0
        %901 = vmatprep.subr.bf16.mxu0 0
        %902 = vmatpush1.bf16.msra.mxu0 0
        %903 = vmatprep.subr.bf16.mxu0 0
        %904 = vmatpush1.bf16.msra.mxu0 0
        %905 = vmatprep.subr.bf16.mxu0 0
        %906 = vmatpush1.bf16.msra.mxu0 0
        %907 = vmatprep.subr.bf16.mxu0 0
        %908 = vmatpush1.bf16.msra.mxu0 0
        %909 = vmatprep.mubr.bf16.mxu0 0
        %910 = vmatmul.mubr.bf16.gmra.mrb[0].mxu0 %v399
        %v911 = vpop.f32.mrb[0].mxu0
        %v912 = vadd.f32 0.0, %v911
        %v913 = vpop.f32.mrb[0].mxu0
        %v914 = vpop.f32.mrb[0].mxu0
        %v915 = vpop.f32.mrb[0].mxu0
        %916 = vdwg.mxu0
        %v917 = vpack.c.bf16 %v912, %v912
        %s918 = scalar_lea.vmem %s340, 8 [#allocation6]
        %919 = vst.msk [vmem:[%s918] sm:$0xf] %vm442, %v917
        %s920 = scalar_lea.vmem %s3, 48
        %v921 = vld [vmem:[%s920] sm:$0xf]
        %v922 = vld [vmem:[%s920 + $0x4] sm:$0xf]
        %v923 = vld [vmem:[%s920 + $0x8] sm:$0xf]
        %v924 = vld [vmem:[%s920 + $0xc] sm:$0xf]
        %v929 = vunpack.c.l.b16 %v921
        %v930 = vunpack.c.l.b16 %v922
        %v931 = vunpack.c.l.b16 %v923
        %v932 = vunpack.c.l.b16 %v924
        %v933 = vpack.c.b16 %v930, %v929
        %v934 = vpack.c.b16 %v932, %v931
        %937 = vmatprep.subr.bf16.mxu0 0
        %938 = vmatpush1.bf16.msra.mxu0 %v933
        %939 = vmatprep.subr.bf16.mxu0 0
        %940 = vmatpush1.bf16.msra.mxu0 %v934
        %941 = vmatprep.subr.bf16.mxu0 0
        %942 = vmatpush1.bf16.msra.mxu0 0
        %943 = vmatprep.subr.bf16.mxu0 0
        %944 = vmatpush1.bf16.msra.mxu0 0
        %945 = vmatprep.subr.bf16.mxu0 0
        %946 = vmatpush1.bf16.msra.mxu0 0
        %947 = vmatprep.subr.bf16.mxu0 0
        %948 = vmatpush1.bf16.msra.mxu0 0
        %949 = vmatprep.subr.bf16.mxu0 0
        %950 = vmatpush1.bf16.msra.mxu0 0
        %951 = vmatprep.subr.bf16.mxu0 0
        %952 = vmatpush1.bf16.msra.mxu0 0
        %953 = vmatprep.subr.bf16.mxu0 0
        %954 = vmatpush1.bf16.msra.mxu0 0
        %955 = vmatprep.subr.bf16.mxu0 0
        %956 = vmatpush1.bf16.msra.mxu0 0
        %957 = vmatprep.subr.bf16.mxu0 0
        %958 = vmatpush1.bf16.msra.mxu0 0
        %959 = vmatprep.subr.bf16.mxu0 0
        %960 = vmatpush1.bf16.msra.mxu0 0
        %961 = vmatprep.subr.bf16.mxu0 0
        %962 = vmatpush1.bf16.msra.mxu0 0
        %963 = vmatprep.subr.bf16.mxu0 0
        %964 = vmatpush1.bf16.msra.mxu0 0
        %965 = vmatprep.subr.bf16.mxu0 0
        %966 = vmatpush1.bf16.msra.mxu0 0
        %967 = vmatprep.subr.bf16.mxu0 0
        %968 = vmatpush1.bf16.msra.mxu0 0
        %969 = vmatprep.mubr.bf16.mxu0 0
        %970 = vmatmul.mubr.bf16.gmra.mrb[0].mxu0 %v399
        %v971 = vpop.f32.mrb[0].mxu0
        %v972 = vadd.f32 0.0, %v971
        %v973 = vpop.f32.mrb[0].mxu0
        %v974 = vpop.f32.mrb[0].mxu0
        %v975 = vpop.f32.mrb[0].mxu0
        %976 = vdwg.mxu0
        %v977 = vpack.c.bf16 %v972, %v972
        %s978 = scalar_lea.vmem %s326, 12 [#allocation2]
        %979 = vst.msk [vmem:[%s978] sm:$0xf] %vm442, %v977
        %s980 = scalar_lea.vmem %s4, 48
        %v981 = vld [vmem:[%s980] sm:$0xf]
        %v982 = vld [vmem:[%s980 + $0x4] sm:$0xf]
        %v983 = vld [vmem:[%s980 + $0x8] sm:$0xf]
        %v984 = vld [vmem:[%s980 + $0xc] sm:$0xf]
        %v989 = vunpack.c.l.b16 %v981
        %v990 = vunpack.c.l.b16 %v982
        %v991 = vunpack.c.l.b16 %v983
        %v992 = vunpack.c.l.b16 %v984
        %v993 = vpack.c.b16 %v990, %v989
        %v994 = vpack.c.b16 %v992, %v991
        %997 = vmatprep.subr.bf16.mxu0 0
        %998 = vmatpush1.bf16.msra.mxu0 %v993
        %999 = vmatprep.subr.bf16.mxu0 0
        %1000 = vmatpush1.bf16.msra.mxu0 %v994
        %1001 = vmatprep.subr.bf16.mxu0 0
        %1002 = vmatpush1.bf16.msra.mxu0 0
        %1003 = vmatprep.subr.bf16.mxu0 0
        %1004 = vmatpush1.bf16.msra.mxu0 0
        %1005 = vmatprep.subr.bf16.mxu0 0
        %1006 = vmatpush1.bf16.msra.mxu0 0
        %1007 = vmatprep.subr.bf16.mxu0 0
        %1008 = vmatpush1.bf16.msra.mxu0 0
        %1009 = vmatprep.subr.bf16.mxu0 0
        %1010 = vmatpush1.bf16.msra.mxu0 0
        %1011 = vmatprep.subr.bf16.mxu0 0
        %1012 = vmatpush1.bf16.msra.mxu0 0
        %1013 = vmatprep.subr.bf16.mxu0 0
        %1014 = vmatpush1.bf16.msra.mxu0 0
        %1015 = vmatprep.subr.bf16.mxu0 0
        %1016 = vmatpush1.bf16.msra.mxu0 0
        %1017 = vmatprep.subr.bf16.mxu0 0
        %1018 = vmatpush1.bf16.msra.mxu0 0
        %1019 = vmatprep.subr.bf16.mxu0 0
        %1020 = vmatpush1.bf16.msra.mxu0 0
        %1021 = vmatprep.subr.bf16.mxu0 0
        %1022 = vmatpush1.bf16.msra.mxu0 0
        %1023 = vmatprep.subr.bf16.mxu0 0
        %1024 = vmatpush1.bf16.msra.mxu0 0
        %1025 = vmatprep.subr.bf16.mxu0 0
        %1026 = vmatpush1.bf16.msra.mxu0 0
        %1027 = vmatprep.subr.bf16.mxu0 0
        %1028 = vmatpush1.bf16.msra.mxu0 0
        %1029 = vmatprep.mubr.bf16.mxu0 0
        %1030 = vmatmul.mubr.bf16.gmra.mrb[0].mxu0 %v399
        %v1031 = vpop.f32.mrb[0].mxu0
        %v1032 = vadd.f32 0.0, %v1031
        %v1033 = vpop.f32.mrb[0].mxu0
        %v1034 = vpop.f32.mrb[0].mxu0
        %v1035 = vpop.f32.mrb[0].mxu0
        %1036 = vdwg.mxu0
        %v1037 = vpack.c.bf16 %v1032, %v1032
        %s1038 = scalar_lea.vmem %s333, 12 [#allocation4]
        %1039 = vst.msk [vmem:[%s1038] sm:$0xf] %vm442, %v1037
        %s1040 = scalar_lea.vmem %s5, 48
        %v1041 = vld [vmem:[%s1040] sm:$0xf]
        %v1042 = vld [vmem:[%s1040 + $0x4] sm:$0xf]
        %v1043 = vld [vmem:[%s1040 + $0x8] sm:$0xf]
        %v1044 = vld [vmem:[%s1040 + $0xc] sm:$0xf]
        %v1049 = vunpack.c.l.b16 %v1041
        %v1050 = vunpack.c.l.b16 %v1042
        %v1051 = vunpack.c.l.b16 %v1043
        %v1052 = vunpack.c.l.b16 %v1044
        %v1053 = vpack.c.b16 %v1050, %v1049
        %v1054 = vpack.c.b16 %v1052, %v1051
        %1057 = vmatprep.subr.bf16.mxu0 0
        %1058 = vmatpush1.bf16.msra.mxu0 %v1053
        %1059 = vmatprep.subr.bf16.mxu0 0
        %1060 = vmatpush1.bf16.msra.mxu0 %v1054
        %1061 = vmatprep.subr.bf16.mxu0 0
        %1062 = vmatpush1.bf16.msra.mxu0 0
        %1063 = vmatprep.subr.bf16.mxu0 0
        %1064 = vmatpush1.bf16.msra.mxu0 0
        %1065 = vmatprep.subr.bf16.mxu0 0
        %1066 = vmatpush1.bf16.msra.mxu0 0
        %1067 = vmatprep.subr.bf16.mxu0 0
        %1068 = vmatpush1.bf16.msra.mxu0 0
        %1069 = vmatprep.subr.bf16.mxu0 0
        %1070 = vmatpush1.bf16.msra.mxu0 0
        %1071 = vmatprep.subr.bf16.mxu0 0
        %1072 = vmatpush1.bf16.msra.mxu0 0
        %1073 = vmatprep.subr.bf16.mxu0 0
        %1074 = vmatpush1.bf16.msra.mxu0 0
        %1075 = vmatprep.subr.bf16.mxu0 0
        %1076 = vmatpush1.bf16.msra.mxu0 0
        %1077 = vmatprep.subr.bf16.mxu0 0
        %1078 = vmatpush1.bf16.msra.mxu0 0
        %1079 = vmatprep.subr.bf16.mxu0 0
        %1080 = vmatpush1.bf16.msra.mxu0 0
        %1081 = vmatprep.subr.bf16.mxu0 0
        %1082 = vmatpush1.bf16.msra.mxu0 0
        %1083 = vmatprep.subr.bf16.mxu0 0
        %1084 = vmatpush1.bf16.msra.mxu0 0
        %1085 = vmatprep.subr.bf16.mxu0 0
        %1086 = vmatpush1.bf16.msra.mxu0 0
        %1087 = vmatprep.subr.bf16.mxu0 0
        %1088 = vmatpush1.bf16.msra.mxu0 0
        %1089 = vmatprep.mubr.bf16.mxu0 0
        %1090 = vmatmul.mubr.bf16.gmra.mrb[0].mxu0 %v399
        %v1091 = vpop.f32.mrb[0].mxu0
        %v1092 = vadd.f32 0.0, %v1091
        %v1093 = vpop.f32.mrb[0].mxu0
        %v1094 = vpop.f32.mrb[0].mxu0
        %v1095 = vpop.f32.mrb[0].mxu0
        %1096 = vdwg.mxu0
        %v1097 = vpack.c.bf16 %v1092, %v1092
        %s1098 = scalar_lea.vmem %s340, 12 [#allocation6]
        %1099 = vst.msk [vmem:[%s1098] sm:$0xf] %vm442, %v1097
        %s1100 = sand.u32 %s181, 1
        %s1101 = scalar_lea.sflag [#allocation3], %s1100
        %s1102 = sand.u32 %s181, 1
        %s1103 = smul.addr %s1102, 16
        %s1104 = scalar_lea.vmem [#allocation2], %s1103
        %s1105 = sand.u32 %s26, 1
        %s1106 = scalar_lea.sflag [#allocation5], %s1105
        %s1107 = sand.u32 %s209, 1
        %s1108 = smul.addr %s1107, 16
        %s1109 = scalar_lea.vmem [#allocation4], %s1108
        %s1110 = sand.u32 %s26, 1
        %s1111 = scalar_lea.sflag [#allocation5], %s1110
        %s1112 = sand.u32 %s237, 1
        %s1113 = smul.addr %s1112, 16
        %s1114 = scalar_lea.vmem [#allocation6], %s1113
        // Predicated region
        $region45: #{tpu_custom_call.1} parent=43 // pred_check
          %p1115 = pneg %p191
        $region46: #{tpu_custom_call.1} parent=43 // pred_check_branch
          %1117 = sbr.rel (%p1115) target = $region48
        $region47: #{tpu_custom_call.1} parent=43 // pred_region
          %s1119 = ssub.s32 256, 256
          %1120 = vsyncadd %s1101, %s1119
          %s1121 = smul.addr %s30, 4
          %s1122 = sadd.s32 %s31, %s1121
          %s1123 = smul.addr %s1122, 64
          %s1124 = scalar_lea.hbm %s6, %s1123
          %s1125 = sshll.u32 %s1104, 4
          %s1126 = int_to_ptr.vmem [resolvable:$true] %s1125
          %1131 = dma.vmem_to_hbm [thread:$0]  %s1126, 256, %s1124, %s1101, 64, 64, 4
        $region48: #{tpu_custom_call.1} parent=43 // pred_fallthru
          _
        // Predicated region
        $region49: #{tpu_custom_call.1} parent=43 // pred_check
          %p1132 = pneg %p219
        $region50: #{tpu_custom_call.1} parent=43 // pred_check_branch
          %1134 = sbr.rel (%p1132) target = $region52
        $region51: #{tpu_custom_call.1} parent=43 // pred_region
          %s1136 = ssub.s32 256, 256
          %1137 = vsyncadd %s1106, %s1136
          %s1138 = smul.addr %s30, 4
          %s1139 = sadd.s32 %s31, %s1138
          %s1140 = smul.addr %s1139, 64
          %s1141 = scalar_lea.hbm %s7, %s1140
          %s1142 = sshll.u32 %s1109, 4
          %s1143 = int_to_ptr.vmem [resolvable:$true] %s1142
          %1148 = dma.vmem_to_hbm [thread:$0]  %s1143, 256, %s1141, %s1106, 64, 64, 4
        $region52: #{tpu_custom_call.1} parent=43 // pred_fallthru
          _
        // Predicated region
        $region53: #{tpu_custom_call.1} parent=43 // pred_check
          %p1149 = pneg %p247
        $region54: #{tpu_custom_call.1} parent=43 // pred_check_branch
          %1151 = sbr.rel (%p1149) target = $region56
        $region55: #{tpu_custom_call.1} parent=43 // pred_region
          %s1153 = ssub.s32 256, 256
          %1154 = vsyncadd %s1111, %s1153
          %s1155 = smul.addr %s30, 4
          %s1156 = sadd.s32 %s31, %s1155
          %s1157 = smul.addr %s1156, 64
          %s1158 = scalar_lea.hbm %s8, %s1157
          %s1159 = sshll.u32 %s1114, 4
          %s1160 = int_to_ptr.vmem [resolvable:$true] %s1159
          %1165 = dma.vmem_to_hbm [thread:$0]  %s1160, 256, %s1158, %s1111, 64, 64, 4
        $region56: #{tpu_custom_call.1} parent=43 // pred_fallthru
          _
      $region44: #{tpu_custom_call.1} parent=5 // pred_fallthru
        _
      %p1166 = scmp.le.s32.totalorder 2, %s21
      // Predicated region
      $region57: #{tpu_custom_call.1} parent=5 // pred_check
        %p1167 = pneg %p1166
      $region58: #{tpu_custom_call.1} parent=5 // pred_check_branch
        %1169 = sbr.rel (%p1167) target = $region60
      $region59: #{tpu_custom_call.1} parent=5 // pred_region
        %s1170 = ssub.s32 %s21, 2
        // Predicated region
        $region61: #{tpu_custom_call.1} parent=59 // pred_check
          %p1171 = pneg %p197
        $region62: #{tpu_custom_call.1} parent=59 // pred_check_branch
          %1173 = sbr.rel (%p1171) target = $region64
        $region63: #{tpu_custom_call.1} parent=59 // pred_region
          %s1174 = sand.u32 %s182, 1
          %s1175 = scalar_lea.sflag [#allocation3], %s1174
          %s1176 = sand.u32 %s182, 1
          %s1177 = smul.addr %s1176, 16
          %s1178 = scalar_lea.vmem [#allocation2], %s1177
          %1179 = dma.done %s1175, 256
        $region64: #{tpu_custom_call.1} parent=59 // pred_fallthru
          _
        // Predicated region
        $region65: #{tpu_custom_call.1} parent=59 // pred_check
          %p1180 = pneg %p225
        $region66: #{tpu_custom_call.1} parent=59 // pred_check_branch
          %1182 = sbr.rel (%p1180) target = $region68
        $region67: #{tpu_custom_call.1} parent=59 // pred_region
          %s1183 = sand.u32 %s27, 1
          %s1184 = scalar_lea.sflag [#allocation5], %s1183
          %s1185 = sand.u32 %s210, 1
          %s1186 = smul.addr %s1185, 16
          %s1187 = scalar_lea.vmem [#allocation4], %s1186
          %1188 = dma.done %s1184, 256
        $region68: #{tpu_custom_call.1} parent=59 // pred_fallthru
          _
        // Predicated region
        $region69: #{tpu_custom_call.1} parent=59 // pred_check
          %p1189 = pneg %p253
        $region70: #{tpu_custom_call.1} parent=59 // pred_check_branch
          %1191 = sbr.rel (%p1189) target = $region72
        $region71: #{tpu_custom_call.1} parent=59 // pred_region
          %s1192 = sand.u32 %s27, 1
          %s1193 = scalar_lea.sflag [#allocation5], %s1192
          %s1194 = sand.u32 %s238, 1
          %s1195 = smul.addr %s1194, 16
          %s1196 = scalar_lea.vmem [#allocation6], %s1195
          %1197 = dma.done %s1193, 256
        $region72: #{tpu_custom_call.1} parent=59 // pred_fallthru
          _
      $region60: #{tpu_custom_call.1} parent=5 // pred_fallthru
        _
    $region6: #{tpu_custom_call.1} parent=1 // loop_footer
      %s25 = sadd.s32 1, %s21
    $region7: #{tpu_custom_call.1} parent=1 // loop_footer_branch
      %20 = sbr.rel target = $region3
    $region8: #{tpu_custom_call.1} parent=1 // loop_exit
      _
    %1198 = vsyncpa [#allocation3], 1
    %s1199 = scalar_lea.sflag [#allocation3], 1
    %1200 = vsyncpa %s1199, 1
    %1201 = vsyncpa [#allocation5], 1
    %s1202 = scalar_lea.sflag [#allocation5], 1
    %1203 = vsyncpa %s1202, 1

// kernel: tpu_custom_call.1
$region0: #{tpu_custom_call.1}
  #allocation0 [shape = 'u32[]', space=smem, size = 0x4, offset = 0x4, fixed_abs, tag = 'smem constant byte address 0x4 - core index']
  #allocation1 [shape = 'u32[144,128]{1,0:T(1,128)}', space=vmem, size = 0x12000, scoped, tag = 'internal scratch']
  %s0 = inlined_call_operand.vmem [shape: f32[2,8,32], index: 0, kind: input, shape index: {}]
  %s1 = inlined_call_operand.vmem [shape: f32[1,32], index: 1, kind: input, shape index: {}]
  %s2 = inlined_call_operand.vmem [shape: f32[1,32], index: 2, kind: input, shape index: {}]
  %s3 = inlined_call_operand.vmem [shape: bf16[4,32,8], index: 3, kind: input, shape index: {}]
  %s4 = inlined_call_operand.vmem [shape: bf16[4,32,8], index: 4, kind: input, shape index: {}]
  %s5 = inlined_call_operand.vmem [shape: bf16[4,32,8], index: 5, kind: input, shape index: {}]
  %s6 = inlined_call_operand.hbm [shape: bf16[2,4,8,8], index: 6, kind: output, shape index: {0}]
  %s7 = inlined_call_operand.hbm [shape: bf16[2,4,8,8], index: 7, kind: output, shape index: {1}]
  %s8 = inlined_call_operand.hbm [shape: bf16[2,4,8,8], index: 8, kind: output, shape index: {2}]
  %9 = xla_tuple %s6, %s7, %s8
  %s10 = sld [smem:[#allocation0]]
  $region73: #{tpu_custom_call.1} parent=0
    _
  %s12 = ssub.s32 1, %s10
  %s13 = scalar_select 0, %s12, %s10
  $region1: #{tpu_custom_call.1} parent=0
    #allocation2 [shape = 'u8[16384]{0}', space=vmem, size = 0x4000, scoped, tag = 'output window, operand 0']
    #allocation3 [shape = 's32[2]{0}', space=sflag, size = 0x8, scoped, tag = 'scoped memory for tpu_custom_call.1']
    #allocation4 [shape = 'u8[16384]{0}', space=vmem, size = 0x4000, scoped, tag = 'output window, operand 1']
    #allocation5 [shape = 's32[2]{0}', space=sflag, size = 0x8, scoped, tag = 'scoped memory for tpu_custom_call.1']
    #allocation6 [shape = 'u8[16384]{0}', space=vmem, size = 0x4000, scoped, tag = 'output window, operand 2']
    %14 = vsyncpa [#allocation3], 0
    %s15 = scalar_lea.sflag [#allocation3], 1
    %16 = vsyncpa %s15, 0
    %17 = vsyncpa [#allocation5], 0
    %s18 = scalar_lea.sflag [#allocation5], 1
    %19 = vsyncpa %s18, 0
    loop: start=0, step=1, limit=4
    $region2: #{tpu_custom_call.1} parent=1 // loop_pre_header
      _
    $region3: #{tpu_custom_call.1} parent=1 // loop_header
      %s21 = sphi 0, %s25
      %p22 = scmp.ge.s32.totalorder %s21, 4
      %s28 = sphi 0, %s40
      %s29 = sphi 0, %s36
      %s30 = sphi 0, %s28
      %s31 = sphi 0, %s29
      %s32 = sphi 0, %s30
      %s33 = sphi 0, %s31
      %s45 = sphi 0, %s47
      %s48 = sphi 0, %s45
      %s49 = sphi 0, %s48
      %s65 = sphi 0, %s49
      %s69 = sphi 0, %s69
      %s71 = sphi 0, %s69
      %s72 = sphi 0, %s71
      %s86 = sphi 0, %s72
      %s90 = sphi 0, %s90
      %s92 = sphi 0, %s90
      %s93 = sphi 0, %s92
      %s107 = sphi 0, %s93
      %s111 = sphi 0, %s111
      %s113 = sphi 0, %s111
      %s114 = sphi 0, %s113
      %s128 = sphi 0, %s114
      %s132 = sphi 0, %s132
      %s134 = sphi 0, %s132
      %s135 = sphi 0, %s134
      %s149 = sphi 0, %s135
      %s153 = sphi 0, %s153
      %s155 = sphi 0, %s153
      %s156 = sphi 0, %s155
      %s170 = sphi 0, %s156
      %s178 = sphi 0, %s180
      %s181 = sphi 0, %s178
      %s182 = sphi 0, %s181
      %s198 = sphi 0, %s182
      %s206 = sphi 0, %s208
      %s209 = sphi 0, %s206
      %s210 = sphi 0, %s209
      %s226 = sphi 0, %s210
      %s234 = sphi 0, %s236
      %s237 = sphi 0, %s234
      %s238 = sphi 0, %s237
      %s254 = sphi 0, %s238
    $region4: #{tpu_custom_call.1} parent=1 // loop_header_branch
      %24 = sbr.rel (%p22) target = $region8
    $region5: #{tpu_custom_call.1} parent=1 // loop_body
      %s26 = ssub.s32 %s21, 1
      %s27 = ssub.s32 %s21, 2
      %s34 = sadd.s32 1, %s29
      %p35 = scmp.ge.s32.totalorder %s34, 1
      %s36 = scalar_select %p35, 0, %s34
      %s37 = sadd.s32 1, %s28
      %s38 = scalar_select %p35, %s37, %s28
      %p39 = scmp.ge.s32.totalorder %s38, 2
      %s40 = scalar_select %p39, 0, %s38
      %s41 = ssub.s32 %s28, %s40
      %s42 = ssub.s32 %s29, %s36
      %s43 = sor.u32 %s41, %s42
      %p44 = scmp.eq.s32.totalorder %s43, 0
      %s46 = sadd.s32 %s45, 1
      %s47 = scalar_select %p44, %s45, %s46
      %p50 = pneg %p44
      %p51 = scmp.eq.s32.totalorder %s21, 1
      %p52 = por %p50, %p51
      %p53 = scmp.ne.s32.totalorder %s45, %s48
      %p54 = scmp.eq.s32.totalorder %s21, 0
      %p55 = por %p53, %p54
      %p56 = scmp.ne.s32.totalorder %s45, %s48
      %p57 = scmp.eq.s32.totalorder %s26, 1
      %p58 = por %p56, %p57
      %p59 = scmp.ne.s32.totalorder %s48, %s49
      %p60 = scmp.eq.s32.totalorder %s26, 0
      %p61 = por %p59, %p60
      %p62 = scmp.ne.s32.totalorder %s48, %s49
      %p63 = scmp.eq.s32.totalorder %s27, 1
      %p64 = por %p62, %p63
      %p66 = scmp.ne.s32.totalorder %s49, %s65
      %p67 = scmp.eq.s32.totalorder %s27, 0
      %p68 = por %p66, %p67
      %s70 = sadd.s32 %s69, 1
      %p73 = scmp.eq.s32.totalorder %s21, 1
      %p74 = scmp.ne.s32.totalorder %s69, %s71
      %p75 = scmp.eq.s32.totalorder %s21, 0
      %p76 = por %p74, %p75
      %p77 = scmp.ne.s32.totalorder %s69, %s71
      %p78 = scmp.eq.s32.totalorder %s26, 1
      %p79 = por %p77, %p78
      %p80 = scmp.ne.s32.totalorder %s71, %s72
      %p81 = scmp.eq.s32.totalorder %s26, 0
      %p82 = por %p80, %p81
      %p83 = scmp.ne.s32.totalorder %s71, %s72
      %p84 = scmp.eq.s32.totalorder %s27, 1
      %p85 = por %p83, %p84
      %p87 = scmp.ne.s32.totalorder %s72, %s86
      %p88 = scmp.eq.s32.totalorder %s27, 0
      %p89 = por %p87, %p88
      %s91 = sadd.s32 %s90, 1
      %p94 = scmp.eq.s32.totalorder %s21, 1
      %p95 = scmp.ne.s32.totalorder %s90, %s92
      %p96 = scmp.eq.s32.totalorder %s21, 0
      %p97 = por %p95, %p96
      %p98 = scmp.ne.s32.totalorder %s90, %s92
      %p99 = scmp.eq.s32.totalorder %s26, 1
      %p100 = por %p98, %p99
      %p101 = scmp.ne.s32.totalorder %s92, %s93
      %p102 = scmp.eq.s32.totalorder %s26, 0
      %p103 = por %p101, %p102
      %p104 = scmp.ne.s32.totalorder %s92, %s93
      %p105 = scmp.eq.s32.totalorder %s27, 1
      %p106 = por %p104, %p105
      %p108 = scmp.ne.s32.totalorder %s93, %s107
      %p109 = scmp.eq.s32.totalorder %s27, 0
      %p110 = por %p108, %p109
      %s112 = sadd.s32 %s111, 1
      %p115 = scmp.eq.s32.totalorder %s21, 1
      %p116 = scmp.ne.s32.totalorder %s111, %s113
      %p117 = scmp.eq.s32.totalorder %s21, 0
      %p118 = por %p116, %p117
      %p119 = scmp.ne.s32.totalorder %s111, %s113
      %p120 = scmp.eq.s32.totalorder %s26, 1
      %p121 = por %p119, %p120
      %p122 = scmp.ne.s32.totalorder %s113, %s114
      %p123 = scmp.eq.s32.totalorder %s26, 0
      %p124 = por %p122, %p123
      %p125 = scmp.ne.s32.totalorder %s113, %s114
      %p126 = scmp.eq.s32.totalorder %s27, 1
      %p127 = por %p125, %p126
      %p129 = scmp.ne.s32.totalorder %s114, %s128
      %p130 = scmp.eq.s32.totalorder %s27, 0
      %p131 = por %p129, %p130
      %s133 = sadd.s32 %s132, 1
      %p136 = scmp.eq.s32.totalorder %s21, 1
      %p137 = scmp.ne.s32.totalorder %s132, %s134
      %p138 = scmp.eq.s32.totalorder %s21, 0
      %p139 = por %p137, %p138
      %p140 = scmp.ne.s32.totalorder %s132, %s134
      %p141 = scmp.eq.s32.totalorder %s26, 1
      %p142 = por %p140, %p141
      %p143 = scmp.ne.s32.totalorder %s134, %s135
      %p144 = scmp.eq.s32.totalorder %s26, 0
      %p145 = por %p143, %p144
      %p146 = scmp.ne.s32.totalorder %s134, %s135
      %p147 = scmp.eq.s32.totalorder %s27, 1
      %p148 = por %p146, %p147
      %p150 = scmp.ne.s32.totalorder %s135, %s149
      %p151 = scmp.eq.s32.totalorder %s27, 0
      %p152 = por %p150, %p151
      %s154 = sadd.s32 %s153, 1
      %p157 = scmp.eq.s32.totalorder %s21, 1
      %p158 = scmp.ne.s32.totalorder %s153, %s155
      %p159 = scmp.eq.s32.totalorder %s21, 0
      %p160 = por %p158, %p159
      %p161 = scmp.ne.s32.totalorder %s153, %s155
      %p162 = scmp.eq.s32.totalorder %s26, 1
      %p163 = por %p161, %p162
      %p164 = scmp.ne.s32.totalorder %s155, %s156
      %p165 = scmp.eq.s32.totalorder %s26, 0
      %p166 = por %p164, %p165
      %p167 = scmp.ne.s32.totalorder %s155, %s156
      %p168 = scmp.eq.s32.totalorder %s27, 1
      %p169 = por %p167, %p168
      %p171 = scmp.ne.s32.totalorder %s156, %s170
      %p172 = scmp.eq.s32.totalorder %s27, 0
      %p173 = por %p171, %p172
      %s174 = ssub.s32 %s28, %s40
      %s175 = ssub.s32 %s29, %s36
      %s176 = sor.u32 %s174, %s175
      %p177 = scmp.eq.s32.totalorder %s176, 0
      %s179 = sadd.s32 %s178, 1
      %s180 = scalar_select %p177, %s178, %s179
      %p183 = pneg %p177
      %p184 = scmp.eq.s32.totalorder %s21, 1
      %p185 = por %p183, %p184
      %p186 = scmp.ne.s32.totalorder %s178, %s181
      %p187 = scmp.eq.s32.totalorder %s21, 0
      %p188 = por %p186, %p187
      %p189 = scmp.ne.s32.totalorder %s178, %s181
      %p190 = scmp.eq.s32.totalorder %s26, 1
      %p191 = por %p189, %p190
      %p192 = scmp.ne.s32.totalorder %s181, %s182
      %p193 = scmp.eq.s32.totalorder %s26, 0
      %p194 = por %p192, %p193
      %p195 = scmp.ne.s32.totalorder %s181, %s182
      %p196 = scmp.eq.s32.totalorder %s27, 1
      %p197 = por %p195, %p196
      %p199 = scmp.ne.s32.totalorder %s182, %s198
      %p200 = scmp.eq.s32.totalorder %s27, 0
      %p201 = por %p199, %p200
      %s202 = ssub.s32 %s28, %s40
      %s203 = ssub.s32 %s29, %s36
      %s204 = sor.u32 %s202, %s203
      %p205 = scmp.eq.s32.totalorder %s204, 0
      %s207 = sadd.s32 %s206, 1
      %s208 = scalar_select %p205, %s206, %s207
      %p211 = pneg %p205
      %p212 = scmp.eq.s32.totalorder %s21, 1
      %p213 = por %p211, %p212
      %p214 = scmp.ne.s32.totalorder %s206, %s209
      %p215 = scmp.eq.s32.totalorder %s21, 0
      %p216 = por %p214, %p215
      %p217 = scmp.ne.s32.totalorder %s206, %s209
      %p218 = scmp.eq.s32.totalorder %s26, 1
      %p219 = por %p217, %p218
      %p220 = scmp.ne.s32.totalorder %s209, %s210
      %p221 = scmp.eq.s32.totalorder %s26, 0
      %p222 = por %p220, %p221
      %p223 = scmp.ne.s32.totalorder %s209, %s210
      %p224 = scmp.eq.s32.totalorder %s27, 1
      %p225 = por %p223, %p224
      %p227 = scmp.ne.s32.totalorder %s210, %s226
      %p228 = scmp.eq.s32.totalorder %s27, 0
      %p229 = por %p227, %p228
      %s230 = ssub.s32 %s28, %s40
      %s231 = ssub.s32 %s29, %s36
      %s232 = sor.u32 %s230, %s231
      %p233 = scmp.eq.s32.totalorder %s232, 0
      %s235 = sadd.s32 %s234, 1
      %s236 = scalar_select %p233, %s234, %s235
      %p239 = pneg %p233
      %p240 = scmp.eq.s32.totalorder %s21, 1
      %p241 = por %p239, %p240
      %p242 = scmp.ne.s32.totalorder %s234, %s237
      %p243 = scmp.eq.s32.totalorder %s21, 0
      %p244 = por %p242, %p243
      %p245 = scmp.ne.s32.totalorder %s234, %s237
      %p246 = scmp.eq.s32.totalorder %s26, 1
      %p247 = por %p245, %p246
      %p248 = scmp.ne.s32.totalorder %s237, %s238
      %p249 = scmp.eq.s32.totalorder %s26, 0
      %p250 = por %p248, %p249
      %p251 = scmp.ne.s32.totalorder %s237, %s238
      %p252 = scmp.eq.s32.totalorder %s27, 1
      %p253 = por %p251, %p252
      %p255 = scmp.ne.s32.totalorder %s238, %s254
      %p256 = scmp.eq.s32.totalorder %s27, 0
      %p257 = por %p255, %p256
      %p258 = scmp.le.s32.totalorder 1, %s21
      %p259 = scmp.lt.s32.totalorder %s21, 3
      %p260 = pnand %p258, %p259
      %p261 = pneg %p260
      // Predicated region
      $region9: #{tpu_custom_call.1} parent=5 // pred_check
        _
      $region10: #{tpu_custom_call.1} parent=5 // pred_check_branch
        %263 = sbr.rel (%p260) target = $region12
      $region11: #{tpu_custom_call.1} parent=5 // pred_region
        %s264 = ssub.s32 %s21, 1
        // Predicated region
        $region13: #{tpu_custom_call.1} parent=11 // pred_check
          %p265 = pneg %p82
        $region14: #{tpu_custom_call.1} parent=11 // pred_check_branch
          %267 = sbr.rel (%p265) target = $region16
        $region15: #{tpu_custom_call.1} parent=11 // pred_region
          _
        $region16: #{tpu_custom_call.1} parent=11 // pred_fallthru
          _
        // Predicated region
        $region17: #{tpu_custom_call.1} parent=11 // pred_check
          %p268 = pneg %p103
        $region18: #{tpu_custom_call.1} parent=11 // pred_check_branch
          %270 = sbr.rel (%p268) target = $region20
        $region19: #{tpu_custom_call.1} parent=11 // pred_region
          _
        $region20: #{tpu_custom_call.1} parent=11 // pred_fallthru
          _
        // Predicated region
        $region21: #{tpu_custom_call.1} parent=11 // pred_check
          %p271 = pneg %p124
        $region22: #{tpu_custom_call.1} parent=11 // pred_check_branch
          %273 = sbr.rel (%p271) target = $region24
        $region23: #{tpu_custom_call.1} parent=11 // pred_region
          _
        $region24: #{tpu_custom_call.1} parent=11 // pred_fallthru
          _
        // Predicated region
        $region25: #{tpu_custom_call.1} parent=11 // pred_check
          %p274 = pneg %p145
        $region26: #{tpu_custom_call.1} parent=11 // pred_check_branch
          %276 = sbr.rel (%p274) target = $region28
        $region27: #{tpu_custom_call.1} parent=11 // pred_region
          _
        $region28: #{tpu_custom_call.1} parent=11 // pred_fallthru
          _
        // Predicated region
        $region29: #{tpu_custom_call.1} parent=11 // pred_check
          %p277 = pneg %p166
        $region30: #{tpu_custom_call.1} parent=11 // pred_check_branch
          %279 = sbr.rel (%p277) target = $region32
        $region31: #{tpu_custom_call.1} parent=11 // pred_region
          _
        $region32: #{tpu_custom_call.1} parent=11 // pred_fallthru
          _
      $region12: #{tpu_custom_call.1} parent=5 // pred_fallthru
        _
      %p280 = scmp.lt.s32.totalorder %s21, 2
      // Predicated region
      $region33: #{tpu_custom_call.1} parent=5 // pred_check
        %p281 = pneg %p280
      $region34: #{tpu_custom_call.1} parent=5 // pred_check_branch
        %283 = sbr.rel (%p281) target = $region36
      $region35: #{tpu_custom_call.1} parent=5 // pred_region
        // Predicated region
        $region37: #{tpu_custom_call.1} parent=35 // pred_check
          %p284 = pneg %p55
        $region38: #{tpu_custom_call.1} parent=35 // pred_check_branch
          %286 = sbr.rel (%p284) target = $region40
        $region39: #{tpu_custom_call.1} parent=35 // pred_region
          %p287 = scmp.lt.s32.totalorder %s28, 1
          %s288 = scalar_select %p287, %s28, 1
          %p289 = scmp.lt.s32.totalorder %s29, 0
          %s290 = scalar_select %p289, %s29, 0
          %s291 = sadd.s32 %s290, %s288
          %s292 = smul.addr %s291, 8
          %s293 = scalar_lea.vmem %s0, %s292
        $region40: #{tpu_custom_call.1} parent=35 // pred_fallthru
          _
      $region36: #{tpu_custom_call.1} parent=5 // pred_fallthru
        _
      %p294 = scmp.le.s32.totalorder 1, %s21
      %p295 = scmp.lt.s32.totalorder %s21, 3
      %p296 = pnand %p294, %p295
      %p297 = pneg %p296
      // Predicated region
      $region41: #{tpu_custom_call.1} parent=5 // pred_check
        _
      $region42: #{tpu_custom_call.1} parent=5 // pred_check_branch
        %299 = sbr.rel (%p296) target = $region44
      $region43: #{tpu_custom_call.1} parent=5 // pred_region
        %s300 = ssub.s32 %s21, 1
        %p301 = scmp.lt.s32.totalorder %s30, 1
        %s302 = scalar_select %p301, %s30, 1
        %p303 = scmp.lt.s32.totalorder %s31, 0
        %s304 = scalar_select %p303, %s31, 0
        %s305 = sadd.s32 %s304, %s302
        %s306 = smul.addr %s305, 8
        %s307 = scalar_lea.vmem %s0, %s306
        %p308 = pneg %p61
        %p309 = pneg %p58
        %p310 = pneg %p82
        %p311 = pneg %p79
        %p312 = pneg %p103
        %p313 = pneg %p100
        %p314 = pneg %p124
        %p315 = pneg %p121
        %p316 = pneg %p145
        %p317 = pneg %p142
        %p318 = pneg %p166
        %p319 = pneg %p163
        %p320 = pneg %p194
        %p321 = pneg %p191
        %s322 = sand.u32 %s181, 1
        %s323 = scalar_lea.sflag [#allocation3], %s322
        %s324 = sand.u32 %s181, 1
        %s325 = smul.addr %s324, 16
        %s326 = scalar_lea.vmem [#allocation2], %s325
        %p327 = pneg %p222
        %p328 = pneg %p219
        %s329 = sand.u32 %s26, 1
        %s330 = scalar_lea.sflag [#allocation5], %s329
        %s331 = sand.u32 %s209, 1
        %s332 = smul.addr %s331, 16
        %s333 = scalar_lea.vmem [#allocation4], %s332
        %p334 = pneg %p250
        %p335 = pneg %p247
        %s336 = sand.u32 %s26, 1
        %s337 = scalar_lea.sflag [#allocation5], %s336
        %s338 = sand.u32 %s237, 1
        %s339 = smul.addr %s338, 16
        %s340 = scalar_lea.vmem [#allocation6], %s339
        %p341 = scmp.lt.s32.totalorder %s30, 1
        %s342 = scalar_select %p341, %s30, 1
        %p343 = scmp.lt.s32.totalorder %s31, 0
        %s344 = scalar_select %p343, %s31, 0
        %s345 = sadd.s32 %s344, %s342
        %s346 = smul.addr %s345, 8
        %s347 = scalar_lea.vmem %s0, %s346
        %v349 = vld [vmem:[%s347] sm:$0xff]
        %v350 = vld [vmem:[%s1] sm:$0x1]
        %v351 = vld [vmem:[%s2] sm:$0x1]
        %vm352 = vcmask 261120
        %v353 = vsel %vm352, %v349, 0.0
        %354 = vadd.xlane.f32.xlu0 %v353
        %v355 = vpop.xlane.xlu0 %354
        %v356 = vrcp.pop 32.0
        %v357 = vmul.f32 %v355, %v356
        %v358 = vsub.f32 %v349, %v357
        %v359 = vmul.f32 %v358, %v358
        %v360 = vsel %vm352, %v359, 0.0
        %361 = vadd.xlane.f32.xlu0 %v360
        %v362 = vpop.xlane.xlu0 %361
        %v363 = vmul.f32 %v362, %v356
        %v364 = vadd.f32 %v363, 1e-05
        %v365 = vrsqrt.pop %v364
        %v366 = vmul.f32 %v358, %v365
        %v368 = vlaneseq
        %v369 = vshrl.u32 %v368, 7
        %v370 = vsub.s32 0, %v369
        %v371 = vrot.slane %v350, %v370
        %v373 = vmul.f32 %v366, %v371
        %v375 = vlaneseq
        %v376 = vshrl.u32 %v375, 7
        %v377 = vsub.s32 0, %v376
        %v378 = vrot.slane %v351, %v377
        %v380 = vadd.f32 %v373, %v378
        %v381 = vpack.c.bf16 %v380, %v380
        %v382 = vld [vmem:[%s3] sm:$0xf]
        %v383 = vld [vmem:[%s3 + $0x4] sm:$0xf]
        %v384 = vld [vmem:[%s3 + $0x8] sm:$0xf]
        %v385 = vld [vmem:[%s3 + $0xc] sm:$0xf]
        %v390 = vunpack.c.l.b16 %v382
        %v391 = vunpack.c.l.b16 %v383
        %v392 = vunpack.c.l.b16 %v384
        %v393 = vunpack.c.l.b16 %v385
        %v394 = vpack.c.b16 %v391, %v390
        %v395 = vpack.c.b16 %v393, %v392
        %v399 = vsel %vm352, %v381, 0
        %401 = vmatprep.subr.bf16.mxu0 0
        %402 = vmatpush1.bf16.msra.mxu0 %v394
        %403 = vmatprep.subr.bf16.mxu0 0
        %404 = vmatpush1.bf16.msra.mxu0 %v395
        %405 = vmatprep.subr.bf16.mxu0 0
        %406 = vmatpush1.bf16.msra.mxu0 0
        %407 = vmatprep.subr.bf16.mxu0 0
        %408 = vmatpush1.bf16.msra.mxu0 0
        %409 = vmatprep.subr.bf16.mxu0 0
        %410 = vmatpush1.bf16.msra.mxu0 0
        %411 = vmatprep.subr.bf16.mxu0 0
        %412 = vmatpush1.bf16.msra.mxu0 0
        %413 = vmatprep.subr.bf16.mxu0 0
        %414 = vmatpush1.bf16.msra.mxu0 0
        %415 = vmatprep.subr.bf16.mxu0 0
        %416 = vmatpush1.bf16.msra.mxu0 0
        %417 = vmatprep.subr.bf16.mxu0 0
        %418 = vmatpush1.bf16.msra.mxu0 0
        %419 = vmatprep.subr.bf16.mxu0 0
        %420 = vmatpush1.bf16.msra.mxu0 0
        %421 = vmatprep.subr.bf16.mxu0 0
        %422 = vmatpush1.bf16.msra.mxu0 0
        %423 = vmatprep.subr.bf16.mxu0 0
        %424 = vmatpush1.bf16.msra.mxu0 0
        %425 = vmatprep.subr.bf16.mxu0 0
        %426 = vmatpush1.bf16.msra.mxu0 0
        %427 = vmatprep.subr.bf16.mxu0 0
        %428 = vmatpush1.bf16.msra.mxu0 0
        %429 = vmatprep.subr.bf16.mxu0 0
        %430 = vmatpush1.bf16.msra.mxu0 0
        %431 = vmatprep.subr.bf16.mxu0 0
        %432 = vmatpush1.bf16.msra.mxu0 0
        %433 = vmatprep.mubr.bf16.mxu0 0
        %434 = vmatmul.mubr.bf16.gmra.mrb[0].mxu0 %v399
        %v435 = vpop.f32.mrb[0].mxu0
        %v436 = vadd.f32 0.0, %v435
        %v437 = vpop.f32.mrb[0].mxu0
        %v438 = vpop.f32.mrb[0].mxu0
        %v439 = vpop.f32.mrb[0].mxu0
        %440 = vdwg.mxu0
        %v441 = vpack.c.bf16 %v436, %v436
        %vm442 = vcmask 60416
        %443 = vst.msk [vmem:[%s326] sm:$0xf] %vm442, %v441
        %v444 = vld [vmem:[%s4] sm:$0xf]
        %v445 = vld [vmem:[%s4 + $0x4] sm:$0xf]
        %v446 = vld [vmem:[%s4 + $0x8] sm:$0xf]
        %v447 = vld [vmem:[%s4 + $0xc] sm:$0xf]
        %v452 = vunpack.c.l.b16 %v444
        %v453 = vunpack.c.l.b16 %v445
        %v454 = vunpack.c.l.b16 %v446
        %v455 = vunpack.c.l.b16 %v447
        %v456 = vpack.c.b16 %v453, %v452
        %v457 = vpack.c.b16 %v455, %v454
        %460 = vmatprep.subr.bf16.mxu0 0
        %461 = vmatpush1.bf16.msra.mxu0 %v456
        %462 = vmatprep.subr.bf16.mxu0 0
        %463 = vmatpush1.bf16.msra.mxu0 %v457
        %464 = vmatprep.subr.bf16.mxu0 0
        %465 = vmatpush1.bf16.msra.mxu0 0
        %466 = vmatprep.subr.bf16.mxu0 0
        %467 = vmatpush1.bf16.msra.mxu0 0
        %468 = vmatprep.subr.bf16.mxu0 0
        %469 = vmatpush1.bf16.msra.mxu0 0
        %470 = vmatprep.subr.bf16.mxu0 0
        %471 = vmatpush1.bf16.msra.mxu0 0
        %472 = vmatprep.subr.bf16.mxu0 0
        %473 = vmatpush1.bf16.msra.mxu0 0
        %474 = vmatprep.subr.bf16.mxu0 0
        %475 = vmatpush1.bf16.msra.mxu0 0
        %476 = vmatprep.subr.bf16.mxu0 0
        %477 = vmatpush1.bf16.msra.mxu0 0
        %478 = vmatprep.subr.bf16.mxu0 0
        %479 = vmatpush1.bf16.msra.mxu0 0
        %480 = vmatprep.subr.bf16.mxu0 0
        %481 = vmatpush1.bf16.msra.mxu0 0
        %482 = vmatprep.subr.bf16.mxu0 0
        %483 = vmatpush1.bf16.msra.mxu0 0
        %484 = vmatprep.subr.bf16.mxu0 0
        %485 = vmatpush1.bf16.msra.mxu0 0
        %486 = vmatprep.subr.bf16.mxu0 0
        %487 = vmatpush1.bf16.msra.mxu0 0
        %488 = vmatprep.subr.bf16.mxu0 0
        %489 = vmatpush1.bf16.msra.mxu0 0
        %490 = vmatprep.subr.bf16.mxu0 0
        %491 = vmatpush1.bf16.msra.mxu0 0
        %492 = vmatprep.mubr.bf16.mxu0 0
        %493 = vmatmul.mubr.bf16.gmra.mrb[0].mxu0 %v399
        %v494 = vpop.f32.mrb[0].mxu0
        %v495 = vadd.f32 0.0, %v494
        %v496 = vpop.f32.mrb[0].mxu0
        %v497 = vpop.f32.mrb[0].mxu0
        %v498 = vpop.f32.mrb[0].mxu0
        %499 = vdwg.mxu0
        %v500 = vpack.c.bf16 %v495, %v495
        %501 = vst.msk [vmem:[%s333] sm:$0xf] %vm442, %v500
        %v502 = vld [vmem:[%s5] sm:$0xf]
        %v503 = vld [vmem:[%s5 + $0x4] sm:$0xf]
        %v504 = vld [vmem:[%s5 + $0x8] sm:$0xf]
        %v505 = vld [vmem:[%s5 + $0xc] sm:$0xf]
        %v510 = vunpack.c.l.b16 %v502
        %v511 = vunpack.c.l.b16 %v503
        %v512 = vunpack.c.l.b16 %v504
        %v513 = vunpack.c.l.b16 %v505
        %v514 = vpack.c.b16 %v511, %v510
        %v515 = vpack.c.b16 %v513, %v512
        %518 = vmatprep.subr.bf16.mxu0 0
        %519 = vmatpush1.bf16.msra.mxu0 %v514
        %520 = vmatprep.subr.bf16.mxu0 0
        %521 = vmatpush1.bf16.msra.mxu0 %v515
        %522 = vmatprep.subr.bf16.mxu0 0
        %523 = vmatpush1.bf16.msra.mxu0 0
        %524 = vmatprep.subr.bf16.mxu0 0
        %525 = vmatpush1.bf16.msra.mxu0 0
        %526 = vmatprep.subr.bf16.mxu0 0
        %527 = vmatpush1.bf16.msra.mxu0 0
        %528 = vmatprep.subr.bf16.mxu0 0
        %529 = vmatpush1.bf16.msra.mxu0 0
        %530 = vmatprep.subr.bf16.mxu0 0
        %531 = vmatpush1.bf16.msra.mxu0 0
        %532 = vmatprep.subr.bf16.mxu0 0
        %533 = vmatpush1.bf16.msra.mxu0 0
        %534 = vmatprep.subr.bf16.mxu0 0
        %535 = vmatpush1.bf16.msra.mxu0 0
        %536 = vmatprep.subr.bf16.mxu0 0
        %537 = vmatpush1.bf16.msra.mxu0 0
        %538 = vmatprep.subr.bf16.mxu0 0
        %539 = vmatpush1.bf16.msra.mxu0 0
        %540 = vmatprep.subr.bf16.mxu0 0
        %541 = vmatpush1.bf16.msra.mxu0 0
        %542 = vmatprep.subr.bf16.mxu0 0
        %543 = vmatpush1.bf16.msra.mxu0 0
        %544 = vmatprep.subr.bf16.mxu0 0
        %545 = vmatpush1.bf16.msra.mxu0 0
        %546 = vmatprep.subr.bf16.mxu0 0
        %547 = vmatpush1.bf16.msra.mxu0 0
        %548 = vmatprep.subr.bf16.mxu0 0
        %549 = vmatpush1.bf16.msra.mxu0 0
        %550 = vmatprep.mubr.bf16.mxu0 0
        %551 = vmatmul.mubr.bf16.gmra.mrb[0].mxu0 %v399
        %v552 = vpop.f32.mrb[0].mxu0
        %v553 = vadd.f32 0.0, %v552
        %v554 = vpop.f32.mrb[0].mxu0
        %v555 = vpop.f32.mrb[0].mxu0
        %v556 = vpop.f32.mrb[0].mxu0
        %557 = vdwg.mxu0
        %v558 = vpack.c.bf16 %v553, %v553
        %559 = vst.msk [vmem:[%s340] sm:$0xf] %vm442, %v558
        %s560 = scalar_lea.vmem %s3, 16
        %v561 = vld [vmem:[%s560] sm:$0xf]
        %v562 = vld [vmem:[%s560 + $0x4] sm:$0xf]
        %v563 = vld [vmem:[%s560 + $0x8] sm:$0xf]
        %v564 = vld [vmem:[%s560 + $0xc] sm:$0xf]
        %v569 = vunpack.c.l.b16 %v561
        %v570 = vunpack.c.l.b16 %v562
        %v571 = vunpack.c.l.b16 %v563
        %v572 = vunpack.c.l.b16 %v564
        %v573 = vpack.c.b16 %v570, %v569
        %v574 = vpack.c.b16 %v572, %v571
        %577 = vmatprep.subr.bf16.mxu0 0
        %578 = vmatpush1.bf16.msra.mxu0 %v573
        %579 = vmatprep.subr.bf16.mxu0 0
        %580 = vmatpush1.bf16.msra.mxu0 %v574
        %581 = vmatprep.subr.bf16.mxu0 0
        %582 = vmatpush1.bf16.msra.mxu0 0
        %583 = vmatprep.subr.bf16.mxu0 0
        %584 = vmatpush1.bf16.msra.mxu0 0
        %585 = vmatprep.subr.bf16.mxu0 0
        %586 = vmatpush1.bf16.msra.mxu0 0
        %587 = vmatprep.subr.bf16.mxu0 0
        %588 = vmatpush1.bf16.msra.mxu0 0
        %589 = vmatprep.subr.bf16.mxu0 0
        %590 = vmatpush1.bf16.msra.mxu0 0
        %591 = vmatprep.subr.bf16.mxu0 0
        %592 = vmatpush1.bf16.msra.mxu0 0
        %593 = vmatprep.subr.bf16.mxu0 0
        %594 = vmatpush1.bf16.msra.mxu0 0
        %595 = vmatprep.subr.bf16.mxu0 0
        %596 = vmatpush1.bf16.msra.mxu0 0
        %597 = vmatprep.subr.bf16.mxu0 0
        %598 = vmatpush1.bf16.msra.mxu0 0
        %599 = vmatprep.subr.bf16.mxu0 0
        %600 = vmatpush1.bf16.msra.mxu0 0
        %601 = vmatprep.subr.bf16.mxu0 0
        %602 = vmatpush1.bf16.msra.mxu0 0
        %603 = vmatprep.subr.bf16.mxu0 0
        %604 = vmatpush1.bf16.msra.mxu0 0
        %605 = vmatprep.subr.bf16.mxu0 0
        %606 = vmatpush1.bf16.msra.mxu0 0
        %607 = vmatprep.subr.bf16.mxu0 0
        %608 = vmatpush1.bf16.msra.mxu0 0
        %609 = vmatprep.mubr.bf16.mxu0 0
        %610 = vmatmul.mubr.bf16.gmra.mrb[0].mxu0 %v399
        %v611 = vpop.f32.mrb[0].mxu0
        %v612 = vadd.f32 0.0, %v611
        %v613 = vpop.f32.mrb[0].mxu0
        %v614 = vpop.f32.mrb[0].mxu0
        %v615 = vpop.f32.mrb[0].mxu0
        %616 = vdwg.mxu0
        %v617 = vpack.c.bf16 %v612, %v612
        %s618 = scalar_lea.vmem %s326, 4 [#allocation2]
        %619 = vst.msk [vmem:[%s618] sm:$0xf] %vm442, %v617
        %s620 = scalar_lea.vmem %s4, 16
        %v621 = vld [vmem:[%s620] sm:$0xf]
        %v622 = vld [vmem:[%s620 + $0x4] sm:$0xf]
        %v623 = vld [vmem:[%s620 + $0x8] sm:$0xf]
        %v624 = vld [vmem:[%s620 + $0xc] sm:$0xf]
        %v629 = vunpack.c.l.b16 %v621
        %v630 = vunpack.c.l.b16 %v622
        %v631 = vunpack.c.l.b16 %v623
        %v632 = vunpack.c.l.b16 %v624
        %v633 = vpack.c.b16 %v630, %v629
        %v634 = vpack.c.b16 %v632, %v631
        %637 = vmatprep.subr.bf16.mxu0 0
        %638 = vmatpush1.bf16.msra.mxu0 %v633
        %639 = vmatprep.subr.bf16.mxu0 0
        %640 = vmatpush1.bf16.msra.mxu0 %v634
        %641 = vmatprep.subr.bf16.mxu0 0
        %642 = vmatpush1.bf16.msra.mxu0 0
        %643 = vmatprep.subr.bf16.mxu0 0
        %644 = vmatpush1.bf16.msra.mxu0 0
        %645 = vmatprep.subr.bf16.mxu0 0
        %646 = vmatpush1.bf16.msra.mxu0 0
        %647 = vmatprep.subr.bf16.mxu0 0
        %648 = vmatpush1.bf16.msra.mxu0 0
        %649 = vmatprep.subr.bf16.mxu0 0
        %650 = vmatpush1.bf16.msra.mxu0 0
        %651 = vmatprep.subr.bf16.mxu0 0
        %652 = vmatpush1.bf16.msra.mxu0 0
        %653 = vmatprep.subr.bf16.mxu0 0
        %654 = vmatpush1.bf16.msra.mxu0 0
        %655 = vmatprep.subr.bf16.mxu0 0
        %656 = vmatpush1.bf16.msra.mxu0 0
        %657 = vmatprep.subr.bf16.mxu0 0
        %658 = vmatpush1.bf16.msra.mxu0 0
        %659 = vmatprep.subr.bf16.mxu0 0
        %660 = vmatpush1.bf16.msra.mxu0 0
        %661 = vmatprep.subr.bf16.mxu0 0
        %662 = vmatpush1.bf16.msra.mxu0 0
        %663 = vmatprep.subr.bf16.mxu0 0
        %664 = vmatpush1.bf16.msra.mxu0 0
        %665 = vmatprep.subr.bf16.mxu0 0
        %666 = vmatpush1.bf16.msra.mxu0 0
        %667 = vmatprep.subr.bf16.mxu0 0
        %668 = vmatpush1.bf16.msra.mxu0 0
        %669 = vmatprep.mubr.bf16.mxu0 0
        %670 = vmatmul.mubr.bf16.gmra.mrb[0].mxu0 %v399
        %v671 = vpop.f32.mrb[0].mxu0
        %v672 = vadd.f32 0.0, %v671
        %v673 = vpop.f32.mrb[0].mxu0
        %v674 = vpop.f32.mrb[0].mxu0
        %v675 = vpop.f32.mrb[0].mxu0
        %676 = vdwg.mxu0
        %v677 = vpack.c.bf16 %v672, %v672
        %s678 = scalar_lea.vmem %s333, 4 [#allocation4]
        %679 = vst.msk [vmem:[%s678] sm:$0xf] %vm442, %v677
        %s680 = scalar_lea.vmem %s5, 16
        %v681 = vld [vmem:[%s680] sm:$0xf]
        %v682 = vld [vmem:[%s680 + $0x4] sm:$0xf]
        %v683 = vld [vmem:[%s680 + $0x8] sm:$0xf]
        %v684 = vld [vmem:[%s680 + $0xc] sm:$0xf]
        %v689 = vunpack.c.l.b16 %v681
        %v690 = vunpack.c.l.b16 %v682
        %v691 = vunpack.c.l.b16 %v683
        %v692 = vunpack.c.l.b16 %v684
        %v693 = vpack.c.b16 %v690, %v689
        %v694 = vpack.c.b16 %v692, %v691
        %697 = vmatprep.subr.bf16.mxu0 0
        %698 = vmatpush1.bf16.msra.mxu0 %v693
        %699 = vmatprep.subr.bf16.mxu0 0
        %700 = vmatpush1.bf16.msra.mxu0 %v694
        %701 = vmatprep.subr.bf16.mxu0 0
        %702 = vmatpush1.bf16.msra.mxu0 0
        %703 = vmatprep.subr.bf16.mxu0 0
        %704 = vmatpush1.bf16.msra.mxu0 0
        %705 = vmatprep.subr.bf16.mxu0 0
        %706 = vmatpush1.bf16.msra.mxu0 0
        %707 = vmatprep.subr.bf16.mxu0 0
        %708 = vmatpush1.bf16.msra.mxu0 0
        %709 = vmatprep.subr.bf16.mxu0 0
        %710 = vmatpush1.bf16.msra.mxu0 0
        %711 = vmatprep.subr.bf16.mxu0 0
        %712 = vmatpush1.bf16.msra.mxu0 0
        %713 = vmatprep.subr.bf16.mxu0 0
        %714 = vmatpush1.bf16.msra.mxu0 0
        %715 = vmatprep.subr.bf16.mxu0 0
        %716 = vmatpush1.bf16.msra.mxu0 0
        %717 = vmatprep.subr.bf16.mxu0 0
        %718 = vmatpush1.bf16.msra.mxu0 0
        %719 = vmatprep.subr.bf16.mxu0 0
        %720 = vmatpush1.bf16.msra.mxu0 0
        %721 = vmatprep.subr.bf16.mxu0 0
        %722 = vmatpush1.bf16.msra.mxu0 0
        %723 = vmatprep.subr.bf16.mxu0 0
        %724 = vmatpush1.bf16.msra.mxu0 0
        %725 = vmatprep.subr.bf16.mxu0 0
        %726 = vmatpush1.bf16.msra.mxu0 0
        %727 = vmatprep.subr.bf16.mxu0 0
        %728 = vmatpush1.bf16.msra.mxu0 0
        %729 = vmatprep.mubr.bf16.mxu0 0
        %730 = vmatmul.mubr.bf16.gmra.mrb[0].mxu0 %v399
        %v731 = vpop.f32.mrb[0].mxu0
        %v732 = vadd.f32 0.0, %v731
        %v733 = vpop.f32.mrb[0].mxu0
        %v734 = vpop.f32.mrb[0].mxu0
        %v735 = vpop.f32.mrb[0].mxu0
        %736 = vdwg.mxu0
        %v737 = vpack.c.bf16 %v732, %v732
        %s738 = scalar_lea.vmem %s340, 4 [#allocation6]
        %739 = vst.msk [vmem:[%s738] sm:$0xf] %vm442, %v737
        %s740 = scalar_lea.vmem %s3, 32
        %v741 = vld [vmem:[%s740] sm:$0xf]
        %v742 = vld [vmem:[%s740 + $0x4] sm:$0xf]
        %v743 = vld [vmem:[%s740 + $0x8] sm:$0xf]
        %v744 = vld [vmem:[%s740 + $0xc] sm:$0xf]
        %v749 = vunpack.c.l.b16 %v741
        %v750 = vunpack.c.l.b16 %v742
        %v751 = vunpack.c.l.b16 %v743
        %v752 = vunpack.c.l.b16 %v744
        %v753 = vpack.c.b16 %v750, %v749
        %v754 = vpack.c.b16 %v752, %v751
        %757 = vmatprep.subr.bf16.mxu0 0
        %758 = vmatpush1.bf16.msra.mxu0 %v753
        %759 = vmatprep.subr.bf16.mxu0 0
        %760 = vmatpush1.bf16.msra.mxu0 %v754
        %761 = vmatprep.subr.bf16.mxu0 0
        %762 = vmatpush1.bf16.msra.mxu0 0
        %763 = vmatprep.subr.bf16.mxu0 0
        %764 = vmatpush1.bf16.msra.mxu0 0
        %765 = vmatprep.subr.bf16.mxu0 0
        %766 = vmatpush1.bf16.msra.mxu0 0
        %767 = vmatprep.subr.bf16.mxu0 0
        %768 = vmatpush1.bf16.msra.mxu0 0
        %769 = vmatprep.subr.bf16.mxu0 0
        %770 = vmatpush1.bf16.msra.mxu0 0
        %771 = vmatprep.subr.bf16.mxu0 0
        %772 = vmatpush1.bf16.msra.mxu0 0
        %773 = vmatprep.subr.bf16.mxu0 0
        %774 = vmatpush1.bf16.msra.mxu0 0
        %775 = vmatprep.subr.bf16.mxu0 0
        %776 = vmatpush1.bf16.msra.mxu0 0
        %777 = vmatprep.subr.bf16.mxu0 0
        %778 = vmatpush1.bf16.msra.mxu0 0
        %779 = vmatprep.subr.bf16.mxu0 0
        %780 = vmatpush1.bf16.msra.mxu0 0
        %781 = vmatprep.subr.bf16.mxu0 0
        %782 = vmatpush1.bf16.msra.mxu0 0
        %783 = vmatprep.subr.bf16.mxu0 0
        %784 = vmatpush1.bf16.msra.mxu0 0
        %785 = vmatprep.subr.bf16.mxu0 0
        %786 = vmatpush1.bf16.msra.mxu0 0
        %787 = vmatprep.subr.bf16.mxu0 0
        %788 = vmatpush1.bf16.msra.mxu0 0
        %789 = vmatprep.mubr.bf16.mxu0 0
        %790 = vmatmul.mubr.bf16.gmra.mrb[0].mxu0 %v399
        %v791 = vpop.f32.mrb[0].mxu0
        %v792 = vadd.f32 0.0, %v791
        %v793 = vpop.f32.mrb[0].mxu0
        %v794 = vpop.f32.mrb[0].mxu0
        %v795 = vpop.f32.mrb[0].mxu0
        %796 = vdwg.mxu0
        %v797 = vpack.c.bf16 %v792, %v792
        %s798 = scalar_lea.vmem %s326, 8 [#allocation2]
        %799 = vst.msk [vmem:[%s798] sm:$0xf] %vm442, %v797
        %s800 = scalar_lea.vmem %s4, 32
        %v801 = vld [vmem:[%s800] sm:$0xf]
        %v802 = vld [vmem:[%s800 + $0x4] sm:$0xf]
        %v803 = vld [vmem:[%s800 + $0x8] sm:$0xf]
        %v804 = vld [vmem:[%s800 + $0xc] sm:$0xf]
        %v809 = vunpack.c.l.b16 %v801
        %v810 = vunpack.c.l.b16 %v802
        %v811 = vunpack.c.l.b16 %v803
        %v812 = vunpack.c.l.b16 %v804
        %v813 = vpack.c.b16 %v810, %v809
        %v814 = vpack.c.b16 %v812, %v811
        %817 = vmatprep.subr.bf16.mxu0 0
        %818 = vmatpush1.bf16.msra.mxu0 %v813
        %819 = vmatprep.subr.bf16.mxu0 0
        %820 = vmatpush1.bf16.msra.mxu0 %v814
        %821 = vmatprep.subr.bf16.mxu0 0
        %822 = vmatpush1.bf16.msra.mxu0 0
        %823 = vmatprep.subr.bf16.mxu0 0
        %824 = vmatpush1.bf16.msra.mxu0 0
        %825 = vmatprep.subr.bf16.mxu0 0
        %826 = vmatpush1.bf16.msra.mxu0 0
        %827 = vmatprep.subr.bf16.mxu0 0
        %828 = vmatpush1.bf16.msra.mxu0 0
        %829 = vmatprep.subr.bf16.mxu0 0
        %830 = vmatpush1.bf16.msra.mxu0 0
        %831 = vmatprep.subr.bf16.mxu0 0
        %832 = vmatpush1.bf16.msra.mxu0 0
        %833 = vmatprep.subr.bf16.mxu0 0
        %834 = vmatpush1.bf16.msra.mxu0 0
        %835 = vmatprep.subr.bf16.mxu0 0
        %836 = vmatpush1.bf16.msra.mxu0 0
        %837 = vmatprep.subr.bf16.mxu0 0
        %838 = vmatpush1.bf16.msra.mxu0 0
        %839 = vmatprep.subr.bf16.mxu0 0
        %840 = vmatpush1.bf16.msra.mxu0 0
        %841 = vmatprep.subr.bf16.mxu0 0
        %842 = vmatpush1.bf16.msra.mxu0 0
        %843 = vmatprep.subr.bf16.mxu0 0
        %844 = vmatpush1.bf16.msra.mxu0 0
        %845 = vmatprep.subr.bf16.mxu0 0
        %846 = vmatpush1.bf16.msra.mxu0 0
        %847 = vmatprep.subr.bf16.mxu0 0
        %848 = vmatpush1.bf16.msra.mxu0 0
        %849 = vmatprep.mubr.bf16.mxu0 0
        %850 = vmatmul.mubr.bf16.gmra.mrb[0].mxu0 %v399
        %v851 = vpop.f32.mrb[0].mxu0
        %v852 = vadd.f32 0.0, %v851
        %v853 = vpop.f32.mrb[0].mxu0
        %v854 = vpop.f32.mrb[0].mxu0
        %v855 = vpop.f32.mrb[0].mxu0
        %856 = vdwg.mxu0
        %v857 = vpack.c.bf16 %v852, %v852
        %s858 = scalar_lea.vmem %s333, 8 [#allocation4]
        %859 = vst.msk [vmem:[%s858] sm:$0xf] %vm442, %v857
        %s860 = scalar_lea.vmem %s5, 32
        %v861 = vld [vmem:[%s860] sm:$0xf]
        %v862 = vld [vmem:[%s860 + $0x4] sm:$0xf]
        %v863 = vld [vmem:[%s860 + $0x8] sm:$0xf]
        %v864 = vld [vmem:[%s860 + $0xc] sm:$0xf]
        %v869 = vunpack.c.l.b16 %v861
        %v870 = vunpack.c.l.b16 %v862
        %v871 = vunpack.c.l.b16 %v863
        %v872 = vunpack.c.l.b16 %v864
        %v873 = vpack.c.b16 %v870, %v869
        %v874 = vpack.c.b16 %v872, %v871
        %877 = vmatprep.subr.bf16.mxu0 0
        %878 = vmatpush1.bf16.msra.mxu0 %v873
        %879 = vmatprep.subr.bf16.mxu0 0
        %880 = vmatpush1.bf16.msra.mxu0 %v874
        %881 = vmatprep.subr.bf16.mxu0 0
        %882 = vmatpush1.bf16.msra.mxu0 0
        %883 = vmatprep.subr.bf16.mxu0 0
        %884 = vmatpush1.bf16.msra.mxu0 0
        %885 = vmatprep.subr.bf16.mxu0 0
        %886 = vmatpush1.bf16.msra.mxu0 0
        %887 = vmatprep.subr.bf16.mxu0 0
        %888 = vmatpush1.bf16.msra.mxu0 0
        %889 = vmatprep.subr.bf16.mxu0 0
        %890 = vmatpush1.bf16.msra.mxu0 0
        %891 = vmatprep.subr.bf16.mxu0 0
        %892 = vmatpush1.bf16.msra.mxu0 0
        %893 = vmatprep.subr.bf16.mxu0 0
        %894 = vmatpush1.bf16.msra.mxu0 0
        %895 = vmatprep.subr.bf16.mxu0 0
        %896 = vmatpush1.bf16.msra.mxu0 0
        %897 = vmatprep.subr.bf16.mxu0 0
        %898 = vmatpush1.bf16.msra.mxu0 0
        %899 = vmatprep.subr.bf16.mxu0 0
        %900 = vmatpush1.bf16.msra.mxu0 0
        %901 = vmatprep.subr.bf16.mxu0 0
        %902 = vmatpush1.bf16.msra.mxu0 0
        %903 = vmatprep.subr.bf16.mxu0 0
        %904 = vmatpush1.bf16.msra.mxu0 0
        %905 = vmatprep.subr.bf16.mxu0 0
        %906 = vmatpush1.bf16.msra.mxu0 0
        %907 = vmatprep.subr.bf16.mxu0 0
        %908 = vmatpush1.bf16.msra.mxu0 0
        %909 = vmatprep.mubr.bf16.mxu0 0
        %910 = vmatmul.mubr.bf16.gmra.mrb[0].mxu0 %v399
        %v911 = vpop.f32.mrb[0].mxu0
        %v912 = vadd.f32 0.0, %v911
        %v913 = vpop.f32.mrb[0].mxu0
        %v914 = vpop.f32.mrb[0].mxu0
        %v915 = vpop.f32.mrb[0].mxu0
        %916 = vdwg.mxu0
        %v917 = vpack.c.bf16 %v912, %v912
        %s918 = scalar_lea.vmem %s340, 8 [#allocation6]
        %919 = vst.msk [vmem:[%s918] sm:$0xf] %vm442, %v917
        %s920 = scalar_lea.vmem %s3, 48
        %v921 = vld [vmem:[%s920] sm:$0xf]
        %v922 = vld [vmem:[%s920 + $0x4] sm:$0xf]
        %v923 = vld [vmem:[%s920 + $0x8] sm:$0xf]
        %v924 = vld [vmem:[%s920 + $0xc] sm:$0xf]
        %v929 = vunpack.c.l.b16 %v921
        %v930 = vunpack.c.l.b16 %v922
        %v931 = vunpack.c.l.b16 %v923
        %v932 = vunpack.c.l.b16 %v924
        %v933 = vpack.c.b16 %v930, %v929
        %v934 = vpack.c.b16 %v932, %v931
        %937 = vmatprep.subr.bf16.mxu0 0
        %938 = vmatpush1.bf16.msra.mxu0 %v933
        %939 = vmatprep.subr.bf16.mxu0 0
        %940 = vmatpush1.bf16.msra.mxu0 %v934
        %941 = vmatprep.subr.bf16.mxu0 0
        %942 = vmatpush1.bf16.msra.mxu0 0
        %943 = vmatprep.subr.bf16.mxu0 0
        %944 = vmatpush1.bf16.msra.mxu0 0
        %945 = vmatprep.subr.bf16.mxu0 0
        %946 = vmatpush1.bf16.msra.mxu0 0
        %947 = vmatprep.subr.bf16.mxu0 0
        %948 = vmatpush1.bf16.msra.mxu0 0
        %949 = vmatprep.subr.bf16.mxu0 0
        %950 = vmatpush1.bf16.msra.mxu0 0
        %951 = vmatprep.subr.bf16.mxu0 0
        %952 = vmatpush1.bf16.msra.mxu0 0
        %953 = vmatprep.subr.bf16.mxu0 0
        %954 = vmatpush1.bf16.msra.mxu0 0
        %955 = vmatprep.subr.bf16.mxu0 0
        %956 = vmatpush1.bf16.msra.mxu0 0
        %957 = vmatprep.subr.bf16.mxu0 0
        %958 = vmatpush1.bf16.msra.mxu0 0
        %959 = vmatprep.subr.bf16.mxu0 0
        %960 = vmatpush1.bf16.msra.mxu0 0
        %961 = vmatprep.subr.bf16.mxu0 0
        %962 = vmatpush1.bf16.msra.mxu0 0
        %963 = vmatprep.subr.bf16.mxu0 0
        %964 = vmatpush1.bf16.msra.mxu0 0
        %965 = vmatprep.subr.bf16.mxu0 0
        %966 = vmatpush1.bf16.msra.mxu0 0
        %967 = vmatprep.subr.bf16.mxu0 0
        %968 = vmatpush1.bf16.msra.mxu0 0
        %969 = vmatprep.mubr.bf16.mxu0 0
        %970 = vmatmul.mubr.bf16.gmra.mrb[0].mxu0 %v399
        %v971 = vpop.f32.mrb[0].mxu0
        %v972 = vadd.f32 0.0, %v971
        %v973 = vpop.f32.mrb[0].mxu0
        %v974 = vpop.f32.mrb[0].mxu0
        %v975 = vpop.f32.mrb[0].mxu0
        %976 = vdwg.mxu0
        %v977 = vpack.c.bf16 %v972, %v972
        %s978 = scalar_lea.vmem %s326, 12 [#allocation2]
        %979 = vst.msk [vmem:[%s978] sm:$0xf] %vm442, %v977
        %s980 = scalar_lea.vmem %s4, 48
        %v981 = vld [vmem:[%s980] sm:$0xf]
        %v982 = vld [vmem:[%s980 + $0x4] sm:$0xf]
        %v983 = vld [vmem:[%s980 + $0x8] sm:$0xf]
        %v984 = vld [vmem:[%s980 + $0xc] sm:$0xf]
        %v989 = vunpack.c.l.b16 %v981
        %v990 = vunpack.c.l.b16 %v982
        %v991 = vunpack.c.l.b16 %v983
        %v992 = vunpack.c.l.b16 %v984
        %v993 = vpack.c.b16 %v990, %v989
        %v994 = vpack.c.b16 %v992, %v991
        %997 = vmatprep.subr.bf16.mxu0 0
        %998 = vmatpush1.bf16.msra.mxu0 %v993
        %999 = vmatprep.subr.bf16.mxu0 0
        %1000 = vmatpush1.bf16.msra.mxu0 %v994
        %1001 = vmatprep.subr.bf16.mxu0 0
        %1002 = vmatpush1.bf16.msra.mxu0 0
        %1003 = vmatprep.subr.bf16.mxu0 0
        %1004 = vmatpush1.bf16.msra.mxu0 0
        %1005 = vmatprep.subr.bf16.mxu0 0
        %1006 = vmatpush1.bf16.msra.mxu0 0
        %1007 = vmatprep.subr.bf16.mxu0 0
        %1008 = vmatpush1.bf16.msra.mxu0 0
        %1009 = vmatprep.subr.bf16.mxu0 0
        %1010 = vmatpush1.bf16.msra.mxu0 0
        %1011 = vmatprep.subr.bf16.mxu0 0
        %1012 = vmatpush1.bf16.msra.mxu0 0
        %1013 = vmatprep.subr.bf16.mxu0 0
        %1014 = vmatpush1.bf16.msra.mxu0 0
        %1015 = vmatprep.subr.bf16.mxu0 0
        %1016 = vmatpush1.bf16.msra.mxu0 0
        %1017 = vmatprep.subr.bf16.mxu0 0
        %1018 = vmatpush1.bf16.msra.mxu0 0
        %1019 = vmatprep.subr.bf16.mxu0 0
        %1020 = vmatpush1.bf16.msra.mxu0 0
        %1021 = vmatprep.subr.bf16.mxu0 0
        %1022 = vmatpush1.bf16.msra.mxu0 0
        %1023 = vmatprep.subr.bf16.mxu0 0
        %1024 = vmatpush1.bf16.msra.mxu0 0
        %1025 = vmatprep.subr.bf16.mxu0 0
        %1026 = vmatpush1.bf16.msra.mxu0 0
        %1027 = vmatprep.subr.bf16.mxu0 0
        %1028 = vmatpush1.bf16.msra.mxu0 0
        %1029 = vmatprep.mubr.bf16.mxu0 0
        %1030 = vmatmul.mubr.bf16.gmra.mrb[0].mxu0 %v399
        %v1031 = vpop.f32.mrb[0].mxu0
        %v1032 = vadd.f32 0.0, %v1031
        %v1033 = vpop.f32.mrb[0].mxu0
        %v1034 = vpop.f32.mrb[0].mxu0
        %v1035 = vpop.f32.mrb[0].mxu0
        %1036 = vdwg.mxu0
        %v1037 = vpack.c.bf16 %v1032, %v1032
        %s1038 = scalar_lea.vmem %s333, 12 [#allocation4]
        %1039 = vst.msk [vmem:[%s1038] sm:$0xf] %vm442, %v1037
        %s1040 = scalar_lea.vmem %s5, 48
        %v1041 = vld [vmem:[%s1040] sm:$0xf]
        %v1042 = vld [vmem:[%s1040 + $0x4] sm:$0xf]
        %v1043 = vld [vmem:[%s1040 + $0x8] sm:$0xf]
        %v1044 = vld [vmem:[%s1040 + $0xc] sm:$0xf]
        %v1049 = vunpack.c.l.b16 %v1041
        %v1050 = vunpack.c.l.b16 %v1042
        %v1051 = vunpack.c.l.b16 %v1043
        %v1052 = vunpack.c.l.b16 %v1044
        %v1053 = vpack.c.b16 %v1050, %v1049
        %v1054 = vpack.c.b16 %v1052, %v1051
        %1057 = vmatprep.subr.bf16.mxu0 0
        %1058 = vmatpush1.bf16.msra.mxu0 %v1053
        %1059 = vmatprep.subr.bf16.mxu0 0
        %1060 = vmatpush1.bf16.msra.mxu0 %v1054
        %1061 = vmatprep.subr.bf16.mxu0 0
        %1062 = vmatpush1.bf16.msra.mxu0 0
        %1063 = vmatprep.subr.bf16.mxu0 0
        %1064 = vmatpush1.bf16.msra.mxu0 0
        %1065 = vmatprep.subr.bf16.mxu0 0
        %1066 = vmatpush1.bf16.msra.mxu0 0
        %1067 = vmatprep.subr.bf16.mxu0 0
        %1068 = vmatpush1.bf16.msra.mxu0 0
        %1069 = vmatprep.subr.bf16.mxu0 0
        %1070 = vmatpush1.bf16.msra.mxu0 0
        %1071 = vmatprep.subr.bf16.mxu0 0
        %1072 = vmatpush1.bf16.msra.mxu0 0
        %1073 = vmatprep.subr.bf16.mxu0 0
        %1074 = vmatpush1.bf16.msra.mxu0 0
        %1075 = vmatprep.subr.bf16.mxu0 0
        %1076 = vmatpush1.bf16.msra.mxu0 0
        %1077 = vmatprep.subr.bf16.mxu0 0
        %1078 = vmatpush1.bf16.msra.mxu0 0
        %1079 = vmatprep.subr.bf16.mxu0 0
        %1080 = vmatpush1.bf16.msra.mxu0 0
        %1081 = vmatprep.subr.bf16.mxu0 0
        %1082 = vmatpush1.bf16.msra.mxu0 0
        %1083 = vmatprep.subr.bf16.mxu0 0
        %1084 = vmatpush1.bf16.msra.mxu0 0
        %1085 = vmatprep.subr.bf16.mxu0 0
        %1086 = vmatpush1.bf16.msra.mxu0 0
        %1087 = vmatprep.subr.bf16.mxu0 0
        %1088 = vmatpush1.bf16.msra.mxu0 0
        %1089 = vmatprep.mubr.bf16.mxu0 0
        %1090 = vmatmul.mubr.bf16.gmra.mrb[0].mxu0 %v399
        %v1091 = vpop.f32.mrb[0].mxu0
        %v1092 = vadd.f32 0.0, %v1091
        %v1093 = vpop.f32.mrb[0].mxu0
        %v1094 = vpop.f32.mrb[0].mxu0
        %v1095 = vpop.f32.mrb[0].mxu0
        %1096 = vdwg.mxu0
        %v1097 = vpack.c.bf16 %v1092, %v1092
        %s1098 = scalar_lea.vmem %s340, 12 [#allocation6]
        %1099 = vst.msk [vmem:[%s1098] sm:$0xf] %vm442, %v1097
        %s1100 = sand.u32 %s181, 1
        %s1101 = scalar_lea.sflag [#allocation3], %s1100
        %s1102 = sand.u32 %s181, 1
        %s1103 = smul.addr %s1102, 16
        %s1104 = scalar_lea.vmem [#allocation2], %s1103
        %s1105 = sand.u32 %s26, 1
        %s1106 = scalar_lea.sflag [#allocation5], %s1105
        %s1107 = sand.u32 %s209, 1
        %s1108 = smul.addr %s1107, 16
        %s1109 = scalar_lea.vmem [#allocation4], %s1108
        %s1110 = sand.u32 %s26, 1
        %s1111 = scalar_lea.sflag [#allocation5], %s1110
        %s1112 = sand.u32 %s237, 1
        %s1113 = smul.addr %s1112, 16
        %s1114 = scalar_lea.vmem [#allocation6], %s1113
        // Predicated region
        $region45: #{tpu_custom_call.1} parent=43 // pred_check
          %p1115 = pneg %p191
        $region46: #{tpu_custom_call.1} parent=43 // pred_check_branch
          %1117 = sbr.rel (%p1115) target = $region48
        $region47: #{tpu_custom_call.1} parent=43 // pred_region
          %s1119 = ssub.s32 256, 256
          %1120 = vsyncadd %s1101, %s1119
          %s1121 = smul.addr %s30, 4
          %s1122 = sadd.s32 %s31, %s1121
          %s1123 = smul.addr %s1122, 64
          %s1124 = scalar_lea.hbm %s6, %s1123
          %s1125 = sshll.u32 %s1104, 4
          %s1126 = int_to_ptr.vmem [resolvable:$true] %s1125
          %1131 = dma.vmem_to_hbm [thread:$0]  %s1126, 256, %s1124, %s1101, 64, 64, 4
        $region48: #{tpu_custom_call.1} parent=43 // pred_fallthru
          _
        // Predicated region
        $region49: #{tpu_custom_call.1} parent=43 // pred_check
          %p1132 = pneg %p219
        $region50: #{tpu_custom_call.1} parent=43 // pred_check_branch
          %1134 = sbr.rel (%p1132) target = $region52
        $region51: #{tpu_custom_call.1} parent=43 // pred_region
          %s1136 = ssub.s32 256, 256
          %1137 = vsyncadd %s1106, %s1136
          %s1138 = smul.addr %s30, 4
          %s1139 = sadd.s32 %s31, %s1138
          %s1140 = smul.addr %s1139, 64
          %s1141 = scalar_lea.hbm %s7, %s1140
          %s1142 = sshll.u32 %s1109, 4
          %s1143 = int_to_ptr.vmem [resolvable:$true] %s1142
          %1148 = dma.vmem_to_hbm [thread:$0]  %s1143, 256, %s1141, %s1106, 64, 64, 4
        $region52: #{tpu_custom_call.1} parent=43 // pred_fallthru
          _
        // Predicated region
        $region53: #{tpu_custom_call.1} parent=43 // pred_check
          %p1149 = pneg %p247
        $region54: #{tpu_custom_call.1} parent=43 // pred_check_branch
          %1151 = sbr.rel (%p1149) target = $region56
        $region55: #{tpu_custom_call.1} parent=43 // pred_region
          %s1153 = ssub.s32 256, 256
          %1154 = vsyncadd %s1111, %s1153
          %s1155 = smul.addr %s30, 4
          %s1156 = sadd.s32 %s31, %s1155
          %s1157 = smul.addr %s1156, 64
          %s1158 = scalar_lea.hbm %s8, %s1157
          %s1159 = sshll.u32 %s1114, 4
          %s1160 = int_to_ptr.vmem [resolvable:$true] %s1159
          %1165 = dma.vmem_to_hbm [thread:$0]  %s1160, 256, %s1158, %s1111, 64, 64, 4
        $region56: #{tpu_custom_call.1} parent=43 // pred_fallthru
          _
      $region44: #{tpu_custom_call.1} parent=5 // pred_fallthru
        _
      %p1166 = scmp.le.s32.totalorder 2, %s21
      // Predicated region
      $region57: #{tpu_custom_call.1} parent=5 // pred_check
        %p1167 = pneg %p1166
      $region58: #{tpu_custom_call.1} parent=5 // pred_check_branch
        %1169 = sbr.rel (%p1167) target = $region60
      $region59: #{tpu_custom_call.1} parent=5 // pred_region
        %s1170 = ssub.s32 %s21, 2
        // Predicated region
        $region61: #{tpu_custom_call.1} parent=59 // pred_check
          %p1171 = pneg %p197
        $region62: #{tpu_custom_call.1} parent=59 // pred_check_branch
          %1173 = sbr.rel (%p1171) target = $region64
        $region63: #{tpu_custom_call.1} parent=59 // pred_region
          %s1174 = sand.u32 %s182, 1
          %s1175 = scalar_lea.sflag [#allocation3], %s1174
          %s1176 = sand.u32 %s182, 1
          %s1177 = smul.addr %s1176, 16
          %s1178 = scalar_lea.vmem [#allocation2], %s1177
          %1179 = dma.done %s1175, 256
        $region64: #{tpu_custom_call.1} parent=59 // pred_fallthru
          _
        // Predicated region
        $region65: #{tpu_custom_call.1} parent=59 // pred_check
          %p1180 = pneg %p225
        $region66: #{tpu_custom_call.1} parent=59 // pred_check_branch
          %1182 = sbr.rel (%p1180) target = $region68
        $region67: #{tpu_custom_call.1} parent=59 // pred_region
          %s1183 = sand.u32 %s27, 1
          %s1184 = scalar_lea.sflag [#allocation5], %s1183
          %s1185 = sand.u32 %s210, 1
          %s1186 = smul.addr %s1185, 16
          %s1187 = scalar_lea.vmem [#allocation4], %s1186
          %1188 = dma.done %s1184, 256
        $region68: #{tpu_custom_call.1} parent=59 // pred_fallthru
          _
        // Predicated region
        $region69: #{tpu_custom_call.1} parent=59 // pred_check
          %p1189 = pneg %p253
        $region70: #{tpu_custom_call.1} parent=59 // pred_check_branch
          %1191 = sbr.rel (%p1189) target = $region72
        $region71: #{tpu_custom_call.1} parent=59 // pred_region
          %s1192 = sand.u32 %s27, 1
          %s1193 = scalar_lea.sflag [#allocation5], %s1192
          %s1194 = sand.u32 %s238, 1
          %s1195 = smul.addr %s1194, 16
          %s1196 = scalar_lea.vmem [#allocation6], %s1195
          %1197 = dma.done %s1193, 256
        $region72: #{tpu_custom_call.1} parent=59 // pred_fallthru
          _
      $region60: #{tpu_custom_call.1} parent=5 // pred_fallthru
        _
    $region6: #{tpu_custom_call.1} parent=1 // loop_footer
      %s25 = sadd.s32 1, %s21
    $region7: #{tpu_custom_call.1} parent=1 // loop_footer_branch
      %20 = sbr.rel target = $region3
    $region8: #{tpu_custom_call.1} parent=1 // loop_exit
      _
    %1198 = vsyncpa [#allocation3], 1
    %s1199 = scalar_lea.sflag [#allocation3], 1
    %1200 = vsyncpa %s1199, 1
    %1201 = vsyncpa [#allocation5], 1
    %s1202 = scalar_lea.sflag [#allocation5], 1
    %1203 = vsyncpa %s1202, 1

</llo_original>
